<compile_context>
chip_gen: v7x
topology: tpu7x:2x2x1
jax: 0.10.0
libtpu: 0.0.40
codegen_flags: <defaults>
</compile_context>

<pallas_src>
import functools

import numpy as np
import jax
import jax.numpy as jnp
from jax.experimental import pallas as pl
from jax.experimental.pallas import tpu as pltpu

NEG_SLOPE = 0.1


# -----------------------------------------------------------------------------
# Pallas kernels — single invocation each, all operands VMEM-resident
# -----------------------------------------------------------------------------
def _linear_act_kernel(x_ref, w_ref, b_ref, o_ref, *, apply_act):
    """o = [leaky_relu](x @ w + b): one MXU matmul with fused epilogue."""
    y = jnp.dot(x_ref[...], w_ref[...], preferred_element_type=jnp.float32)
    y = y + b_ref[...]
    if apply_act:
        y = jnp.where(y > 0, y, NEG_SLOPE * y)
    o_ref[...] = y.astype(o_ref.dtype)


def _mlp_kernel(x_ref, w3_ref, b3_ref, w4_ref, b4_ref, o_ref):
    """Fused fc1 + LeakyReLU + fc2 (both Linear layers in one kernel)."""
    h = jnp.dot(x_ref[...], w3_ref[...], preferred_element_type=jnp.float32)
    h = h + b3_ref[...]
    h = jnp.where(h > 0, h, NEG_SLOPE * h)
    y = jnp.dot(h.astype(w4_ref.dtype), w4_ref[...],
                preferred_element_type=jnp.float32)
    o_ref[...] = (y + b4_ref[...]).astype(o_ref.dtype)


def linear_act(x, w, b2d, *, apply_act):
    """y = [leaky_relu](x @ w + b).  x:(M,K), w:(K,N), b2d:(1,N)."""
    M = x.shape[0]
    N = w.shape[1]
    return pl.pallas_call(
        functools.partial(_linear_act_kernel, apply_act=apply_act),
        out_shape=jax.ShapeDtypeStruct((M, N), x.dtype),
    )(x, w, b2d)


def mlp(x, w3, b3, w4, b4):
    """y = leaky_relu(x @ w3 + b3) @ w4 + b4, fused in one pallas_call."""
    M = x.shape[0]
    N = w4.shape[1]
    return pl.pallas_call(
        _mlp_kernel,
        out_shape=jax.ShapeDtypeStruct((M, N), x.dtype),
        # ~7.5 MB of VMEM-resident weights; explicit limit gives headroom on
        # v5e's smaller default scoped-VMEM budget, safe on v6e/v7x too.
        compiler_params=pltpu.CompilerParams(vmem_limit_bytes=32 * 1024 * 1024),
    )(x, w3, b3, w4, b4)


# -----------------------------------------------------------------------------
# Wrapper-side layout glue (tiny; no compute)
# -----------------------------------------------------------------------------
def _im2col_nhwc(x, kh, kw, stride, pad):
    """NHWC im2col.  Returns (B*Ho*Wo, kh*kw*C); columns ordered (i, j, c)."""
    B, H, W, C = x.shape
    xp = jnp.pad(x, ((0, 0), (pad, pad), (pad, pad), (0, 0)))
    Ho = (H + 2 * pad - kh) // stride + 1
    Wo = (W + 2 * pad - kw) // stride + 1
    taps = []
    for i in range(kh):
        for j in range(kw):
            taps.append(xp[:, i:i + stride * Ho:stride,
                           j:j + stride * Wo:stride, :])      # (B, Ho, Wo, C)
    col = jnp.concatenate(taps, axis=-1)                       # (B,Ho,Wo,kh*kw*C)
    return col.reshape(B * Ho * Wo, kh * kw * C), Ho, Wo


def prepare_params(params):
    """One-time (outside jit) re-layout of PyTorch-format parameters."""
    w1, b1, w2, b2, w3, b3, w4, b4 = params
    O1, C1, kh, kw = w1.shape
    O2, C2, _, _ = w2.shape
    # Conv weights OIHW -> (kh*kw*I, O); rows ordered (i, j, c) to match im2col.
    w1m = jnp.transpose(w1, (2, 3, 1, 0)).reshape(kh * kw * C1, O1)
    w2m = jnp.transpose(w2, (2, 3, 1, 0)).reshape(kh * kw * C2, O2)
    # fc1: PyTorch rows index the flatten in (c, h, w) order; our NHWC flatten
    # is (h, w, c) — permute rows once and store as (K, N).
    N3, K3 = w3.shape                                    # (512, 64*7*7)
    w3m = (w3.reshape(N3, O2, 7, 7)
             .transpose(2, 3, 1, 0)                      # (h, w, c, N)
             .reshape(K3, N3))
    w4m = w4.T                                           # (K, N)
    return (w1m, b1.reshape(1, -1), w2m, b2.reshape(1, -1),
            w3m, b3.reshape(1, -1), w4m, b4.reshape(1, -1))


def forward_prepared(x, prepared):
    """Discriminator forward on NCHW input with pre-laid-out parameters."""
    w1m, b1, w2m, b2, w3m, b3, w4m, b4 = prepared
    B = x.shape[0]
    x_nhwc = jnp.transpose(x, (0, 2, 3, 1))               # (B, 28, 28, 1)
    col1, H1, W1 = _im2col_nhwc(x_nhwc, 4, 4, 2, 1)       # (B*196, 16)
    h1 = linear_act(col1, w1m, b1, apply_act=True)        # conv1: (B*196, 32)
    h1 = h1.reshape(B, H1, W1, w1m.shape[1])              # contiguous (free)
    col2, H2, W2 = _im2col_nhwc(h1, 4, 4, 2, 1)           # (B*49, 512)
    h2 = linear_act(col2, w2m, b2, apply_act=True)        # conv2: (B*49, 64)
    x3 = h2.reshape(B, H2 * W2 * w2m.shape[1])            # Reshape: metadata only
    return mlp(x3, w3m, b3, w4m, b4)                      # fc1+fc2: (B, out_dim)


def discriminator_forward(x, params):
    """Convenience wrapper taking PyTorch-layout parameters."""
    return forward_prepared(x, prepare_params(params))


# -----------------------------------------------------------------------------
# Pure-JAX reference (same semantics as the PyTorch module)
# -----------------------------------------------------------------------------
def reference_forward(x, params):
    w1, b1, w2, b2, w3, b3, w4, b4 = params
    hp = jax.lax.Precision.HIGHEST

    def leaky(v):
        return jnp.where(v > 0, v, NEG_SLOPE * v)

    y = jax.lax.conv_general_dilated(
        x, w1, window_strides=(2, 2), padding=((1, 1), (1, 1)),
        dimension_numbers=("NCHW", "OIHW", "NCHW"), precision=hp)
    y = leaky(y + b1.reshape(1, -1, 1, 1))
    y = jax.lax.conv_general_dilated(
        y, w2, window_strides=(2, 2), padding=((1, 1), (1, 1)),
        dimension_numbers=("NCHW", "OIHW", "NCHW"), precision=hp)
    y = leaky(y + b2.reshape(1, -1, 1, 1))
    y = y.reshape(y.shape[0], -1)
    y = leaky(jnp.dot(y, w3.T, precision=hp) + b3)
    y = jnp.dot(y, w4.T, precision=hp) + b4
    return y


if __name__ == "__main__":
    key = jax.random.PRNGKey(0)
    ks = jax.random.split(key, 9)
    B, out_dim = 2, 512

    # 28x28 single-channel input is implied by Reshape(64*7*7) after two s=2 convs.
    x = jax.random.normal(ks[0], (B, 1, 28, 28), dtype=jnp.float32)
    params = (
        jax.random.normal(ks[1], (32, 1, 4, 4), jnp.float32) * 0.1,       # conv1 w
        jax.random.normal(ks[2], (32,), jnp.float32) * 0.1,               # conv1 b
        jax.random.normal(ks[3], (64, 32, 4, 4), jnp.float32) * 0.05,     # conv2 w
        jax.random.normal(ks[4], (64,), jnp.float32) * 0.05,              # conv2 b
        jax.random.normal(ks[5], (512, 64 * 7 * 7), jnp.float32) * 0.02,  # fc1 w
        jax.random.normal(ks[6], (512,), jnp.float32) * 0.02,             # fc1 b
        jax.random.normal(ks[7], (out_dim, 512), jnp.float32) * 0.05,     # fc2 w
        jax.random.normal(ks[8], (out_dim,), jnp.float32) * 0.05,         # fc2 b
    )

    prepared = prepare_params(params)          # one-time layout prep, outside jit
    fwd = jax.jit(forward_prepared)
    y = jax.block_until_ready(fwd(x, prepared))

    y_ref = reference_forward(x, params)
    assert y.shape == (B, out_dim), y.shape
    assert y.dtype == jnp.float32
    np.testing.assert_allclose(np.asarray(y), np.asarray(y_ref),
                               rtol=5e-3, atol=5e-3)

    print("KERNEL_OK")
</pallas_src>

<mosaic_0001>
module attributes {stable_mosaic.version = 11 : i64} {
  func.func @_linear_act_kernel(%arg0: memref<392x16xf32, #tpu.memory_space<vmem>>, %arg1: memref<16x32xf32, #tpu.memory_space<vmem>>, %arg2: memref<1x32xf32, #tpu.memory_space<vmem>>, %arg3: memref<392x32xf32, #tpu.memory_space<vmem>>) attributes {dimension_semantics = [], scalar_prefetch = 0 : i64, scratch_operands = 0 : i64, tpu.core_type = #tpu.core_type<tc>} {
    %c0 = arith.constant 0 : index
    %c0_0 = arith.constant 0 : index
    %0 = vector.load %arg0[%c0, %c0_0] : memref<392x16xf32, #tpu.memory_space<vmem>>, vector<392x16xf32>
    %c0_1 = arith.constant 0 : index
    %c0_2 = arith.constant 0 : index
    %1 = vector.load %arg1[%c0_1, %c0_2] : memref<16x32xf32, #tpu.memory_space<vmem>>, vector<16x32xf32>
    %cst = arith.constant dense<0.000000e+00> : vector<392x32xf32>
    %2 = tpu.matmul %0, %1, %cst {dimension_numbers = #tpu.dot_dimension_numbers<[1], [0], [0], [1], [0, 0, 1, 1], [], []>} : vector<392x16xf32>, vector<16x32xf32>, vector<392x32xf32> -> vector<392x32xf32>
    %c0_3 = arith.constant 0 : index
    %c0_4 = arith.constant 0 : index
    %3 = vector.load %arg2[%c0_3, %c0_4] : memref<1x32xf32, #tpu.memory_space<vmem>>, vector<1x32xf32>
    %4 = vector.broadcast %3 : vector<1x32xf32> to vector<392x32xf32>
    %5 = arith.addf %2, %4 : vector<392x32xf32>
    %cst_5 = arith.constant 0.000000e+00 : f32
    %6 = vector.broadcast %cst_5 : f32 to vector<392x32xf32>
    %7 = arith.cmpf ogt, %5, %6 : vector<392x32xf32>
    %cst_6 = arith.constant 1.000000e-01 : f32
    %8 = vector.broadcast %cst_6 : f32 to vector<392x32xf32>
    %9 = arith.mulf %8, %5 : vector<392x32xf32>
    %10 = arith.select %7, %5, %9 : vector<392x32xi1>, vector<392x32xf32>
    %c0_7 = arith.constant 0 : index
    %c0_8 = arith.constant 0 : index
    %11 = vector.load %arg3[%c0_7, %c0_8] : memref<392x32xf32, #tpu.memory_space<vmem>>, vector<392x32xf32>
    tpu.vector_store %arg3[%c0_7, %c0_8], %10 {strides = array<i32>} : memref<392x32xf32, #tpu.memory_space<vmem>>, vector<392x32xf32>,
    return
  }
}

module attributes {stable_mosaic.version = 11 : i64} {
  func.func @_linear_act_kernel(%arg0: memref<98x512xf32, #tpu.memory_space<vmem>>, %arg1: memref<512x64xf32, #tpu.memory_space<vmem>>, %arg2: memref<1x64xf32, #tpu.memory_space<vmem>>, %arg3: memref<98x64xf32, #tpu.memory_space<vmem>>) attributes {dimension_semantics = [], scalar_prefetch = 0 : i64, scratch_operands = 0 : i64, tpu.core_type = #tpu.core_type<tc>} {
    %c0 = arith.constant 0 : index
    %c0_0 = arith.constant 0 : index
    %0 = vector.load %arg0[%c0, %c0_0] : memref<98x512xf32, #tpu.memory_space<vmem>>, vector<98x512xf32>
    %c0_1 = arith.constant 0 : index
    %c0_2 = arith.constant 0 : index
    %1 = vector.load %arg1[%c0_1, %c0_2] : memref<512x64xf32, #tpu.memory_space<vmem>>, vector<512x64xf32>
    %cst = arith.constant dense<0.000000e+00> : vector<98x64xf32>
    %2 = tpu.matmul %0, %1, %cst {dimension_numbers = #tpu.dot_dimension_numbers<[1], [0], [0], [1], [0, 0, 1, 1], [], []>} : vector<98x512xf32>, vector<512x64xf32>, vector<98x64xf32> -> vector<98x64xf32>
    %c0_3 = arith.constant 0 : index
    %c0_4 = arith.constant 0 : index
    %3 = vector.load %arg2[%c0_3, %c0_4] : memref<1x64xf32, #tpu.memory_space<vmem>>, vector<1x64xf32>
    %4 = vector.broadcast %3 : vector<1x64xf32> to vector<98x64xf32>
    %5 = arith.addf %2, %4 : vector<98x64xf32>
    %cst_5 = arith.constant 0.000000e+00 : f32
    %6 = vector.broadcast %cst_5 : f32 to vector<98x64xf32>
    %7 = arith.cmpf ogt, %5, %6 : vector<98x64xf32>
    %cst_6 = arith.constant 1.000000e-01 : f32
    %8 = vector.broadcast %cst_6 : f32 to vector<98x64xf32>
    %9 = arith.mulf %8, %5 : vector<98x64xf32>
    %10 = arith.select %7, %5, %9 : vector<98x64xi1>, vector<98x64xf32>
    %c0_7 = arith.constant 0 : index
    %c0_8 = arith.constant 0 : index
    %11 = vector.load %arg3[%c0_7, %c0_8] : memref<98x64xf32, #tpu.memory_space<vmem>>, vector<98x64xf32>
    tpu.vector_store %arg3[%c0_7, %c0_8], %10 {strides = array<i32>} : memref<98x64xf32, #tpu.memory_space<vmem>>, vector<98x64xf32>,
    return
  }
}

module attributes {stable_mosaic.version = 11 : i64} {
  func.func @_mlp_kernel(%arg0: memref<2x3136xf32, #tpu.memory_space<vmem>>, %arg1: memref<3136x512xf32, #tpu.memory_space<vmem>>, %arg2: memref<1x512xf32, #tpu.memory_space<vmem>>, %arg3: memref<512x512xf32, #tpu.memory_space<vmem>>, %arg4: memref<1x512xf32, #tpu.memory_space<vmem>>, %arg5: memref<2x512xf32, #tpu.memory_space<vmem>>) attributes {dimension_semantics = [], scalar_prefetch = 0 : i64, scratch_operands = 0 : i64, tpu.core_type = #tpu.core_type<tc>} {
    %c0 = arith.constant 0 : index
    %c0_0 = arith.constant 0 : index
    %0 = vector.load %arg0[%c0, %c0_0] : memref<2x3136xf32, #tpu.memory_space<vmem>>, vector<2x3136xf32>
    %c0_1 = arith.constant 0 : index
    %c0_2 = arith.constant 0 : index
    %1 = vector.load %arg1[%c0_1, %c0_2] : memref<3136x512xf32, #tpu.memory_space<vmem>>, vector<3136x512xf32>
    %cst = arith.constant dense<0.000000e+00> : vector<2x512xf32>
    %2 = tpu.matmul %0, %1, %cst {dimension_numbers = #tpu.dot_dimension_numbers<[1], [0], [0], [1], [0, 0, 1, 1], [], []>} : vector<2x3136xf32>, vector<3136x512xf32>, vector<2x512xf32> -> vector<2x512xf32>
    %c0_3 = arith.constant 0 : index
    %c0_4 = arith.constant 0 : index
    %3 = vector.load %arg2[%c0_3, %c0_4] : memref<1x512xf32, #tpu.memory_space<vmem>>, vector<1x512xf32>
    %4 = vector.broadcast %3 : vector<1x512xf32> to vector<2x512xf32>
    %5 = arith.addf %2, %4 : vector<2x512xf32>
    %cst_5 = arith.constant 0.000000e+00 : f32
    %6 = vector.broadcast %cst_5 : f32 to vector<2x512xf32>
    %7 = arith.cmpf ogt, %5, %6 : vector<2x512xf32>
    %cst_6 = arith.constant 1.000000e-01 : f32
    %8 = vector.broadcast %cst_6 : f32 to vector<2x512xf32>
    %9 = arith.mulf %8, %5 : vector<2x512xf32>
    %10 = arith.select %7, %5, %9 : vector<2x512xi1>, vector<2x512xf32>
    %c0_7 = arith.constant 0 : index
    %c0_8 = arith.constant 0 : index
    %11 = vector.load %arg3[%c0_7, %c0_8] : memref<512x512xf32, #tpu.memory_space<vmem>>, vector<512x512xf32>
    %cst_9 = arith.constant dense<0.000000e+00> : vector<2x512xf32>
    %12 = tpu.matmul %10, %11, %cst_9 {dimension_numbers = #tpu.dot_dimension_numbers<[1], [0], [0], [1], [0, 0, 1, 1], [], []>} : vector<2x512xf32>, vector<512x512xf32>, vector<2x512xf32> -> vector<2x512xf32>
    %c0_10 = arith.constant 0 : index
    %c0_11 = arith.constant 0 : index
    %13 = vector.load %arg4[%c0_10, %c0_11] : memref<1x512xf32, #tpu.memory_space<vmem>>, vector<1x512xf32>
    %14 = vector.broadcast %13 : vector<1x512xf32> to vector<2x512xf32>
    %15 = arith.addf %12, %14 : vector<2x512xf32>
    %c0_12 = arith.constant 0 : index
    %c0_13 = arith.constant 0 : index
    %16 = vector.load %arg5[%c0_12, %c0_13] : memref<2x512xf32, #tpu.memory_space<vmem>>, vector<2x512xf32>
    tpu.vector_store %arg5[%c0_12, %c0_13], %15 {strides = array<i32>} : memref<2x512xf32, #tpu.memory_space<vmem>>, vector<2x512xf32>,
    return
  }
}

</mosaic_0001>

<llo_original>
// kernel: forward_prepared.3
$region0: #{forward_prepared.3}
  #allocation0 [shape = 'u32[]', space=smem, size = 0x4, offset = 0x4, fixed_abs, tag = 'smem constant byte address 0x4 - core index']
  #allocation1 [shape = 'u32[144,128]{1,0:T(1,128)}', space=vmem, size = 0x12000, scoped, tag = 'internal scratch']
  %s0 = inlined_call_operand.vmem [shape: f32[392,16], index: 0, kind: input, shape index: {}]
  %s1 = inlined_call_operand.hbm [shape: f32[16,32], index: 1, kind: input, shape index: {}]
  %s2 = inlined_call_operand.hbm [shape: f32[1,32], index: 2, kind: input, shape index: {}]
  %s3 = inlined_call_operand.vmem [shape: f32[392,32], index: 3, kind: output, shape index: {}]
  %s4 = sld [smem:[#allocation0]]
  $region30: #{forward_prepared.3} parent=0
    _
  %s6 = ssub.s32 1, %s4
  %s7 = scalar_select 0, %s6, %s4
  $region1: #{forward_prepared.3} parent=0
    #allocation2 [shape = 'u8[8192]{0}', space=vmem, size = 0x2000, scoped, tag = 'input window, operand 1, single buffered']
    #allocation3 [shape = 's32[1]{0}', space=sflag, size = 0x4, scoped, tag = 'scoped memory for forward_prepared.3']
    #allocation4 [shape = 'u8[512]{0}', space=vmem, size = 0x400, scoped, tag = 'input window, operand 2, single buffered']
    #allocation5 [shape = 's32[1]{0}', space=sflag, size = 0x4, scoped, tag = 'scoped memory for forward_prepared.3']
    %8 = vsyncpa [#allocation3], 0
    %9 = vsyncpa [#allocation5], 0
    // Predicated region
    $region2: #{forward_prepared.3} parent=1 // pred_check
      _
    $region3: #{forward_prepared.3} parent=1 // pred_check_branch
      %11 = sbr.rel (0) target = $region5
    $region4: #{forward_prepared.3} parent=1 // pred_region
      _
    $region5: #{forward_prepared.3} parent=1 // pred_fallthru
      _
    // Predicated region
    $region6: #{forward_prepared.3} parent=1 // pred_check
      _
    $region7: #{forward_prepared.3} parent=1 // pred_check_branch
      %13 = sbr.rel (0) target = $region9
    $region8: #{forward_prepared.3} parent=1 // pred_region
      %s15 = ssub.s32 256, 256
      %16 = vsyncadd [#allocation3], %s15
      %s17 = sshll.u32 [#allocation2], 4
      %s18 = int_to_ptr.vmem [resolvable:$true] %s17
      %23 = dma.hbm_to_vmem [thread:$0]  %s1, 256, %s18, [#allocation3], 128, 128, 8
    $region9: #{forward_prepared.3} parent=1 // pred_fallthru
      _
    // Predicated region
    $region10: #{forward_prepared.3} parent=1 // pred_check
      _
    $region11: #{forward_prepared.3} parent=1 // pred_check_branch
      %25 = sbr.rel (0) target = $region13
    $region12: #{forward_prepared.3} parent=1 // pred_region
      %s27 = ssub.s32 16, 16
      %28 = vsyncadd [#allocation5], %s27
      %s30 = sshll.u32 [#allocation4], 4
      %s31 = int_to_ptr.vmem [resolvable:$true] %s30
      %33 = dma.hbm_to_vmem [thread:$0]  %s2, 16, %s31, [#allocation5]
    $region13: #{forward_prepared.3} parent=1 // pred_fallthru
      _
    // Predicated region
    $region14: #{forward_prepared.3} parent=1 // pred_check
      _
    $region15: #{forward_prepared.3} parent=1 // pred_check_branch
      %35 = sbr.rel (0) target = $region17
    $region16: #{forward_prepared.3} parent=1 // pred_region
      %36 = dma.done [#allocation3], 256
    $region17: #{forward_prepared.3} parent=1 // pred_fallthru
      _
    // Predicated region
    $region18: #{forward_prepared.3} parent=1 // pred_check
      _
    $region19: #{forward_prepared.3} parent=1 // pred_check_branch
      %38 = sbr.rel (0) target = $region21
    $region20: #{forward_prepared.3} parent=1 // pred_region
      %39 = dma.done [#allocation5], 16
    $region21: #{forward_prepared.3} parent=1 // pred_fallthru
      _
    %v40 = vld [vmem:[%s0] sm:$0xff]
    %v41 = vld [vmem:[%s0 + $0x8] sm:$0xff]
    %v42 = vld [vmem:[%s0 + $0x10] sm:$0xff]
    %v43 = vld [vmem:[%s0 + $0x18] sm:$0xff]
    %v44 = vld [vmem:[%s0 + $0x20] sm:$0xff]
    %v45 = vld [vmem:[%s0 + $0x28] sm:$0xff]
    %v46 = vld [vmem:[%s0 + $0x30] sm:$0xff]
    %v47 = vld [vmem:[%s0 + $0x38] sm:$0xff]
    %v48 = vld [vmem:[%s0 + $0x40] sm:$0xff]
    %v49 = vld [vmem:[%s0 + $0x48] sm:$0xff]
    %v50 = vld [vmem:[%s0 + $0x50] sm:$0xff]
    %v51 = vld [vmem:[%s0 + $0x58] sm:$0xff]
    %v52 = vld [vmem:[%s0 + $0x60] sm:$0xff]
    %v53 = vld [vmem:[%s0 + $0x68] sm:$0xff]
    %v54 = vld [vmem:[%s0 + $0x70] sm:$0xff]
    %v55 = vld [vmem:[%s0 + $0x78] sm:$0xff]
    %v56 = vld [vmem:[%s0 + $0x80] sm:$0xff]
    %v57 = vld [vmem:[%s0 + $0x88] sm:$0xff]
    %v58 = vld [vmem:[%s0 + $0x90] sm:$0xff]
    %v59 = vld [vmem:[%s0 + $0x98] sm:$0xff]
    %v60 = vld [vmem:[%s0 + $0xa0] sm:$0xff]
    %v61 = vld [vmem:[%s0 + $0xa8] sm:$0xff]
    %v62 = vld [vmem:[%s0 + $0xb0] sm:$0xff]
    %v63 = vld [vmem:[%s0 + $0xb8] sm:$0xff]
    %v64 = vld [vmem:[%s0 + $0xc0] sm:$0xff]
    %v65 = vld [vmem:[%s0 + $0xc8] sm:$0xff]
    %v66 = vld [vmem:[%s0 + $0xd0] sm:$0xff]
    %v67 = vld [vmem:[%s0 + $0xd8] sm:$0xff]
    %v68 = vld [vmem:[%s0 + $0xe0] sm:$0xff]
    %v69 = vld [vmem:[%s0 + $0xe8] sm:$0xff]
    %v70 = vld [vmem:[%s0 + $0xf0] sm:$0xff]
    %v71 = vld [vmem:[%s0 + $0xf8] sm:$0xff]
    %v72 = vld [vmem:[%s0 + $0x100] sm:$0xff]
    %v73 = vld [vmem:[%s0 + $0x108] sm:$0xff]
    %v74 = vld [vmem:[%s0 + $0x110] sm:$0xff]
    %v75 = vld [vmem:[%s0 + $0x118] sm:$0xff]
    %v76 = vld [vmem:[%s0 + $0x120] sm:$0xff]
    %v77 = vld [vmem:[%s0 + $0x128] sm:$0xff]
    %v78 = vld [vmem:[%s0 + $0x130] sm:$0xff]
    %v79 = vld [vmem:[%s0 + $0x138] sm:$0xff]
    %v80 = vld [vmem:[%s0 + $0x140] sm:$0xff]
    %v81 = vld [vmem:[%s0 + $0x148] sm:$0xff]
    %v82 = vld [vmem:[%s0 + $0x150] sm:$0xff]
    %v83 = vld [vmem:[%s0 + $0x158] sm:$0xff]
    %v84 = vld [vmem:[%s0 + $0x160] sm:$0xff]
    %v85 = vld [vmem:[%s0 + $0x168] sm:$0xff]
    %v86 = vld [vmem:[%s0 + $0x170] sm:$0xff]
    %v87 = vld [vmem:[%s0 + $0x178] sm:$0xff]
    %v88 = vld [vmem:[%s0 + $0x180] sm:$0xff]
    %v89 = vld [vmem:[#allocation2] sm:$0xff]
    %v90 = vld [vmem:[#allocation2 + $0x8] sm:$0xff]
    %v91 = vld [vmem:[#allocation4] sm:$0x1]
    %v93 = vlaneseq
    %v94 = vshrl.u32 %v93, 7
    %v95 = vsub.s32 0, %v94
    %v96 = vrot.slane %v91, %v95
    %vm98 = vcmask 130048
    %v100 = vsel %vm98, %v40, 0
    %v103 = vsel %vm98, %v41, 0
    %v106 = vsel %vm98, %v42, 0
    %v109 = vsel %vm98, %v43, 0
    %v112 = vsel %vm98, %v44, 0
    %v115 = vsel %vm98, %v45, 0
    %v118 = vsel %vm98, %v46, 0
    %v121 = vsel %vm98, %v47, 0
    %v124 = vsel %vm98, %v48, 0
    %v127 = vsel %vm98, %v49, 0
    %v130 = vsel %vm98, %v50, 0
    %v133 = vsel %vm98, %v51, 0
    %v136 = vsel %vm98, %v52, 0
    %v139 = vsel %vm98, %v53, 0
    %v142 = vsel %vm98, %v54, 0
    %v145 = vsel %vm98, %v55, 0
    %v148 = vsel %vm98, %v56, 0
    %v151 = vsel %vm98, %v57, 0
    %v154 = vsel %vm98, %v58, 0
    %v157 = vsel %vm98, %v59, 0
    %v160 = vsel %vm98, %v60, 0
    %v163 = vsel %vm98, %v61, 0
    %v166 = vsel %vm98, %v62, 0
    %v169 = vsel %vm98, %v63, 0
    %v172 = vsel %vm98, %v64, 0
    %v175 = vsel %vm98, %v65, 0
    %v178 = vsel %vm98, %v66, 0
    %v181 = vsel %vm98, %v67, 0
    %v184 = vsel %vm98, %v68, 0
    %v187 = vsel %vm98, %v69, 0
    %v190 = vsel %vm98, %v70, 0
    %v193 = vsel %vm98, %v71, 0
    %v196 = vsel %vm98, %v72, 0
    %v199 = vsel %vm98, %v73, 0
    %v202 = vsel %vm98, %v74, 0
    %v205 = vsel %vm98, %v75, 0
    %v208 = vsel %vm98, %v76, 0
    %v211 = vsel %vm98, %v77, 0
    %v214 = vsel %vm98, %v78, 0
    %v217 = vsel %vm98, %v79, 0
    %v220 = vsel %vm98, %v80, 0
    %v223 = vsel %vm98, %v81, 0
    %v226 = vsel %vm98, %v82, 0
    %v229 = vsel %vm98, %v83, 0
    %v232 = vsel %vm98, %v84, 0
    %v235 = vsel %vm98, %v85, 0
    %v238 = vsel %vm98, %v86, 0
    %v241 = vsel %vm98, %v87, 0
    %v244 = vsel %vm98, %v88, 0
    %246 = vmatprep.subr.mxu0 0.0
    %247 = vmatpush1.msra.mxu0 %v89
    %248 = vmatprep.subr.mxu0 0.0
    %249 = vmatpush1.msra.mxu0 %v90
    %250 = vmatprep.subr.mxu0 0.0
    %251 = vmatpush1.msra.mxu0 0.0
    %252 = vmatprep.subr.mxu0 0.0
    %253 = vmatpush1.msra.mxu0 0.0
    %254 = vmatprep.subr.mxu0 0.0
    %255 = vmatpush1.msra.mxu0 0.0
    %256 = vmatprep.subr.mxu0 0.0
    %257 = vmatpush1.msra.mxu0 0.0
    %258 = vmatprep.subr.mxu0 0.0
    %259 = vmatpush1.msra.mxu0 0.0
    %260 = vmatprep.subr.mxu0 0.0
    %261 = vmatpush1.msra.mxu0 0.0
    %262 = vmatprep.subr.mxu0 0.0
    %263 = vmatpush1.msra.mxu0 0.0
    %264 = vmatprep.subr.mxu0 0.0
    %265 = vmatpush1.msra.mxu0 0.0
    %266 = vmatprep.subr.mxu0 0.0
    %267 = vmatpush1.msra.mxu0 0.0
    %268 = vmatprep.subr.mxu0 0.0
    %269 = vmatpush1.msra.mxu0 0.0
    %270 = vmatprep.subr.mxu0 0.0
    %271 = vmatpush1.msra.mxu0 0.0
    %272 = vmatprep.subr.mxu0 0.0
    %273 = vmatpush1.msra.mxu0 0.0
    %274 = vmatprep.subr.mxu0 0.0
    %275 = vmatpush1.msra.mxu0 0.0
    %276 = vmatprep.subr.mxu0 0.0
    %277 = vmatpush1.msra.mxu0 0.0
    %278 = vmatprep.subr.mxu0 0.0
    %279 = vmatpush1.msra.mxu0 0.0
    %280 = vmatprep.subr.mxu0 0.0
    %281 = vmatpush1.msra.mxu0 0.0
    %282 = vmatprep.subr.mxu0 0.0
    %283 = vmatpush1.msra.mxu0 0.0
    %284 = vmatprep.subr.mxu0 0.0
    %285 = vmatpush1.msra.mxu0 0.0
    %286 = vmatprep.subr.mxu0 0.0
    %287 = vmatpush1.msra.mxu0 0.0
    %288 = vmatprep.subr.mxu0 0.0
    %289 = vmatpush1.msra.mxu0 0.0
    %290 = vmatprep.subr.mxu0 0.0
    %291 = vmatpush1.msra.mxu0 0.0
    %292 = vmatprep.subr.mxu0 0.0
    %293 = vmatpush1.msra.mxu0 0.0
    %294 = vmatprep.subr.mxu0 0.0
    %295 = vmatpush1.msra.mxu0 0.0
    %296 = vmatprep.subr.mxu0 0.0
    %297 = vmatpush1.msra.mxu0 0.0
    %298 = vmatprep.subr.mxu0 0.0
    %299 = vmatpush1.msra.mxu0 0.0
    %300 = vmatprep.subr.mxu0 0.0
    %301 = vmatpush1.msra.mxu0 0.0
    %302 = vmatprep.subr.mxu0 0.0
    %303 = vmatpush1.msra.mxu0 0.0
    %304 = vmatprep.subr.mxu0 0.0
    %305 = vmatpush1.msra.mxu0 0.0
    %306 = vmatprep.subr.mxu0 0.0
    %307 = vmatpush1.msra.mxu0 0.0
    %308 = vmatprep.subr.mxu0 0.0
    %309 = vmatpush1.msra.mxu0 0.0
    %310 = vmatprep.mubr.f32.mxu0 0.0
    %311 = vmatmul.mubr.f32.gmra.mrb[0].mxu0 %v100
    %v312 = vpop.f32.mrb[0].mxu0
    %v313 = vadd.f32 %v96, %v312
    %v314 = vpop.f32.mrb[0].mxu0
    %315 = vmatprep.mubr.f32.mxu0 0.0
    %316 = vmatmul.mubr.f32.gmra.mrb[0].mxu0 %v103
    %v317 = vpop.f32.mrb[0].mxu0
    %v318 = vadd.f32 %v96, %v317
    %v319 = vpop.f32.mrb[0].mxu0
    %320 = vmatprep.mubr.f32.mxu0 0.0
    %321 = vmatmul.mubr.f32.gmra.mrb[0].mxu0 %v106
    %v322 = vpop.f32.mrb[0].mxu0
    %v323 = vadd.f32 %v96, %v322
    %v324 = vpop.f32.mrb[0].mxu0
    %325 = vmatprep.mubr.f32.mxu0 0.0
    %326 = vmatmul.mubr.f32.gmra.mrb[0].mxu0 %v109
    %v327 = vpop.f32.mrb[0].mxu0
    %v328 = vadd.f32 %v96, %v327
    %v329 = vpop.f32.mrb[0].mxu0
    %330 = vmatprep.mubr.f32.mxu0 0.0
    %331 = vmatmul.mubr.f32.gmra.mrb[0].mxu0 %v112
    %v332 = vpop.f32.mrb[0].mxu0
    %v333 = vadd.f32 %v96, %v332
    %v334 = vpop.f32.mrb[0].mxu0
    %335 = vmatprep.mubr.f32.mxu0 0.0
    %336 = vmatmul.mubr.f32.gmra.mrb[0].mxu0 %v115
    %v337 = vpop.f32.mrb[0].mxu0
    %v338 = vadd.f32 %v96, %v337
    %v339 = vpop.f32.mrb[0].mxu0
    %340 = vmatprep.mubr.f32.mxu0 0.0
    %341 = vmatmul.mubr.f32.gmra.mrb[0].mxu0 %v118
    %v342 = vpop.f32.mrb[0].mxu0
    %v343 = vadd.f32 %v96, %v342
    %v344 = vpop.f32.mrb[0].mxu0
    %345 = vmatprep.mubr.f32.mxu0 0.0
    %346 = vmatmul.mubr.f32.gmra.mrb[0].mxu0 %v121
    %v347 = vpop.f32.mrb[0].mxu0
    %v348 = vadd.f32 %v96, %v347
    %v349 = vpop.f32.mrb[0].mxu0
    %350 = vmatprep.mubr.f32.mxu0 0.0
    %351 = vmatmul.mubr.f32.gmra.mrb[0].mxu0 %v124
    %v352 = vpop.f32.mrb[0].mxu0
    %v353 = vadd.f32 %v96, %v352
    %v354 = vpop.f32.mrb[0].mxu0
    %355 = vmatprep.mubr.f32.mxu0 0.0
    %356 = vmatmul.mubr.f32.gmra.mrb[0].mxu0 %v127
    %v357 = vpop.f32.mrb[0].mxu0
    %v358 = vadd.f32 %v96, %v357
    %v359 = vpop.f32.mrb[0].mxu0
    %360 = vmatprep.mubr.f32.mxu0 0.0
    %361 = vmatmul.mubr.f32.gmra.mrb[0].mxu0 %v130
    %v362 = vpop.f32.mrb[0].mxu0
    %v363 = vadd.f32 %v96, %v362
    %v364 = vpop.f32.mrb[0].mxu0
    %365 = vmatprep.mubr.f32.mxu0 0.0
    %366 = vmatmul.mubr.f32.gmra.mrb[0].mxu0 %v133
    %v367 = vpop.f32.mrb[0].mxu0
    %v368 = vadd.f32 %v96, %v367
    %v369 = vpop.f32.mrb[0].mxu0
    %370 = vmatprep.mubr.f32.mxu0 0.0
    %371 = vmatmul.mubr.f32.gmra.mrb[0].mxu0 %v136
    %v372 = vpop.f32.mrb[0].mxu0
    %v373 = vadd.f32 %v96, %v372
    %v374 = vpop.f32.mrb[0].mxu0
    %375 = vmatprep.mubr.f32.mxu0 0.0
    %376 = vmatmul.mubr.f32.gmra.mrb[0].mxu0 %v139
    %v377 = vpop.f32.mrb[0].mxu0
    %v378 = vadd.f32 %v96, %v377
    %v379 = vpop.f32.mrb[0].mxu0
    %380 = vmatprep.mubr.f32.mxu0 0.0
    %381 = vmatmul.mubr.f32.gmra.mrb[0].mxu0 %v142
    %v382 = vpop.f32.mrb[0].mxu0
    %v383 = vadd.f32 %v96, %v382
    %v384 = vpop.f32.mrb[0].mxu0
    %385 = vmatprep.mubr.f32.mxu0 0.0
    %386 = vmatmul.mubr.f32.gmra.mrb[0].mxu0 %v145
    %v387 = vpop.f32.mrb[0].mxu0
    %v388 = vadd.f32 %v96, %v387
    %v389 = vpop.f32.mrb[0].mxu0
    %390 = vmatprep.mubr.f32.mxu0 0.0
    %391 = vmatmul.mubr.f32.gmra.mrb[0].mxu0 %v148
    %v392 = vpop.f32.mrb[0].mxu0
    %v393 = vadd.f32 %v96, %v392
    %v394 = vpop.f32.mrb[0].mxu0
    %395 = vmatprep.mubr.f32.mxu0 0.0
    %396 = vmatmul.mubr.f32.gmra.mrb[0].mxu0 %v151
    %v397 = vpop.f32.mrb[0].mxu0
    %v398 = vadd.f32 %v96, %v397
    %v399 = vpop.f32.mrb[0].mxu0
    %400 = vmatprep.mubr.f32.mxu0 0.0
    %401 = vmatmul.mubr.f32.gmra.mrb[0].mxu0 %v154
    %v402 = vpop.f32.mrb[0].mxu0
    %v403 = vadd.f32 %v96, %v402
    %v404 = vpop.f32.mrb[0].mxu0
    %405 = vmatprep.mubr.f32.mxu0 0.0
    %406 = vmatmul.mubr.f32.gmra.mrb[0].mxu0 %v157
    %v407 = vpop.f32.mrb[0].mxu0
    %v408 = vadd.f32 %v96, %v407
    %v409 = vpop.f32.mrb[0].mxu0
    %410 = vmatprep.mubr.f32.mxu0 0.0
    %411 = vmatmul.mubr.f32.gmra.mrb[0].mxu0 %v160
    %v412 = vpop.f32.mrb[0].mxu0
    %v413 = vadd.f32 %v96, %v412
    %v414 = vpop.f32.mrb[0].mxu0
    %415 = vmatprep.mubr.f32.mxu0 0.0
    %416 = vmatmul.mubr.f32.gmra.mrb[0].mxu0 %v163
    %v417 = vpop.f32.mrb[0].mxu0
    %v418 = vadd.f32 %v96, %v417
    %v419 = vpop.f32.mrb[0].mxu0
    %420 = vmatprep.mubr.f32.mxu0 0.0
    %421 = vmatmul.mubr.f32.gmra.mrb[0].mxu0 %v166
    %v422 = vpop.f32.mrb[0].mxu0
    %v423 = vadd.f32 %v96, %v422
    %v424 = vpop.f32.mrb[0].mxu0
    %425 = vmatprep.mubr.f32.mxu0 0.0
    %426 = vmatmul.mubr.f32.gmra.mrb[0].mxu0 %v169
    %v427 = vpop.f32.mrb[0].mxu0
    %v428 = vadd.f32 %v96, %v427
    %v429 = vpop.f32.mrb[0].mxu0
    %430 = vmatprep.mubr.f32.mxu0 0.0
    %431 = vmatmul.mubr.f32.gmra.mrb[0].mxu0 %v172
    %v432 = vpop.f32.mrb[0].mxu0
    %v433 = vadd.f32 %v96, %v432
    %v434 = vpop.f32.mrb[0].mxu0
    %435 = vmatprep.mubr.f32.mxu0 0.0
    %436 = vmatmul.mubr.f32.gmra.mrb[0].mxu0 %v175
    %v437 = vpop.f32.mrb[0].mxu0
    %v438 = vadd.f32 %v96, %v437
    %v439 = vpop.f32.mrb[0].mxu0
    %440 = vmatprep.mubr.f32.mxu0 0.0
    %441 = vmatmul.mubr.f32.gmra.mrb[0].mxu0 %v178
    %v442 = vpop.f32.mrb[0].mxu0
    %v443 = vadd.f32 %v96, %v442
    %v444 = vpop.f32.mrb[0].mxu0
    %445 = vmatprep.mubr.f32.mxu0 0.0
    %446 = vmatmul.mubr.f32.gmra.mrb[0].mxu0 %v181
    %v447 = vpop.f32.mrb[0].mxu0
    %v448 = vadd.f32 %v96, %v447
    %v449 = vpop.f32.mrb[0].mxu0
    %450 = vmatprep.mubr.f32.mxu0 0.0
    %451 = vmatmul.mubr.f32.gmra.mrb[0].mxu0 %v184
    %v452 = vpop.f32.mrb[0].mxu0
    %v453 = vadd.f32 %v96, %v452
    %v454 = vpop.f32.mrb[0].mxu0
    %455 = vmatprep.mubr.f32.mxu0 0.0
    %456 = vmatmul.mubr.f32.gmra.mrb[0].mxu0 %v187
    %v457 = vpop.f32.mrb[0].mxu0
    %v458 = vadd.f32 %v96, %v457
    %v459 = vpop.f32.mrb[0].mxu0
    %460 = vmatprep.mubr.f32.mxu0 0.0
    %461 = vmatmul.mubr.f32.gmra.mrb[0].mxu0 %v190
    %v462 = vpop.f32.mrb[0].mxu0
    %v463 = vadd.f32 %v96, %v462
    %v464 = vpop.f32.mrb[0].mxu0
    %465 = vmatprep.mubr.f32.mxu0 0.0
    %466 = vmatmul.mubr.f32.gmra.mrb[0].mxu0 %v193
    %v467 = vpop.f32.mrb[0].mxu0
    %v468 = vadd.f32 %v96, %v467
    %v469 = vpop.f32.mrb[0].mxu0
    %470 = vmatprep.mubr.f32.mxu0 0.0
    %471 = vmatmul.mubr.f32.gmra.mrb[0].mxu0 %v196
    %v472 = vpop.f32.mrb[0].mxu0
    %v473 = vadd.f32 %v96, %v472
    %v474 = vpop.f32.mrb[0].mxu0
    %475 = vmatprep.mubr.f32.mxu0 0.0
    %476 = vmatmul.mubr.f32.gmra.mrb[0].mxu0 %v199
    %v477 = vpop.f32.mrb[0].mxu0
    %v478 = vadd.f32 %v96, %v477
    %v479 = vpop.f32.mrb[0].mxu0
    %480 = vmatprep.mubr.f32.mxu0 0.0
    %481 = vmatmul.mubr.f32.gmra.mrb[0].mxu0 %v202
    %v482 = vpop.f32.mrb[0].mxu0
    %v483 = vadd.f32 %v96, %v482
    %v484 = vpop.f32.mrb[0].mxu0
    %485 = vmatprep.mubr.f32.mxu0 0.0
    %486 = vmatmul.mubr.f32.gmra.mrb[0].mxu0 %v205
    %v487 = vpop.f32.mrb[0].mxu0
    %v488 = vadd.f32 %v96, %v487
    %v489 = vpop.f32.mrb[0].mxu0
    %490 = vmatprep.mubr.f32.mxu0 0.0
    %491 = vmatmul.mubr.f32.gmra.mrb[0].mxu0 %v208
    %v492 = vpop.f32.mrb[0].mxu0
    %v493 = vadd.f32 %v96, %v492
    %v494 = vpop.f32.mrb[0].mxu0
    %495 = vmatprep.mubr.f32.mxu0 0.0
    %496 = vmatmul.mubr.f32.gmra.mrb[0].mxu0 %v211
    %v497 = vpop.f32.mrb[0].mxu0
    %v498 = vadd.f32 %v96, %v497
    %v499 = vpop.f32.mrb[0].mxu0
    %500 = vmatprep.mubr.f32.mxu0 0.0
    %501 = vmatmul.mubr.f32.gmra.mrb[0].mxu0 %v214
    %v502 = vpop.f32.mrb[0].mxu0
    %v503 = vadd.f32 %v96, %v502
    %v504 = vpop.f32.mrb[0].mxu0
    %505 = vmatprep.mubr.f32.mxu0 0.0
    %506 = vmatmul.mubr.f32.gmra.mrb[0].mxu0 %v217
    %v507 = vpop.f32.mrb[0].mxu0
    %v508 = vadd.f32 %v96, %v507
    %v509 = vpop.f32.mrb[0].mxu0
    %510 = vmatprep.mubr.f32.mxu0 0.0
    %511 = vmatmul.mubr.f32.gmra.mrb[0].mxu0 %v220
    %v512 = vpop.f32.mrb[0].mxu0
    %v513 = vadd.f32 %v96, %v512
    %v514 = vpop.f32.mrb[0].mxu0
    %515 = vmatprep.mubr.f32.mxu0 0.0
    %516 = vmatmul.mubr.f32.gmra.mrb[0].mxu0 %v223
    %v517 = vpop.f32.mrb[0].mxu0
    %v518 = vadd.f32 %v96, %v517
    %v519 = vpop.f32.mrb[0].mxu0
    %520 = vmatprep.mubr.f32.mxu0 0.0
    %521 = vmatmul.mubr.f32.gmra.mrb[0].mxu0 %v226
    %v522 = vpop.f32.mrb[0].mxu0
    %v523 = vadd.f32 %v96, %v522
    %v524 = vpop.f32.mrb[0].mxu0
    %525 = vmatprep.mubr.f32.mxu0 0.0
    %526 = vmatmul.mubr.f32.gmra.mrb[0].mxu0 %v229
    %v527 = vpop.f32.mrb[0].mxu0
    %v528 = vadd.f32 %v96, %v527
    %v529 = vpop.f32.mrb[0].mxu0
    %530 = vmatprep.mubr.f32.mxu0 0.0
    %531 = vmatmul.mubr.f32.gmra.mrb[0].mxu0 %v232
    %v532 = vpop.f32.mrb[0].mxu0
    %v533 = vadd.f32 %v96, %v532
    %v534 = vpop.f32.mrb[0].mxu0
    %535 = vmatprep.mubr.f32.mxu0 0.0
    %536 = vmatmul.mubr.f32.gmra.mrb[0].mxu0 %v235
    %v537 = vpop.f32.mrb[0].mxu0
    %v538 = vadd.f32 %v96, %v537
    %v539 = vpop.f32.mrb[0].mxu0
    %540 = vmatprep.mubr.f32.mxu0 0.0
    %541 = vmatmul.mubr.f32.gmra.mrb[0].mxu0 %v238
    %v542 = vpop.f32.mrb[0].mxu0
    %v543 = vadd.f32 %v96, %v542
    %v544 = vpop.f32.mrb[0].mxu0
    %545 = vmatprep.mubr.f32.mxu0 0.0
    %546 = vmatmul.mubr.f32.gmra.mrb[0].mxu0 %v241
    %v547 = vpop.f32.mrb[0].mxu0
    %v548 = vadd.f32 %v96, %v547
    %v549 = vpop.f32.mrb[0].mxu0
    %550 = vmatprep.mubr.f32.mxu0 0.0
    %551 = vmatmul.mubr.f32.gmra.mrb[0].mxu0 %v244
    %v552 = vpop.f32.mrb[0].mxu0
    %v553 = vadd.f32 %v96, %v552
    %v554 = vpop.f32.mrb[0].mxu0
    %555 = vdwg.mxu0
    %vm556 = vcmp.gt.f32.partialorder %v313, 0.0
    %vm557 = vcmp.gt.f32.partialorder %v318, 0.0
    %vm558 = vcmp.gt.f32.partialorder %v323, 0.0
    %vm559 = vcmp.gt.f32.partialorder %v328, 0.0
    %vm560 = vcmp.gt.f32.partialorder %v333, 0.0
    %vm561 = vcmp.gt.f32.partialorder %v338, 0.0
    %vm562 = vcmp.gt.f32.partialorder %v343, 0.0
    %vm563 = vcmp.gt.f32.partialorder %v348, 0.0
    %vm564 = vcmp.gt.f32.partialorder %v353, 0.0
    %vm565 = vcmp.gt.f32.partialorder %v358, 0.0
    %vm566 = vcmp.gt.f32.partialorder %v363, 0.0
    %vm567 = vcmp.gt.f32.partialorder %v368, 0.0
    %vm568 = vcmp.gt.f32.partialorder %v373, 0.0
    %vm569 = vcmp.gt.f32.partialorder %v378, 0.0
    %vm570 = vcmp.gt.f32.partialorder %v383, 0.0
    %vm571 = vcmp.gt.f32.partialorder %v388, 0.0
    %vm572 = vcmp.gt.f32.partialorder %v393, 0.0
    %vm573 = vcmp.gt.f32.partialorder %v398, 0.0
    %vm574 = vcmp.gt.f32.partialorder %v403, 0.0
    %vm575 = vcmp.gt.f32.partialorder %v408, 0.0
    %vm576 = vcmp.gt.f32.partialorder %v413, 0.0
    %vm577 = vcmp.gt.f32.partialorder %v418, 0.0
    %vm578 = vcmp.gt.f32.partialorder %v423, 0.0
    %vm579 = vcmp.gt.f32.partialorder %v428, 0.0
    %vm580 = vcmp.gt.f32.partialorder %v433, 0.0
    %vm581 = vcmp.gt.f32.partialorder %v438, 0.0
    %vm582 = vcmp.gt.f32.partialorder %v443, 0.0
    %vm583 = vcmp.gt.f32.partialorder %v448, 0.0
    %vm584 = vcmp.gt.f32.partialorder %v453, 0.0
    %vm585 = vcmp.gt.f32.partialorder %v458, 0.0
    %vm586 = vcmp.gt.f32.partialorder %v463, 0.0
    %vm587 = vcmp.gt.f32.partialorder %v468, 0.0
    %vm588 = vcmp.gt.f32.partialorder %v473, 0.0
    %vm589 = vcmp.gt.f32.partialorder %v478, 0.0
    %vm590 = vcmp.gt.f32.partialorder %v483, 0.0
    %vm591 = vcmp.gt.f32.partialorder %v488, 0.0
    %vm592 = vcmp.gt.f32.partialorder %v493, 0.0
    %vm593 = vcmp.gt.f32.partialorder %v498, 0.0
    %vm594 = vcmp.gt.f32.partialorder %v503, 0.0
    %vm595 = vcmp.gt.f32.partialorder %v508, 0.0
    %vm596 = vcmp.gt.f32.partialorder %v513, 0.0
    %vm597 = vcmp.gt.f32.partialorder %v518, 0.0
    %vm598 = vcmp.gt.f32.partialorder %v523, 0.0
    %vm599 = vcmp.gt.f32.partialorder %v528, 0.0
    %vm600 = vcmp.gt.f32.partialorder %v533, 0.0
    %vm601 = vcmp.gt.f32.partialorder %v538, 0.0
    %vm602 = vcmp.gt.f32.partialorder %v543, 0.0
    %vm603 = vcmp.gt.f32.partialorder %v548, 0.0
    %vm604 = vcmp.gt.f32.partialorder %v553, 0.0
    %v605 = vmul.f32 %v313, 0.1
    %v606 = vmul.f32 %v318, 0.1
    %v607 = vmul.f32 %v323, 0.1
    %v608 = vmul.f32 %v328, 0.1
    %v609 = vmul.f32 %v333, 0.1
    %v610 = vmul.f32 %v338, 0.1
    %v611 = vmul.f32 %v343, 0.1
    %v612 = vmul.f32 %v348, 0.1
    %v613 = vmul.f32 %v353, 0.1
    %v614 = vmul.f32 %v358, 0.1
    %v615 = vmul.f32 %v363, 0.1
    %v616 = vmul.f32 %v368, 0.1
    %v617 = vmul.f32 %v373, 0.1
    %v618 = vmul.f32 %v378, 0.1
    %v619 = vmul.f32 %v383, 0.1
    %v620 = vmul.f32 %v388, 0.1
    %v621 = vmul.f32 %v393, 0.1
    %v622 = vmul.f32 %v398, 0.1
    %v623 = vmul.f32 %v403, 0.1
    %v624 = vmul.f32 %v408, 0.1
    %v625 = vmul.f32 %v413, 0.1
    %v626 = vmul.f32 %v418, 0.1
    %v627 = vmul.f32 %v423, 0.1
    %v628 = vmul.f32 %v428, 0.1
    %v629 = vmul.f32 %v433, 0.1
    %v630 = vmul.f32 %v438, 0.1
    %v631 = vmul.f32 %v443, 0.1
    %v632 = vmul.f32 %v448, 0.1
    %v633 = vmul.f32 %v453, 0.1
    %v634 = vmul.f32 %v458, 0.1
    %v635 = vmul.f32 %v463, 0.1
    %v636 = vmul.f32 %v468, 0.1
    %v637 = vmul.f32 %v473, 0.1
    %v638 = vmul.f32 %v478, 0.1
    %v639 = vmul.f32 %v483, 0.1
    %v640 = vmul.f32 %v488, 0.1
    %v641 = vmul.f32 %v493, 0.1
    %v642 = vmul.f32 %v498, 0.1
    %v643 = vmul.f32 %v503, 0.1
    %v644 = vmul.f32 %v508, 0.1
    %v645 = vmul.f32 %v513, 0.1
    %v646 = vmul.f32 %v518, 0.1
    %v647 = vmul.f32 %v523, 0.1
    %v648 = vmul.f32 %v528, 0.1
    %v649 = vmul.f32 %v533, 0.1
    %v650 = vmul.f32 %v538, 0.1
    %v651 = vmul.f32 %v543, 0.1
    %v652 = vmul.f32 %v548, 0.1
    %v653 = vmul.f32 %v553, 0.1
    %v654 = vsel %vm556, %v313, %v605
    %v655 = vsel %vm557, %v318, %v606
    %v656 = vsel %vm558, %v323, %v607
    %v657 = vsel %vm559, %v328, %v608
    %v658 = vsel %vm560, %v333, %v609
    %v659 = vsel %vm561, %v338, %v610
    %v660 = vsel %vm562, %v343, %v611
    %v661 = vsel %vm563, %v348, %v612
    %v662 = vsel %vm564, %v353, %v613
    %v663 = vsel %vm565, %v358, %v614
    %v664 = vsel %vm566, %v363, %v615
    %v665 = vsel %vm567, %v368, %v616
    %v666 = vsel %vm568, %v373, %v617
    %v667 = vsel %vm569, %v378, %v618
    %v668 = vsel %vm570, %v383, %v619
    %v669 = vsel %vm571, %v388, %v620
    %v670 = vsel %vm572, %v393, %v621
    %v671 = vsel %vm573, %v398, %v622
    %v672 = vsel %vm574, %v403, %v623
    %v673 = vsel %vm575, %v408, %v624
    %v674 = vsel %vm576, %v413, %v625
    %v675 = vsel %vm577, %v418, %v626
    %v676 = vsel %vm578, %v423, %v627
    %v677 = vsel %vm579, %v428, %v628
    %v678 = vsel %vm580, %v433, %v629
    %v679 = vsel %vm581, %v438, %v630
    %v680 = vsel %vm582, %v443, %v631
    %v681 = vsel %vm583, %v448, %v632
    %v682 = vsel %vm584, %v453, %v633
    %v683 = vsel %vm585, %v458, %v634
    %v684 = vsel %vm586, %v463, %v635
    %v685 = vsel %vm587, %v468, %v636
    %v686 = vsel %vm588, %v473, %v637
    %v687 = vsel %vm589, %v478, %v638
    %v688 = vsel %vm590, %v483, %v639
    %v689 = vsel %vm591, %v488, %v640
    %v690 = vsel %vm592, %v493, %v641
    %v691 = vsel %vm593, %v498, %v642
    %v692 = vsel %vm594, %v503, %v643
    %v693 = vsel %vm595, %v508, %v644
    %v694 = vsel %vm596, %v513, %v645
    %v695 = vsel %vm597, %v518, %v646
    %v696 = vsel %vm598, %v523, %v647
    %v697 = vsel %vm599, %v528, %v648
    %v698 = vsel %vm600, %v533, %v649
    %v699 = vsel %vm601, %v538, %v650
    %v700 = vsel %vm602, %v543, %v651
    %v701 = vsel %vm603, %v548, %v652
    %v702 = vsel %vm604, %v553, %v653
    %vm703 = vcmask 261120
    %704 = vst.msk [vmem:[%s3] sm:$0xff] %vm703, %v654
    %705 = vst.msk [vmem:[%s3 + $0x8] sm:$0xff] %vm703, %v655
    %706 = vst.msk [vmem:[%s3 + $0x10] sm:$0xff] %vm703, %v656
    %707 = vst.msk [vmem:[%s3 + $0x18] sm:$0xff] %vm703, %v657
    %708 = vst.msk [vmem:[%s3 + $0x20] sm:$0xff] %vm703, %v658
    %709 = vst.msk [vmem:[%s3 + $0x28] sm:$0xff] %vm703, %v659
    %710 = vst.msk [vmem:[%s3 + $0x30] sm:$0xff] %vm703, %v660
    %711 = vst.msk [vmem:[%s3 + $0x38] sm:$0xff] %vm703, %v661
    %712 = vst.msk [vmem:[%s3 + $0x40] sm:$0xff] %vm703, %v662
    %713 = vst.msk [vmem:[%s3 + $0x48] sm:$0xff] %vm703, %v663
    %714 = vst.msk [vmem:[%s3 + $0x50] sm:$0xff] %vm703, %v664
    %715 = vst.msk [vmem:[%s3 + $0x58] sm:$0xff] %vm703, %v665
    %716 = vst.msk [vmem:[%s3 + $0x60] sm:$0xff] %vm703, %v666
    %717 = vst.msk [vmem:[%s3 + $0x68] sm:$0xff] %vm703, %v667
    %718 = vst.msk [vmem:[%s3 + $0x70] sm:$0xff] %vm703, %v668
    %719 = vst.msk [vmem:[%s3 + $0x78] sm:$0xff] %vm703, %v669
    %720 = vst.msk [vmem:[%s3 + $0x80] sm:$0xff] %vm703, %v670
    %721 = vst.msk [vmem:[%s3 + $0x88] sm:$0xff] %vm703, %v671
    %722 = vst.msk [vmem:[%s3 + $0x90] sm:$0xff] %vm703, %v672
    %723 = vst.msk [vmem:[%s3 + $0x98] sm:$0xff] %vm703, %v673
    %724 = vst.msk [vmem:[%s3 + $0xa0] sm:$0xff] %vm703, %v674
    %725 = vst.msk [vmem:[%s3 + $0xa8] sm:$0xff] %vm703, %v675
    %726 = vst.msk [vmem:[%s3 + $0xb0] sm:$0xff] %vm703, %v676
    %727 = vst.msk [vmem:[%s3 + $0xb8] sm:$0xff] %vm703, %v677
    %728 = vst.msk [vmem:[%s3 + $0xc0] sm:$0xff] %vm703, %v678
    %729 = vst.msk [vmem:[%s3 + $0xc8] sm:$0xff] %vm703, %v679
    %730 = vst.msk [vmem:[%s3 + $0xd0] sm:$0xff] %vm703, %v680
    %731 = vst.msk [vmem:[%s3 + $0xd8] sm:$0xff] %vm703, %v681
    %732 = vst.msk [vmem:[%s3 + $0xe0] sm:$0xff] %vm703, %v682
    %733 = vst.msk [vmem:[%s3 + $0xe8] sm:$0xff] %vm703, %v683
    %734 = vst.msk [vmem:[%s3 + $0xf0] sm:$0xff] %vm703, %v684
    %735 = vst.msk [vmem:[%s3 + $0xf8] sm:$0xff] %vm703, %v685
    %736 = vst.msk [vmem:[%s3 + $0x100] sm:$0xff] %vm703, %v686
    %737 = vst.msk [vmem:[%s3 + $0x108] sm:$0xff] %vm703, %v687
    %738 = vst.msk [vmem:[%s3 + $0x110] sm:$0xff] %vm703, %v688
    %739 = vst.msk [vmem:[%s3 + $0x118] sm:$0xff] %vm703, %v689
    %740 = vst.msk [vmem:[%s3 + $0x120] sm:$0xff] %vm703, %v690
    %741 = vst.msk [vmem:[%s3 + $0x128] sm:$0xff] %vm703, %v691
    %742 = vst.msk [vmem:[%s3 + $0x130] sm:$0xff] %vm703, %v692
    %743 = vst.msk [vmem:[%s3 + $0x138] sm:$0xff] %vm703, %v693
    %744 = vst.msk [vmem:[%s3 + $0x140] sm:$0xff] %vm703, %v694
    %745 = vst.msk [vmem:[%s3 + $0x148] sm:$0xff] %vm703, %v695
    %746 = vst.msk [vmem:[%s3 + $0x150] sm:$0xff] %vm703, %v696
    %747 = vst.msk [vmem:[%s3 + $0x158] sm:$0xff] %vm703, %v697
    %748 = vst.msk [vmem:[%s3 + $0x160] sm:$0xff] %vm703, %v698
    %749 = vst.msk [vmem:[%s3 + $0x168] sm:$0xff] %vm703, %v699
    %750 = vst.msk [vmem:[%s3 + $0x170] sm:$0xff] %vm703, %v700
    %751 = vst.msk [vmem:[%s3 + $0x178] sm:$0xff] %vm703, %v701
    %752 = vst.msk [vmem:[%s3 + $0x180] sm:$0xff] %vm703, %v702
    // Predicated region
    $region22: #{forward_prepared.3} parent=1 // pred_check
      _
    $region23: #{forward_prepared.3} parent=1 // pred_check_branch
      %754 = sbr.rel (0) target = $region25
    $region24: #{forward_prepared.3} parent=1 // pred_region
      _
    $region25: #{forward_prepared.3} parent=1 // pred_fallthru
      _
    // Predicated region
    $region26: #{forward_prepared.3} parent=1 // pred_check
      _
    $region27: #{forward_prepared.3} parent=1 // pred_check_branch
      %756 = sbr.rel (0) target = $region29
    $region28: #{forward_prepared.3} parent=1 // pred_region
      _
    $region29: #{forward_prepared.3} parent=1 // pred_fallthru
      _
    %757 = vsyncpa [#allocation3], 1
    %758 = vsyncpa [#allocation5], 1

// kernel: forward_prepared.4
$region0: #{forward_prepared.4}
  #allocation0 [shape = 'u32[]', space=smem, size = 0x4, offset = 0x4, fixed_abs, tag = 'smem constant byte address 0x4 - core index']
  #allocation1 [shape = 'u32[144,128]{1,0:T(1,128)}', space=vmem, size = 0x12000, scoped, tag = 'internal scratch']
  %s0 = inlined_call_operand.vmem [shape: f32[98,512], index: 0, kind: input, shape index: {}]
  %s1 = inlined_call_operand.vmem [shape: f32[512,64], index: 1, kind: input, shape index: {}]
  %s2 = inlined_call_operand.hbm [shape: f32[1,64], index: 2, kind: input, shape index: {}]
  %s3 = inlined_call_operand.vmem [shape: f32[98,64], index: 3, kind: output, shape index: {}]
  %s4 = sld [smem:[#allocation0]]
  $region26: #{forward_prepared.4} parent=0
    _
  %s6 = ssub.s32 1, %s4
  %s7 = scalar_select 0, %s6, %s4
  $region1: #{forward_prepared.4} parent=0
    #allocation2 [shape = 'u8[512]{0}', space=vmem, size = 0x400, scoped, tag = 'input window, operand 2, single buffered']
    #allocation3 [shape = 's32[1]{0}', space=sflag, size = 0x4, scoped, tag = 'scoped memory for forward_prepared.4']
    %8 = vsyncpa [#allocation3], 0
    // Predicated region
    $region2: #{forward_prepared.4} parent=1 // pred_check
      _
    $region3: #{forward_prepared.4} parent=1 // pred_check_branch
      %10 = sbr.rel (0) target = $region5
    $region4: #{forward_prepared.4} parent=1 // pred_region
      _
    $region5: #{forward_prepared.4} parent=1 // pred_fallthru
      _
    // Predicated region
    $region6: #{forward_prepared.4} parent=1 // pred_check
      _
    $region7: #{forward_prepared.4} parent=1 // pred_check_branch
      %12 = sbr.rel (0) target = $region9
    $region8: #{forward_prepared.4} parent=1 // pred_region
      _
    $region9: #{forward_prepared.4} parent=1 // pred_fallthru
      _
    // Predicated region
    $region10: #{forward_prepared.4} parent=1 // pred_check
      _
    $region11: #{forward_prepared.4} parent=1 // pred_check_branch
      %14 = sbr.rel (0) target = $region13
    $region12: #{forward_prepared.4} parent=1 // pred_region
      %s16 = ssub.s32 16, 16
      %17 = vsyncadd [#allocation3], %s16
      %s19 = sshll.u32 [#allocation2], 4
      %s20 = int_to_ptr.vmem [resolvable:$true] %s19
      %22 = dma.hbm_to_vmem [thread:$0]  %s2, 16, %s20, [#allocation3]
    $region13: #{forward_prepared.4} parent=1 // pred_fallthru
      _
    // Predicated region
    $region14: #{forward_prepared.4} parent=1 // pred_check
      _
    $region15: #{forward_prepared.4} parent=1 // pred_check_branch
      %24 = sbr.rel (0) target = $region17
    $region16: #{forward_prepared.4} parent=1 // pred_region
      %25 = dma.done [#allocation3], 16
    $region17: #{forward_prepared.4} parent=1 // pred_fallthru
      _
    %v26 = vld [vmem:[%s0] sm:$0xff]
    %v27 = vld [vmem:[%s0 + $0x8] sm:$0xff]
    %v28 = vld [vmem:[%s0 + $0x10] sm:$0xff]
    %v29 = vld [vmem:[%s0 + $0x18] sm:$0xff]
    %v30 = vld [vmem:[%s0 + $0x20] sm:$0xff]
    %v31 = vld [vmem:[%s0 + $0x28] sm:$0xff]
    %v32 = vld [vmem:[%s0 + $0x30] sm:$0xff]
    %v33 = vld [vmem:[%s0 + $0x38] sm:$0xff]
    %v34 = vld [vmem:[%s0 + $0x40] sm:$0xff]
    %v35 = vld [vmem:[%s0 + $0x48] sm:$0xff]
    %v36 = vld [vmem:[%s0 + $0x50] sm:$0xff]
    %v37 = vld [vmem:[%s0 + $0x58] sm:$0xff]
    %v38 = vld [vmem:[%s0 + $0x60] sm:$0xff]
    %v39 = vld [vmem:[%s0 + $0x68] sm:$0xff]
    %v40 = vld [vmem:[%s0 + $0x70] sm:$0xff]
    %v41 = vld [vmem:[%s0 + $0x78] sm:$0xff]
    %v42 = vld [vmem:[%s0 + $0x80] sm:$0xff]
    %v43 = vld [vmem:[%s0 + $0x88] sm:$0xff]
    %v44 = vld [vmem:[%s0 + $0x90] sm:$0xff]
    %v45 = vld [vmem:[%s0 + $0x98] sm:$0xff]
    %v46 = vld [vmem:[%s0 + $0xa0] sm:$0xff]
    %v47 = vld [vmem:[%s0 + $0xa8] sm:$0xff]
    %v48 = vld [vmem:[%s0 + $0xb0] sm:$0xff]
    %v49 = vld [vmem:[%s0 + $0xb8] sm:$0xff]
    %v50 = vld [vmem:[%s0 + $0xc0] sm:$0xff]
    %v51 = vld [vmem:[%s0 + $0xc8] sm:$0xff]
    %v52 = vld [vmem:[%s0 + $0xd0] sm:$0xff]
    %v53 = vld [vmem:[%s0 + $0xd8] sm:$0xff]
    %v54 = vld [vmem:[%s0 + $0xe0] sm:$0xff]
    %v55 = vld [vmem:[%s0 + $0xe8] sm:$0xff]
    %v56 = vld [vmem:[%s0 + $0xf0] sm:$0xff]
    %v57 = vld [vmem:[%s0 + $0xf8] sm:$0xff]
    %v58 = vld [vmem:[%s0 + $0x100] sm:$0xff]
    %v59 = vld [vmem:[%s0 + $0x108] sm:$0xff]
    %v60 = vld [vmem:[%s0 + $0x110] sm:$0xff]
    %v61 = vld [vmem:[%s0 + $0x118] sm:$0xff]
    %v62 = vld [vmem:[%s0 + $0x120] sm:$0xff]
    %v63 = vld [vmem:[%s0 + $0x128] sm:$0xff]
    %v64 = vld [vmem:[%s0 + $0x130] sm:$0xff]
    %v65 = vld [vmem:[%s0 + $0x138] sm:$0xff]
    %v66 = vld [vmem:[%s0 + $0x140] sm:$0xff]
    %v67 = vld [vmem:[%s0 + $0x148] sm:$0xff]
    %v68 = vld [vmem:[%s0 + $0x150] sm:$0xff]
    %v69 = vld [vmem:[%s0 + $0x158] sm:$0xff]
    %v70 = vld [vmem:[%s0 + $0x160] sm:$0xff]
    %v71 = vld [vmem:[%s0 + $0x168] sm:$0xff]
    %v72 = vld [vmem:[%s0 + $0x170] sm:$0xff]
    %v73 = vld [vmem:[%s0 + $0x178] sm:$0xff]
    %v74 = vld [vmem:[%s0 + $0x180] sm:$0x3]
    %v75 = vld [vmem:[%s0 + $0x188] sm:$0x3]
    %v76 = vld [vmem:[%s0 + $0x190] sm:$0x3]
    %v77 = vld [vmem:[%s0 + $0x198] sm:$0x3]
    %v78 = vld [vmem:[%s1] sm:$0xff]
    %v79 = vld [vmem:[%s1 + $0x8] sm:$0xff]
    %v80 = vld [vmem:[%s1 + $0x10] sm:$0xff]
    %v81 = vld [vmem:[%s1 + $0x18] sm:$0xff]
    %v82 = vld [vmem:[%s1 + $0x20] sm:$0xff]
    %v83 = vld [vmem:[%s1 + $0x28] sm:$0xff]
    %v84 = vld [vmem:[%s1 + $0x30] sm:$0xff]
    %v85 = vld [vmem:[%s1 + $0x38] sm:$0xff]
    %v86 = vld [vmem:[%s1 + $0x40] sm:$0xff]
    %v87 = vld [vmem:[%s1 + $0x48] sm:$0xff]
    %v88 = vld [vmem:[%s1 + $0x50] sm:$0xff]
    %v89 = vld [vmem:[%s1 + $0x58] sm:$0xff]
    %v90 = vld [vmem:[%s1 + $0x60] sm:$0xff]
    %v91 = vld [vmem:[%s1 + $0x68] sm:$0xff]
    %v92 = vld [vmem:[%s1 + $0x70] sm:$0xff]
    %v93 = vld [vmem:[%s1 + $0x78] sm:$0xff]
    %v94 = vld [vmem:[%s1 + $0x80] sm:$0xff]
    %v95 = vld [vmem:[%s1 + $0x88] sm:$0xff]
    %v96 = vld [vmem:[%s1 + $0x90] sm:$0xff]
    %v97 = vld [vmem:[%s1 + $0x98] sm:$0xff]
    %v98 = vld [vmem:[%s1 + $0xa0] sm:$0xff]
    %v99 = vld [vmem:[%s1 + $0xa8] sm:$0xff]
    %v100 = vld [vmem:[%s1 + $0xb0] sm:$0xff]
    %v101 = vld [vmem:[%s1 + $0xb8] sm:$0xff]
    %v102 = vld [vmem:[%s1 + $0xc0] sm:$0xff]
    %v103 = vld [vmem:[%s1 + $0xc8] sm:$0xff]
    %v104 = vld [vmem:[%s1 + $0xd0] sm:$0xff]
    %v105 = vld [vmem:[%s1 + $0xd8] sm:$0xff]
    %v106 = vld [vmem:[%s1 + $0xe0] sm:$0xff]
    %v107 = vld [vmem:[%s1 + $0xe8] sm:$0xff]
    %v108 = vld [vmem:[%s1 + $0xf0] sm:$0xff]
    %v109 = vld [vmem:[%s1 + $0xf8] sm:$0xff]
    %v110 = vld [vmem:[%s1 + $0x100] sm:$0xff]
    %v111 = vld [vmem:[%s1 + $0x108] sm:$0xff]
    %v112 = vld [vmem:[%s1 + $0x110] sm:$0xff]
    %v113 = vld [vmem:[%s1 + $0x118] sm:$0xff]
    %v114 = vld [vmem:[%s1 + $0x120] sm:$0xff]
    %v115 = vld [vmem:[%s1 + $0x128] sm:$0xff]
    %v116 = vld [vmem:[%s1 + $0x130] sm:$0xff]
    %v117 = vld [vmem:[%s1 + $0x138] sm:$0xff]
    %v118 = vld [vmem:[%s1 + $0x140] sm:$0xff]
    %v119 = vld [vmem:[%s1 + $0x148] sm:$0xff]
    %v120 = vld [vmem:[%s1 + $0x150] sm:$0xff]
    %v121 = vld [vmem:[%s1 + $0x158] sm:$0xff]
    %v122 = vld [vmem:[%s1 + $0x160] sm:$0xff]
    %v123 = vld [vmem:[%s1 + $0x168] sm:$0xff]
    %v124 = vld [vmem:[%s1 + $0x170] sm:$0xff]
    %v125 = vld [vmem:[%s1 + $0x178] sm:$0xff]
    %v126 = vld [vmem:[%s1 + $0x180] sm:$0xff]
    %v127 = vld [vmem:[%s1 + $0x188] sm:$0xff]
    %v128 = vld [vmem:[%s1 + $0x190] sm:$0xff]
    %v129 = vld [vmem:[%s1 + $0x198] sm:$0xff]
    %v130 = vld [vmem:[%s1 + $0x1a0] sm:$0xff]
    %v131 = vld [vmem:[%s1 + $0x1a8] sm:$0xff]
    %v132 = vld [vmem:[%s1 + $0x1b0] sm:$0xff]
    %v133 = vld [vmem:[%s1 + $0x1b8] sm:$0xff]
    %v134 = vld [vmem:[%s1 + $0x1c0] sm:$0xff]
    %v135 = vld [vmem:[%s1 + $0x1c8] sm:$0xff]
    %v136 = vld [vmem:[%s1 + $0x1d0] sm:$0xff]
    %v137 = vld [vmem:[%s1 + $0x1d8] sm:$0xff]
    %v138 = vld [vmem:[%s1 + $0x1e0] sm:$0xff]
    %v139 = vld [vmem:[%s1 + $0x1e8] sm:$0xff]
    %v140 = vld [vmem:[%s1 + $0x1f0] sm:$0xff]
    %v141 = vld [vmem:[%s1 + $0x1f8] sm:$0xff]
    %v142 = vld [vmem:[#allocation2] sm:$0x1]
    %v144 = vlaneseq
    %v145 = vshrl.u32 %v144, 7
    %v146 = vsub.s32 0, %v145
    %v147 = vrot.slane %v142, %v146
    %149 = vmatprep.subr.mxu0 0.0
    %150 = vmatpush1.msra.mxu0 %v78
    %151 = vmatprep.subr.mxu0 0.0
    %152 = vmatpush1.msra.mxu0 %v79
    %153 = vmatprep.subr.mxu0 0.0
    %154 = vmatpush1.msra.mxu0 %v80
    %155 = vmatprep.subr.mxu0 0.0
    %156 = vmatpush1.msra.mxu0 %v81
    %157 = vmatprep.subr.mxu0 0.0
    %158 = vmatpush1.msra.mxu0 %v82
    %159 = vmatprep.subr.mxu0 0.0
    %160 = vmatpush1.msra.mxu0 %v83
    %161 = vmatprep.subr.mxu0 0.0
    %162 = vmatpush1.msra.mxu0 %v84
    %163 = vmatprep.subr.mxu0 0.0
    %164 = vmatpush1.msra.mxu0 %v85
    %165 = vmatprep.subr.mxu0 0.0
    %166 = vmatpush1.msra.mxu0 %v86
    %167 = vmatprep.subr.mxu0 0.0
    %168 = vmatpush1.msra.mxu0 %v87
    %169 = vmatprep.subr.mxu0 0.0
    %170 = vmatpush1.msra.mxu0 %v88
    %171 = vmatprep.subr.mxu0 0.0
    %172 = vmatpush1.msra.mxu0 %v89
    %173 = vmatprep.subr.mxu0 0.0
    %174 = vmatpush1.msra.mxu0 %v90
    %175 = vmatprep.subr.mxu0 0.0
    %176 = vmatpush1.msra.mxu0 %v91
    %177 = vmatprep.subr.mxu0 0.0
    %178 = vmatpush1.msra.mxu0 %v92
    %179 = vmatprep.subr.mxu0 0.0
    %180 = vmatpush1.msra.mxu0 %v93
    %181 = vmatprep.subr.mxu0 0.0
    %182 = vmatpush1.msra.mxu0 %v94
    %183 = vmatprep.subr.mxu0 0.0
    %184 = vmatpush1.msra.mxu0 %v95
    %185 = vmatprep.subr.mxu0 0.0
    %186 = vmatpush1.msra.mxu0 %v96
    %187 = vmatprep.subr.mxu0 0.0
    %188 = vmatpush1.msra.mxu0 %v97
    %189 = vmatprep.subr.mxu0 0.0
    %190 = vmatpush1.msra.mxu0 %v98
    %191 = vmatprep.subr.mxu0 0.0
    %192 = vmatpush1.msra.mxu0 %v99
    %193 = vmatprep.subr.mxu0 0.0
    %194 = vmatpush1.msra.mxu0 %v100
    %195 = vmatprep.subr.mxu0 0.0
    %196 = vmatpush1.msra.mxu0 %v101
    %197 = vmatprep.subr.mxu0 0.0
    %198 = vmatpush1.msra.mxu0 %v102
    %199 = vmatprep.subr.mxu0 0.0
    %200 = vmatpush1.msra.mxu0 %v103
    %201 = vmatprep.subr.mxu0 0.0
    %202 = vmatpush1.msra.mxu0 %v104
    %203 = vmatprep.subr.mxu0 0.0
    %204 = vmatpush1.msra.mxu0 %v105
    %205 = vmatprep.subr.mxu0 0.0
    %206 = vmatpush1.msra.mxu0 %v106
    %207 = vmatprep.subr.mxu0 0.0
    %208 = vmatpush1.msra.mxu0 %v107
    %209 = vmatprep.subr.mxu0 0.0
    %210 = vmatpush1.msra.mxu0 %v108
    %211 = vmatprep.subr.mxu0 0.0
    %212 = vmatpush1.msra.mxu0 %v109
    %213 = vmatprep.mubr.f32.mxu0 %v27
    %214 = vmatmul.mubr.f32.gmra.mrb[0].mxu0 %v26
    %v215 = vpop.f32.mrb[0].mxu0
    %v216 = vadd.f32 %v147, %v215
    %v217 = vpop.f32.mrb[0].mxu0
    %218 = vmatprep.mubr.f32.mxu0 %v31
    %219 = vmatmul.mubr.f32.gmra.mrb[0].mxu0 %v30
    %v220 = vpop.f32.mrb[0].mxu0
    %v221 = vadd.f32 %v147, %v220
    %v222 = vpop.f32.mrb[0].mxu0
    %223 = vmatprep.mubr.f32.mxu0 %v35
    %224 = vmatmul.mubr.f32.gmra.mrb[0].mxu0 %v34
    %v225 = vpop.f32.mrb[0].mxu0
    %v226 = vadd.f32 %v147, %v225
    %v227 = vpop.f32.mrb[0].mxu0
    %228 = vmatprep.mubr.f32.mxu0 %v39
    %229 = vmatmul.mubr.f32.gmra.mrb[0].mxu0 %v38
    %v230 = vpop.f32.mrb[0].mxu0
    %v231 = vadd.f32 %v147, %v230
    %v232 = vpop.f32.mrb[0].mxu0
    %233 = vmatprep.mubr.f32.mxu0 %v43
    %234 = vmatmul.mubr.f32.gmra.mrb[0].mxu0 %v42
    %v235 = vpop.f32.mrb[0].mxu0
    %v236 = vadd.f32 %v147, %v235
    %v237 = vpop.f32.mrb[0].mxu0
    %238 = vmatprep.mubr.f32.mxu0 %v47
    %239 = vmatmul.mubr.f32.gmra.mrb[0].mxu0 %v46
    %v240 = vpop.f32.mrb[0].mxu0
    %v241 = vadd.f32 %v147, %v240
    %v242 = vpop.f32.mrb[0].mxu0
    %243 = vmatprep.mubr.f32.mxu0 %v51
    %244 = vmatmul.mubr.f32.gmra.mrb[0].mxu0 %v50
    %v245 = vpop.f32.mrb[0].mxu0
    %v246 = vadd.f32 %v147, %v245
    %v247 = vpop.f32.mrb[0].mxu0
    %248 = vmatprep.mubr.f32.mxu0 %v55
    %249 = vmatmul.mubr.f32.gmra.mrb[0].mxu0 %v54
    %v250 = vpop.f32.mrb[0].mxu0
    %v251 = vadd.f32 %v147, %v250
    %v252 = vpop.f32.mrb[0].mxu0
    %253 = vmatprep.mubr.f32.mxu0 %v59
    %254 = vmatmul.mubr.f32.gmra.mrb[0].mxu0 %v58
    %v255 = vpop.f32.mrb[0].mxu0
    %v256 = vadd.f32 %v147, %v255
    %v257 = vpop.f32.mrb[0].mxu0
    %258 = vmatprep.mubr.f32.mxu0 %v63
    %259 = vmatmul.mubr.f32.gmra.mrb[0].mxu0 %v62
    %v260 = vpop.f32.mrb[0].mxu0
    %v261 = vadd.f32 %v147, %v260
    %v262 = vpop.f32.mrb[0].mxu0
    %263 = vmatprep.mubr.f32.mxu0 %v67
    %264 = vmatmul.mubr.f32.gmra.mrb[0].mxu0 %v66
    %v265 = vpop.f32.mrb[0].mxu0
    %v266 = vadd.f32 %v147, %v265
    %v267 = vpop.f32.mrb[0].mxu0
    %268 = vmatprep.mubr.f32.mxu0 %v71
    %269 = vmatmul.mubr.f32.gmra.mrb[0].mxu0 %v70
    %v270 = vpop.f32.mrb[0].mxu0
    %v271 = vadd.f32 %v147, %v270
    %v272 = vpop.f32.mrb[0].mxu0
    %273 = vmatprep.mubr.f32.mxu0 %v75
    %274 = vmatmul.mubr.f32.gmra.mrb[0].mxu0 %v74
    %v275 = vpop.f32.mrb[0].mxu0
    %v276 = vadd.f32 %v147, %v275
    %v277 = vpop.f32.mrb[0].mxu0
    %278 = vdwg.mxu0
    %279 = vmatprep.subr.mxu0 0.0
    %280 = vmatpush1.msra.mxu0 %v110
    %281 = vmatprep.subr.mxu0 0.0
    %282 = vmatpush1.msra.mxu0 %v111
    %283 = vmatprep.subr.mxu0 0.0
    %284 = vmatpush1.msra.mxu0 %v112
    %285 = vmatprep.subr.mxu0 0.0
    %286 = vmatpush1.msra.mxu0 %v113
    %287 = vmatprep.subr.mxu0 0.0
    %288 = vmatpush1.msra.mxu0 %v114
    %289 = vmatprep.subr.mxu0 0.0
    %290 = vmatpush1.msra.mxu0 %v115
    %291 = vmatprep.subr.mxu0 0.0
    %292 = vmatpush1.msra.mxu0 %v116
    %293 = vmatprep.subr.mxu0 0.0
    %294 = vmatpush1.msra.mxu0 %v117
    %295 = vmatprep.subr.mxu0 0.0
    %296 = vmatpush1.msra.mxu0 %v118
    %297 = vmatprep.subr.mxu0 0.0
    %298 = vmatpush1.msra.mxu0 %v119
    %299 = vmatprep.subr.mxu0 0.0
    %300 = vmatpush1.msra.mxu0 %v120
    %301 = vmatprep.subr.mxu0 0.0
    %302 = vmatpush1.msra.mxu0 %v121
    %303 = vmatprep.subr.mxu0 0.0
    %304 = vmatpush1.msra.mxu0 %v122
    %305 = vmatprep.subr.mxu0 0.0
    %306 = vmatpush1.msra.mxu0 %v123
    %307 = vmatprep.subr.mxu0 0.0
    %308 = vmatpush1.msra.mxu0 %v124
    %309 = vmatprep.subr.mxu0 0.0
    %310 = vmatpush1.msra.mxu0 %v125
    %311 = vmatprep.subr.mxu0 0.0
    %312 = vmatpush1.msra.mxu0 %v126
    %313 = vmatprep.subr.mxu0 0.0
    %314 = vmatpush1.msra.mxu0 %v127
    %315 = vmatprep.subr.mxu0 0.0
    %316 = vmatpush1.msra.mxu0 %v128
    %317 = vmatprep.subr.mxu0 0.0
    %318 = vmatpush1.msra.mxu0 %v129
    %319 = vmatprep.subr.mxu0 0.0
    %320 = vmatpush1.msra.mxu0 %v130
    %321 = vmatprep.subr.mxu0 0.0
    %322 = vmatpush1.msra.mxu0 %v131
    %323 = vmatprep.subr.mxu0 0.0
    %324 = vmatpush1.msra.mxu0 %v132
    %325 = vmatprep.subr.mxu0 0.0
    %326 = vmatpush1.msra.mxu0 %v133
    %327 = vmatprep.subr.mxu0 0.0
    %328 = vmatpush1.msra.mxu0 %v134
    %329 = vmatprep.subr.mxu0 0.0
    %330 = vmatpush1.msra.mxu0 %v135
    %331 = vmatprep.subr.mxu0 0.0
    %332 = vmatpush1.msra.mxu0 %v136
    %333 = vmatprep.subr.mxu0 0.0
    %334 = vmatpush1.msra.mxu0 %v137
    %335 = vmatprep.subr.mxu0 0.0
    %336 = vmatpush1.msra.mxu0 %v138
    %337 = vmatprep.subr.mxu0 0.0
    %338 = vmatpush1.msra.mxu0 %v139
    %339 = vmatprep.subr.mxu0 0.0
    %340 = vmatpush1.msra.mxu0 %v140
    %341 = vmatprep.subr.mxu0 0.0
    %342 = vmatpush1.msra.mxu0 %v141
    %343 = vmatprep.mubr.f32.mxu0 %v29
    %344 = vmatmul.mubr.f32.gmra.mrb[0].mxu0 %v28
    %v345 = vpop.f32.mrb[0].mxu0
    %v346 = vadd.f32 %v216, %v345
    %v347 = vpop.f32.mrb[0].mxu0
    %348 = vmatprep.mubr.f32.mxu0 %v33
    %349 = vmatmul.mubr.f32.gmra.mrb[0].mxu0 %v32
    %v350 = vpop.f32.mrb[0].mxu0
    %v351 = vadd.f32 %v221, %v350
    %v352 = vpop.f32.mrb[0].mxu0
    %353 = vmatprep.mubr.f32.mxu0 %v37
    %354 = vmatmul.mubr.f32.gmra.mrb[0].mxu0 %v36
    %v355 = vpop.f32.mrb[0].mxu0
    %v356 = vadd.f32 %v226, %v355
    %v357 = vpop.f32.mrb[0].mxu0
    %358 = vmatprep.mubr.f32.mxu0 %v41
    %359 = vmatmul.mubr.f32.gmra.mrb[0].mxu0 %v40
    %v360 = vpop.f32.mrb[0].mxu0
    %v361 = vadd.f32 %v231, %v360
    %v362 = vpop.f32.mrb[0].mxu0
    %363 = vmatprep.mubr.f32.mxu0 %v45
    %364 = vmatmul.mubr.f32.gmra.mrb[0].mxu0 %v44
    %v365 = vpop.f32.mrb[0].mxu0
    %v366 = vadd.f32 %v236, %v365
    %v367 = vpop.f32.mrb[0].mxu0
    %368 = vmatprep.mubr.f32.mxu0 %v49
    %369 = vmatmul.mubr.f32.gmra.mrb[0].mxu0 %v48
    %v370 = vpop.f32.mrb[0].mxu0
    %v371 = vadd.f32 %v241, %v370
    %v372 = vpop.f32.mrb[0].mxu0
    %373 = vmatprep.mubr.f32.mxu0 %v53
    %374 = vmatmul.mubr.f32.gmra.mrb[0].mxu0 %v52
    %v375 = vpop.f32.mrb[0].mxu0
    %v376 = vadd.f32 %v246, %v375
    %v377 = vpop.f32.mrb[0].mxu0
    %378 = vmatprep.mubr.f32.mxu0 %v57
    %379 = vmatmul.mubr.f32.gmra.mrb[0].mxu0 %v56
    %v380 = vpop.f32.mrb[0].mxu0
    %v381 = vadd.f32 %v251, %v380
    %v382 = vpop.f32.mrb[0].mxu0
    %383 = vmatprep.mubr.f32.mxu0 %v61
    %384 = vmatmul.mubr.f32.gmra.mrb[0].mxu0 %v60
    %v385 = vpop.f32.mrb[0].mxu0
    %v386 = vadd.f32 %v256, %v385
    %v387 = vpop.f32.mrb[0].mxu0
    %388 = vmatprep.mubr.f32.mxu0 %v65
    %389 = vmatmul.mubr.f32.gmra.mrb[0].mxu0 %v64
    %v390 = vpop.f32.mrb[0].mxu0
    %v391 = vadd.f32 %v261, %v390
    %v392 = vpop.f32.mrb[0].mxu0
    %393 = vmatprep.mubr.f32.mxu0 %v69
    %394 = vmatmul.mubr.f32.gmra.mrb[0].mxu0 %v68
    %v395 = vpop.f32.mrb[0].mxu0
    %v396 = vadd.f32 %v266, %v395
    %v397 = vpop.f32.mrb[0].mxu0
    %398 = vmatprep.mubr.f32.mxu0 %v73
    %399 = vmatmul.mubr.f32.gmra.mrb[0].mxu0 %v72
    %v400 = vpop.f32.mrb[0].mxu0
    %v401 = vadd.f32 %v271, %v400
    %v402 = vpop.f32.mrb[0].mxu0
    %403 = vmatprep.mubr.f32.mxu0 %v77
    %404 = vmatmul.mubr.f32.gmra.mrb[0].mxu0 %v76
    %v405 = vpop.f32.mrb[0].mxu0
    %v406 = vadd.f32 %v276, %v405
    %v407 = vpop.f32.mrb[0].mxu0
    %408 = vdwg.mxu0
    %vm409 = vcmp.gt.f32.partialorder %v346, 0.0
    %vm410 = vcmp.gt.f32.partialorder %v351, 0.0
    %vm411 = vcmp.gt.f32.partialorder %v356, 0.0
    %vm412 = vcmp.gt.f32.partialorder %v361, 0.0
    %vm413 = vcmp.gt.f32.partialorder %v366, 0.0
    %vm414 = vcmp.gt.f32.partialorder %v371, 0.0
    %vm415 = vcmp.gt.f32.partialorder %v376, 0.0
    %vm416 = vcmp.gt.f32.partialorder %v381, 0.0
    %vm417 = vcmp.gt.f32.partialorder %v386, 0.0
    %vm418 = vcmp.gt.f32.partialorder %v391, 0.0
    %vm419 = vcmp.gt.f32.partialorder %v396, 0.0
    %vm420 = vcmp.gt.f32.partialorder %v401, 0.0
    %vm421 = vcmp.gt.f32.partialorder %v406, 0.0
    %v422 = vmul.f32 %v346, 0.1
    %v423 = vmul.f32 %v351, 0.1
    %v424 = vmul.f32 %v356, 0.1
    %v425 = vmul.f32 %v361, 0.1
    %v426 = vmul.f32 %v366, 0.1
    %v427 = vmul.f32 %v371, 0.1
    %v428 = vmul.f32 %v376, 0.1
    %v429 = vmul.f32 %v381, 0.1
    %v430 = vmul.f32 %v386, 0.1
    %v431 = vmul.f32 %v391, 0.1
    %v432 = vmul.f32 %v396, 0.1
    %v433 = vmul.f32 %v401, 0.1
    %v434 = vmul.f32 %v406, 0.1
    %v435 = vsel %vm409, %v346, %v422
    %v436 = vsel %vm410, %v351, %v423
    %v437 = vsel %vm411, %v356, %v424
    %v438 = vsel %vm412, %v361, %v425
    %v439 = vsel %vm413, %v366, %v426
    %v440 = vsel %vm414, %v371, %v427
    %v441 = vsel %vm415, %v376, %v428
    %v442 = vsel %vm416, %v381, %v429
    %v443 = vsel %vm417, %v386, %v430
    %v444 = vsel %vm418, %v391, %v431
    %v445 = vsel %vm419, %v396, %v432
    %v446 = vsel %vm420, %v401, %v433
    %v447 = vsel %vm421, %v406, %v434
    %vm448 = vcmask 523264
    %449 = vst.msk [vmem:[%s3] sm:$0xff] %vm448, %v435
    %450 = vst.msk [vmem:[%s3 + $0x8] sm:$0xff] %vm448, %v436
    %451 = vst.msk [vmem:[%s3 + $0x10] sm:$0xff] %vm448, %v437
    %452 = vst.msk [vmem:[%s3 + $0x18] sm:$0xff] %vm448, %v438
    %453 = vst.msk [vmem:[%s3 + $0x20] sm:$0xff] %vm448, %v439
    %454 = vst.msk [vmem:[%s3 + $0x28] sm:$0xff] %vm448, %v440
    %455 = vst.msk [vmem:[%s3 + $0x30] sm:$0xff] %vm448, %v441
    %456 = vst.msk [vmem:[%s3 + $0x38] sm:$0xff] %vm448, %v442
    %457 = vst.msk [vmem:[%s3 + $0x40] sm:$0xff] %vm448, %v443
    %458 = vst.msk [vmem:[%s3 + $0x48] sm:$0xff] %vm448, %v444
    %459 = vst.msk [vmem:[%s3 + $0x50] sm:$0xff] %vm448, %v445
    %460 = vst.msk [vmem:[%s3 + $0x58] sm:$0xff] %vm448, %v446
    %vm461 = vcmask 517120
    %462 = vst.msk [vmem:[%s3 + $0x60] sm:$0x3] %vm461, %v447
    // Predicated region
    $region18: #{forward_prepared.4} parent=1 // pred_check
      _
    $region19: #{forward_prepared.4} parent=1 // pred_check_branch
      %464 = sbr.rel (0) target = $region21
    $region20: #{forward_prepared.4} parent=1 // pred_region
      _
    $region21: #{forward_prepared.4} parent=1 // pred_fallthru
      _
    // Predicated region
    $region22: #{forward_prepared.4} parent=1 // pred_check
      _
    $region23: #{forward_prepared.4} parent=1 // pred_check_branch
      %466 = sbr.rel (0) target = $region25
    $region24: #{forward_prepared.4} parent=1 // pred_region
      _
    $region25: #{forward_prepared.4} parent=1 // pred_fallthru
      _
    %467 = vsyncpa [#allocation3], 1

// kernel: forward_prepared.5
$region0: #{forward_prepared.5}
  #allocation0 [shape = 'u32[]', space=smem, size = 0x4, offset = 0x4, fixed_abs, tag = 'smem constant byte address 0x4 - core index']
  #allocation1 [shape = 'u32[144,128]{1,0:T(1,128)}', space=vmem, size = 0x12000, scoped, tag = 'internal scratch']
  %s0 = inlined_call_operand.vmem [shape: f32[2,3136], index: 0, kind: input, shape index: {}]
  %s1 = inlined_call_operand.vmem [shape: f32[3136,512], index: 1, kind: input, shape index: {}]
  %s2 = inlined_call_operand.vmem [shape: f32[1,512], index: 2, kind: input, shape index: {}]
  %s3 = inlined_call_operand.vmem [shape: f32[512,512], index: 3, kind: input, shape index: {}]
  %s4 = inlined_call_operand.vmem [shape: f32[1,512], index: 4, kind: input, shape index: {}]
  %s5 = inlined_call_operand.hbm [shape: f32[2,512], index: 5, kind: output, shape index: {}]
  %s6 = sld [smem:[#allocation0]]
  $region30: #{forward_prepared.5} parent=0
    _
  %s8 = ssub.s32 1, %s6
  %s9 = scalar_select 0, %s8, %s6
  $region1: #{forward_prepared.5} parent=0
    #allocation2 [shape = 'u8[4096]{0}', space=vmem, size = 0x1000, scoped, tag = 'output window, operand 0, single buffered']
    #allocation3 [shape = 's32[1]{0}', space=sflag, size = 0x4, scoped, tag = 'scoped memory for forward_prepared.5']
    %10 = vsyncpa [#allocation3], 0
    // Predicated region
    $region2: #{forward_prepared.5} parent=1 // pred_check
      _
    $region3: #{forward_prepared.5} parent=1 // pred_check_branch
      %12 = sbr.rel (0) target = $region5
    $region4: #{forward_prepared.5} parent=1 // pred_region
      _
    $region5: #{forward_prepared.5} parent=1 // pred_fallthru
      _
    // Predicated region
    $region6: #{forward_prepared.5} parent=1 // pred_check
      _
    $region7: #{forward_prepared.5} parent=1 // pred_check_branch
      %14 = sbr.rel (0) target = $region9
    $region8: #{forward_prepared.5} parent=1 // pred_region
      _
    $region9: #{forward_prepared.5} parent=1 // pred_fallthru
      _
    // Predicated region
    $region10: #{forward_prepared.5} parent=1 // pred_check
      _
    $region11: #{forward_prepared.5} parent=1 // pred_check_branch
      %16 = sbr.rel (0) target = $region13
    $region12: #{forward_prepared.5} parent=1 // pred_region
      _
    $region13: #{forward_prepared.5} parent=1 // pred_fallthru
      _
    // Predicated region
    $region14: #{forward_prepared.5} parent=1 // pred_check
      _
    $region15: #{forward_prepared.5} parent=1 // pred_check_branch
      %18 = sbr.rel (0) target = $region17
    $region16: #{forward_prepared.5} parent=1 // pred_region
      _
    $region17: #{forward_prepared.5} parent=1 // pred_fallthru
      _
    // Predicated region
    $region18: #{forward_prepared.5} parent=1 // pred_check
      _
    $region19: #{forward_prepared.5} parent=1 // pred_check_branch
      %20 = sbr.rel (0) target = $region21
    $region20: #{forward_prepared.5} parent=1 // pred_region
      _
    $region21: #{forward_prepared.5} parent=1 // pred_fallthru
      _
    %v21 = vld [vmem:[%s0] sm:$0xff]
    %v22 = vld [vmem:[%s0 + $0x8] sm:$0xff]
    %v23 = vld [vmem:[%s0 + $0x10] sm:$0xff]
    %v24 = vld [vmem:[%s0 + $0x18] sm:$0xff]
    %v25 = vld [vmem:[%s0 + $0x20] sm:$0xff]
    %v26 = vld [vmem:[%s0 + $0x28] sm:$0xff]
    %v27 = vld [vmem:[%s0 + $0x30] sm:$0x3]
    %v28 = vld [vmem:[%s1] sm:$0xff]
    %v29 = vld [vmem:[%s1 + $0x8] sm:$0xff]
    %v30 = vld [vmem:[%s1 + $0x10] sm:$0xff]
    %v31 = vld [vmem:[%s1 + $0x18] sm:$0xff]
    %v32 = vld [vmem:[%s1 + $0x20] sm:$0xff]
    %v33 = vld [vmem:[%s1 + $0x28] sm:$0xff]
    %v34 = vld [vmem:[%s1 + $0x30] sm:$0xff]
    %v35 = vld [vmem:[%s1 + $0x38] sm:$0xff]
    %v36 = vld [vmem:[%s1 + $0x40] sm:$0xff]
    %v37 = vld [vmem:[%s1 + $0x48] sm:$0xff]
    %v38 = vld [vmem:[%s1 + $0x50] sm:$0xff]
    %v39 = vld [vmem:[%s1 + $0x58] sm:$0xff]
    %v40 = vld [vmem:[%s1 + $0x60] sm:$0xff]
    %v41 = vld [vmem:[%s1 + $0x68] sm:$0xff]
    %v42 = vld [vmem:[%s1 + $0x70] sm:$0xff]
    %v43 = vld [vmem:[%s1 + $0x78] sm:$0xff]
    %v44 = vld [vmem:[%s1 + $0x80] sm:$0xff]
    %v45 = vld [vmem:[%s1 + $0x88] sm:$0xff]
    %v46 = vld [vmem:[%s1 + $0x90] sm:$0xff]
    %v47 = vld [vmem:[%s1 + $0x98] sm:$0xff]
    %v48 = vld [vmem:[%s1 + $0xa0] sm:$0xff]
    %v49 = vld [vmem:[%s1 + $0xa8] sm:$0xff]
    %v50 = vld [vmem:[%s1 + $0xb0] sm:$0xff]
    %v51 = vld [vmem:[%s1 + $0xb8] sm:$0xff]
    %v52 = vld [vmem:[%s1 + $0xc0] sm:$0xff]
    %v53 = vld [vmem:[%s1 + $0xc8] sm:$0xff]
    %v54 = vld [vmem:[%s1 + $0xd0] sm:$0xff]
    %v55 = vld [vmem:[%s1 + $0xd8] sm:$0xff]
    %v56 = vld [vmem:[%s1 + $0xe0] sm:$0xff]
    %v57 = vld [vmem:[%s1 + $0xe8] sm:$0xff]
    %v58 = vld [vmem:[%s1 + $0xf0] sm:$0xff]
    %v59 = vld [vmem:[%s1 + $0xf8] sm:$0xff]
    %v60 = vld [vmem:[%s1 + $0x100] sm:$0xff]
    %v61 = vld [vmem:[%s1 + $0x108] sm:$0xff]
    %v62 = vld [vmem:[%s1 + $0x110] sm:$0xff]
    %v63 = vld [vmem:[%s1 + $0x118] sm:$0xff]
    %v64 = vld [vmem:[%s1 + $0x120] sm:$0xff]
    %v65 = vld [vmem:[%s1 + $0x128] sm:$0xff]
    %v66 = vld [vmem:[%s1 + $0x130] sm:$0xff]
    %v67 = vld [vmem:[%s1 + $0x138] sm:$0xff]
    %v68 = vld [vmem:[%s1 + $0x140] sm:$0xff]
    %v69 = vld [vmem:[%s1 + $0x148] sm:$0xff]
    %v70 = vld [vmem:[%s1 + $0x150] sm:$0xff]
    %v71 = vld [vmem:[%s1 + $0x158] sm:$0xff]
    %v72 = vld [vmem:[%s1 + $0x160] sm:$0xff]
    %v73 = vld [vmem:[%s1 + $0x168] sm:$0xff]
    %v74 = vld [vmem:[%s1 + $0x170] sm:$0xff]
    %v75 = vld [vmem:[%s1 + $0x178] sm:$0xff]
    %v76 = vld [vmem:[%s1 + $0x180] sm:$0xff]
    %v77 = vld [vmem:[%s1 + $0x188] sm:$0xff]
    %v78 = vld [vmem:[%s1 + $0x190] sm:$0xff]
    %v79 = vld [vmem:[%s1 + $0x198] sm:$0xff]
    %v80 = vld [vmem:[%s1 + $0x1a0] sm:$0xff]
    %v81 = vld [vmem:[%s1 + $0x1a8] sm:$0xff]
    %v82 = vld [vmem:[%s1 + $0x1b0] sm:$0xff]
    %v83 = vld [vmem:[%s1 + $0x1b8] sm:$0xff]
    %v84 = vld [vmem:[%s1 + $0x1c0] sm:$0xff]
    %v85 = vld [vmem:[%s1 + $0x1c8] sm:$0xff]
    %v86 = vld [vmem:[%s1 + $0x1d0] sm:$0xff]
    %v87 = vld [vmem:[%s1 + $0x1d8] sm:$0xff]
    %v88 = vld [vmem:[%s1 + $0x1e0] sm:$0xff]
    %v89 = vld [vmem:[%s1 + $0x1e8] sm:$0xff]
    %v90 = vld [vmem:[%s1 + $0x1f0] sm:$0xff]
    %v91 = vld [vmem:[%s1 + $0x1f8] sm:$0xff]
    %v92 = vld [vmem:[%s1 + $0x200] sm:$0xff]
    %v93 = vld [vmem:[%s1 + $0x208] sm:$0xff]
    %v94 = vld [vmem:[%s1 + $0x210] sm:$0xff]
    %v95 = vld [vmem:[%s1 + $0x218] sm:$0xff]
    %v96 = vld [vmem:[%s1 + $0x220] sm:$0xff]
    %v97 = vld [vmem:[%s1 + $0x228] sm:$0xff]
    %v98 = vld [vmem:[%s1 + $0x230] sm:$0xff]
    %v99 = vld [vmem:[%s1 + $0x238] sm:$0xff]
    %v100 = vld [vmem:[%s1 + $0x240] sm:$0xff]
    %v101 = vld [vmem:[%s1 + $0x248] sm:$0xff]
    %v102 = vld [vmem:[%s1 + $0x250] sm:$0xff]
    %v103 = vld [vmem:[%s1 + $0x258] sm:$0xff]
    %v104 = vld [vmem:[%s1 + $0x260] sm:$0xff]
    %v105 = vld [vmem:[%s1 + $0x268] sm:$0xff]
    %v106 = vld [vmem:[%s1 + $0x270] sm:$0xff]
    %v107 = vld [vmem:[%s1 + $0x278] sm:$0xff]
    %v108 = vld [vmem:[%s1 + $0x280] sm:$0xff]
    %v109 = vld [vmem:[%s1 + $0x288] sm:$0xff]
    %v110 = vld [vmem:[%s1 + $0x290] sm:$0xff]
    %v111 = vld [vmem:[%s1 + $0x298] sm:$0xff]
    %v112 = vld [vmem:[%s1 + $0x2a0] sm:$0xff]
    %v113 = vld [vmem:[%s1 + $0x2a8] sm:$0xff]
    %v114 = vld [vmem:[%s1 + $0x2b0] sm:$0xff]
    %v115 = vld [vmem:[%s1 + $0x2b8] sm:$0xff]
    %v116 = vld [vmem:[%s1 + $0x2c0] sm:$0xff]
    %v117 = vld [vmem:[%s1 + $0x2c8] sm:$0xff]
    %v118 = vld [vmem:[%s1 + $0x2d0] sm:$0xff]
    %v119 = vld [vmem:[%s1 + $0x2d8] sm:$0xff]
    %v120 = vld [vmem:[%s1 + $0x2e0] sm:$0xff]
    %v121 = vld [vmem:[%s1 + $0x2e8] sm:$0xff]
    %v122 = vld [vmem:[%s1 + $0x2f0] sm:$0xff]
    %v123 = vld [vmem:[%s1 + $0x2f8] sm:$0xff]
    %v124 = vld [vmem:[%s1 + $0x300] sm:$0xff]
    %v125 = vld [vmem:[%s1 + $0x308] sm:$0xff]
    %v126 = vld [vmem:[%s1 + $0x310] sm:$0xff]
    %v127 = vld [vmem:[%s1 + $0x318] sm:$0xff]
    %v128 = vld [vmem:[%s1 + $0x320] sm:$0xff]
    %v129 = vld [vmem:[%s1 + $0x328] sm:$0xff]
    %v130 = vld [vmem:[%s1 + $0x330] sm:$0xff]
    %v131 = vld [vmem:[%s1 + $0x338] sm:$0xff]
    %v132 = vld [vmem:[%s1 + $0x340] sm:$0xff]
    %v133 = vld [vmem:[%s1 + $0x348] sm:$0xff]
    %v134 = vld [vmem:[%s1 + $0x350] sm:$0xff]
    %v135 = vld [vmem:[%s1 + $0x358] sm:$0xff]
    %v136 = vld [vmem:[%s1 + $0x360] sm:$0xff]
    %v137 = vld [vmem:[%s1 + $0x368] sm:$0xff]
    %v138 = vld [vmem:[%s1 + $0x370] sm:$0xff]
    %v139 = vld [vmem:[%s1 + $0x378] sm:$0xff]
    %v140 = vld [vmem:[%s1 + $0x380] sm:$0xff]
    %v141 = vld [vmem:[%s1 + $0x388] sm:$0xff]
    %v142 = vld [vmem:[%s1 + $0x390] sm:$0xff]
    %v143 = vld [vmem:[%s1 + $0x398] sm:$0xff]
    %v144 = vld [vmem:[%s1 + $0x3a0] sm:$0xff]
    %v145 = vld [vmem:[%s1 + $0x3a8] sm:$0xff]
    %v146 = vld [vmem:[%s1 + $0x3b0] sm:$0xff]
    %v147 = vld [vmem:[%s1 + $0x3b8] sm:$0xff]
    %v148 = vld [vmem:[%s1 + $0x3c0] sm:$0xff]
    %v149 = vld [vmem:[%s1 + $0x3c8] sm:$0xff]
    %v150 = vld [vmem:[%s1 + $0x3d0] sm:$0xff]
    %v151 = vld [vmem:[%s1 + $0x3d8] sm:$0xff]
    %v152 = vld [vmem:[%s1 + $0x3e0] sm:$0xff]
    %v153 = vld [vmem:[%s1 + $0x3e8] sm:$0xff]
    %v154 = vld [vmem:[%s1 + $0x3f0] sm:$0xff]
    %v155 = vld [vmem:[%s1 + $0x3f8] sm:$0xff]
    %v156 = vld [vmem:[%s1 + $0x400] sm:$0xff]
    %v157 = vld [vmem:[%s1 + $0x408] sm:$0xff]
    %v158 = vld [vmem:[%s1 + $0x410] sm:$0xff]
    %v159 = vld [vmem:[%s1 + $0x418] sm:$0xff]
    %v160 = vld [vmem:[%s1 + $0x420] sm:$0xff]
    %v161 = vld [vmem:[%s1 + $0x428] sm:$0xff]
    %v162 = vld [vmem:[%s1 + $0x430] sm:$0xff]
    %v163 = vld [vmem:[%s1 + $0x438] sm:$0xff]
    %v164 = vld [vmem:[%s1 + $0x440] sm:$0xff]
    %v165 = vld [vmem:[%s1 + $0x448] sm:$0xff]
    %v166 = vld [vmem:[%s1 + $0x450] sm:$0xff]
    %v167 = vld [vmem:[%s1 + $0x458] sm:$0xff]
    %v168 = vld [vmem:[%s1 + $0x460] sm:$0xff]
    %v169 = vld [vmem:[%s1 + $0x468] sm:$0xff]
    %v170 = vld [vmem:[%s1 + $0x470] sm:$0xff]
    %v171 = vld [vmem:[%s1 + $0x478] sm:$0xff]
    %v172 = vld [vmem:[%s1 + $0x480] sm:$0xff]
    %v173 = vld [vmem:[%s1 + $0x488] sm:$0xff]
    %v174 = vld [vmem:[%s1 + $0x490] sm:$0xff]
    %v175 = vld [vmem:[%s1 + $0x498] sm:$0xff]
    %v176 = vld [vmem:[%s1 + $0x4a0] sm:$0xff]
    %v177 = vld [vmem:[%s1 + $0x4a8] sm:$0xff]
    %v178 = vld [vmem:[%s1 + $0x4b0] sm:$0xff]
    %v179 = vld [vmem:[%s1 + $0x4b8] sm:$0xff]
    %v180 = vld [vmem:[%s1 + $0x4c0] sm:$0xff]
    %v181 = vld [vmem:[%s1 + $0x4c8] sm:$0xff]
    %v182 = vld [vmem:[%s1 + $0x4d0] sm:$0xff]
    %v183 = vld [vmem:[%s1 + $0x4d8] sm:$0xff]
    %v184 = vld [vmem:[%s1 + $0x4e0] sm:$0xff]
    %v185 = vld [vmem:[%s1 + $0x4e8] sm:$0xff]
    %v186 = vld [vmem:[%s1 + $0x4f0] sm:$0xff]
    %v187 = vld [vmem:[%s1 + $0x4f8] sm:$0xff]
    %v188 = vld [vmem:[%s1 + $0x500] sm:$0xff]
    %v189 = vld [vmem:[%s1 + $0x508] sm:$0xff]
    %v190 = vld [vmem:[%s1 + $0x510] sm:$0xff]
    %v191 = vld [vmem:[%s1 + $0x518] sm:$0xff]
    %v192 = vld [vmem:[%s1 + $0x520] sm:$0xff]
    %v193 = vld [vmem:[%s1 + $0x528] sm:$0xff]
    %v194 = vld [vmem:[%s1 + $0x530] sm:$0xff]
    %v195 = vld [vmem:[%s1 + $0x538] sm:$0xff]
    %v196 = vld [vmem:[%s1 + $0x540] sm:$0xff]
    %v197 = vld [vmem:[%s1 + $0x548] sm:$0xff]
    %v198 = vld [vmem:[%s1 + $0x550] sm:$0xff]
    %v199 = vld [vmem:[%s1 + $0x558] sm:$0xff]
    %v200 = vld [vmem:[%s1 + $0x560] sm:$0xff]
    %v201 = vld [vmem:[%s1 + $0x568] sm:$0xff]
    %v202 = vld [vmem:[%s1 + $0x570] sm:$0xff]
    %v203 = vld [vmem:[%s1 + $0x578] sm:$0xff]
    %v204 = vld [vmem:[%s1 + $0x580] sm:$0xff]
    %v205 = vld [vmem:[%s1 + $0x588] sm:$0xff]
    %v206 = vld [vmem:[%s1 + $0x590] sm:$0xff]
    %v207 = vld [vmem:[%s1 + $0x598] sm:$0xff]
    %v208 = vld [vmem:[%s1 + $0x5a0] sm:$0xff]
    %v209 = vld [vmem:[%s1 + $0x5a8] sm:$0xff]
    %v210 = vld [vmem:[%s1 + $0x5b0] sm:$0xff]
    %v211 = vld [vmem:[%s1 + $0x5b8] sm:$0xff]
    %v212 = vld [vmem:[%s1 + $0x5c0] sm:$0xff]
    %v213 = vld [vmem:[%s1 + $0x5c8] sm:$0xff]
    %v214 = vld [vmem:[%s1 + $0x5d0] sm:$0xff]
    %v215 = vld [vmem:[%s1 + $0x5d8] sm:$0xff]
    %v216 = vld [vmem:[%s1 + $0x5e0] sm:$0xff]
    %v217 = vld [vmem:[%s1 + $0x5e8] sm:$0xff]
    %v218 = vld [vmem:[%s1 + $0x5f0] sm:$0xff]
    %v219 = vld [vmem:[%s1 + $0x5f8] sm:$0xff]
    %v220 = vld [vmem:[%s1 + $0x600] sm:$0xff]
    %v221 = vld [vmem:[%s1 + $0x608] sm:$0xff]
    %v222 = vld [vmem:[%s1 + $0x610] sm:$0xff]
    %v223 = vld [vmem:[%s1 + $0x618] sm:$0xff]
    %v224 = vld [vmem:[%s1 + $0x620] sm:$0xff]
    %v225 = vld [vmem:[%s1 + $0x628] sm:$0xff]
    %v226 = vld [vmem:[%s1 + $0x630] sm:$0xff]
    %v227 = vld [vmem:[%s1 + $0x638] sm:$0xff]
    %v228 = vld [vmem:[%s1 + $0x640] sm:$0xff]
    %v229 = vld [vmem:[%s1 + $0x648] sm:$0xff]
    %v230 = vld [vmem:[%s1 + $0x650] sm:$0xff]
    %v231 = vld [vmem:[%s1 + $0x658] sm:$0xff]
    %v232 = vld [vmem:[%s1 + $0x660] sm:$0xff]
    %v233 = vld [vmem:[%s1 + $0x668] sm:$0xff]
    %v234 = vld [vmem:[%s1 + $0x670] sm:$0xff]
    %v235 = vld [vmem:[%s1 + $0x678] sm:$0xff]
    %v236 = vld [vmem:[%s1 + $0x680] sm:$0xff]
    %v237 = vld [vmem:[%s1 + $0x688] sm:$0xff]
    %v238 = vld [vmem:[%s1 + $0x690] sm:$0xff]
    %v239 = vld [vmem:[%s1 + $0x698] sm:$0xff]
    %v240 = vld [vmem:[%s1 + $0x6a0] sm:$0xff]
    %v241 = vld [vmem:[%s1 + $0x6a8] sm:$0xff]
    %v242 = vld [vmem:[%s1 + $0x6b0] sm:$0xff]
    %v243 = vld [vmem:[%s1 + $0x6b8] sm:$0xff]
    %v244 = vld [vmem:[%s1 + $0x6c0] sm:$0xff]
    %v245 = vld [vmem:[%s1 + $0x6c8] sm:$0xff]
    %v246 = vld [vmem:[%s1 + $0x6d0] sm:$0xff]
    %v247 = vld [vmem:[%s1 + $0x6d8] sm:$0xff]
    %v248 = vld [vmem:[%s1 + $0x6e0] sm:$0xff]
    %v249 = vld [vmem:[%s1 + $0x6e8] sm:$0xff]
    %v250 = vld [vmem:[%s1 + $0x6f0] sm:$0xff]
    %v251 = vld [vmem:[%s1 + $0x6f8] sm:$0xff]
    %v252 = vld [vmem:[%s1 + $0x700] sm:$0xff]
    %v253 = vld [vmem:[%s1 + $0x708] sm:$0xff]
    %v254 = vld [vmem:[%s1 + $0x710] sm:$0xff]
    %v255 = vld [vmem:[%s1 + $0x718] sm:$0xff]
    %v256 = vld [vmem:[%s1 + $0x720] sm:$0xff]
    %v257 = vld [vmem:[%s1 + $0x728] sm:$0xff]
    %v258 = vld [vmem:[%s1 + $0x730] sm:$0xff]
    %v259 = vld [vmem:[%s1 + $0x738] sm:$0xff]
    %v260 = vld [vmem:[%s1 + $0x740] sm:$0xff]
    %v261 = vld [vmem:[%s1 + $0x748] sm:$0xff]
    %v262 = vld [vmem:[%s1 + $0x750] sm:$0xff]
    %v263 = vld [vmem:[%s1 + $0x758] sm:$0xff]
    %v264 = vld [vmem:[%s1 + $0x760] sm:$0xff]
    %v265 = vld [vmem:[%s1 + $0x768] sm:$0xff]
    %v266 = vld [vmem:[%s1 + $0x770] sm:$0xff]
    %v267 = vld [vmem:[%s1 + $0x778] sm:$0xff]
    %v268 = vld [vmem:[%s1 + $0x780] sm:$0xff]
    %v269 = vld [vmem:[%s1 + $0x788] sm:$0xff]
    %v270 = vld [vmem:[%s1 + $0x790] sm:$0xff]
    %v271 = vld [vmem:[%s1 + $0x798] sm:$0xff]
    %v272 = vld [vmem:[%s1 + $0x7a0] sm:$0xff]
    %v273 = vld [vmem:[%s1 + $0x7a8] sm:$0xff]
    %v274 = vld [vmem:[%s1 + $0x7b0] sm:$0xff]
    %v275 = vld [vmem:[%s1 + $0x7b8] sm:$0xff]
    %v276 = vld [vmem:[%s1 + $0x7c0] sm:$0xff]
    %v277 = vld [vmem:[%s1 + $0x7c8] sm:$0xff]
    %v278 = vld [vmem:[%s1 + $0x7d0] sm:$0xff]
    %v279 = vld [vmem:[%s1 + $0x7d8] sm:$0xff]
    %v280 = vld [vmem:[%s1 + $0x7e0] sm:$0xff]
    %v281 = vld [vmem:[%s1 + $0x7e8] sm:$0xff]
    %v282 = vld [vmem:[%s1 + $0x7f0] sm:$0xff]
    %v283 = vld [vmem:[%s1 + $0x7f8] sm:$0xff]
    %v284 = vld [vmem:[%s1 + $0x800] sm:$0xff]
    %v285 = vld [vmem:[%s1 + $0x808] sm:$0xff]
    %v286 = vld [vmem:[%s1 + $0x810] sm:$0xff]
    %v287 = vld [vmem:[%s1 + $0x818] sm:$0xff]
    %v288 = vld [vmem:[%s1 + $0x820] sm:$0xff]
    %v289 = vld [vmem:[%s1 + $0x828] sm:$0xff]
    %v290 = vld [vmem:[%s1 + $0x830] sm:$0xff]
    %v291 = vld [vmem:[%s1 + $0x838] sm:$0xff]
    %v292 = vld [vmem:[%s1 + $0x840] sm:$0xff]
    %v293 = vld [vmem:[%s1 + $0x848] sm:$0xff]
    %v294 = vld [vmem:[%s1 + $0x850] sm:$0xff]
    %v295 = vld [vmem:[%s1 + $0x858] sm:$0xff]
    %v296 = vld [vmem:[%s1 + $0x860] sm:$0xff]
    %v297 = vld [vmem:[%s1 + $0x868] sm:$0xff]
    %v298 = vld [vmem:[%s1 + $0x870] sm:$0xff]
    %v299 = vld [vmem:[%s1 + $0x878] sm:$0xff]
    %v300 = vld [vmem:[%s1 + $0x880] sm:$0xff]
    %v301 = vld [vmem:[%s1 + $0x888] sm:$0xff]
    %v302 = vld [vmem:[%s1 + $0x890] sm:$0xff]
    %v303 = vld [vmem:[%s1 + $0x898] sm:$0xff]
    %v304 = vld [vmem:[%s1 + $0x8a0] sm:$0xff]
    %v305 = vld [vmem:[%s1 + $0x8a8] sm:$0xff]
    %v306 = vld [vmem:[%s1 + $0x8b0] sm:$0xff]
    %v307 = vld [vmem:[%s1 + $0x8b8] sm:$0xff]
    %v308 = vld [vmem:[%s1 + $0x8c0] sm:$0xff]
    %v309 = vld [vmem:[%s1 + $0x8c8] sm:$0xff]
    %v310 = vld [vmem:[%s1 + $0x8d0] sm:$0xff]
    %v311 = vld [vmem:[%s1 + $0x8d8] sm:$0xff]
    %v312 = vld [vmem:[%s1 + $0x8e0] sm:$0xff]
    %v313 = vld [vmem:[%s1 + $0x8e8] sm:$0xff]
    %v314 = vld [vmem:[%s1 + $0x8f0] sm:$0xff]
    %v315 = vld [vmem:[%s1 + $0x8f8] sm:$0xff]
    %v316 = vld [vmem:[%s1 + $0x900] sm:$0xff]
    %v317 = vld [vmem:[%s1 + $0x908] sm:$0xff]
    %v318 = vld [vmem:[%s1 + $0x910] sm:$0xff]
    %v319 = vld [vmem:[%s1 + $0x918] sm:$0xff]
    %v320 = vld [vmem:[%s1 + $0x920] sm:$0xff]
    %v321 = vld [vmem:[%s1 + $0x928] sm:$0xff]
    %v322 = vld [vmem:[%s1 + $0x930] sm:$0xff]
    %v323 = vld [vmem:[%s1 + $0x938] sm:$0xff]
    %v324 = vld [vmem:[%s1 + $0x940] sm:$0xff]
    %v325 = vld [vmem:[%s1 + $0x948] sm:$0xff]
    %v326 = vld [vmem:[%s1 + $0x950] sm:$0xff]
    %v327 = vld [vmem:[%s1 + $0x958] sm:$0xff]
    %v328 = vld [vmem:[%s1 + $0x960] sm:$0xff]
    %v329 = vld [vmem:[%s1 + $0x968] sm:$0xff]
    %v330 = vld [vmem:[%s1 + $0x970] sm:$0xff]
    %v331 = vld [vmem:[%s1 + $0x978] sm:$0xff]
    %v332 = vld [vmem:[%s1 + $0x980] sm:$0xff]
    %v333 = vld [vmem:[%s1 + $0x988] sm:$0xff]
    %v334 = vld [vmem:[%s1 + $0x990] sm:$0xff]
    %v335 = vld [vmem:[%s1 + $0x998] sm:$0xff]
    %v336 = vld [vmem:[%s1 + $0x9a0] sm:$0xff]
    %v337 = vld [vmem:[%s1 + $0x9a8] sm:$0xff]
    %v338 = vld [vmem:[%s1 + $0x9b0] sm:$0xff]
    %v339 = vld [vmem:[%s1 + $0x9b8] sm:$0xff]
    %v340 = vld [vmem:[%s1 + $0x9c0] sm:$0xff]
    %v341 = vld [vmem:[%s1 + $0x9c8] sm:$0xff]
    %v342 = vld [vmem:[%s1 + $0x9d0] sm:$0xff]
    %v343 = vld [vmem:[%s1 + $0x9d8] sm:$0xff]
    %v344 = vld [vmem:[%s1 + $0x9e0] sm:$0xff]
    %v345 = vld [vmem:[%s1 + $0x9e8] sm:$0xff]
    %v346 = vld [vmem:[%s1 + $0x9f0] sm:$0xff]
    %v347 = vld [vmem:[%s1 + $0x9f8] sm:$0xff]
    %v348 = vld [vmem:[%s1 + $0xa00] sm:$0xff]
    %v349 = vld [vmem:[%s1 + $0xa08] sm:$0xff]
    %v350 = vld [vmem:[%s1 + $0xa10] sm:$0xff]
    %v351 = vld [vmem:[%s1 + $0xa18] sm:$0xff]
    %v352 = vld [vmem:[%s1 + $0xa20] sm:$0xff]
    %v353 = vld [vmem:[%s1 + $0xa28] sm:$0xff]
    %v354 = vld [vmem:[%s1 + $0xa30] sm:$0xff]
    %v355 = vld [vmem:[%s1 + $0xa38] sm:$0xff]
    %v356 = vld [vmem:[%s1 + $0xa40] sm:$0xff]
    %v357 = vld [vmem:[%s1 + $0xa48] sm:$0xff]
    %v358 = vld [vmem:[%s1 + $0xa50] sm:$0xff]
    %v359 = vld [vmem:[%s1 + $0xa58] sm:$0xff]
    %v360 = vld [vmem:[%s1 + $0xa60] sm:$0xff]
    %v361 = vld [vmem:[%s1 + $0xa68] sm:$0xff]
    %v362 = vld [vmem:[%s1 + $0xa70] sm:$0xff]
    %v363 = vld [vmem:[%s1 + $0xa78] sm:$0xff]
    %v364 = vld [vmem:[%s1 + $0xa80] sm:$0xff]
    %v365 = vld [vmem:[%s1 + $0xa88] sm:$0xff]
    %v366 = vld [vmem:[%s1 + $0xa90] sm:$0xff]
    %v367 = vld [vmem:[%s1 + $0xa98] sm:$0xff]
    %v368 = vld [vmem:[%s1 + $0xaa0] sm:$0xff]
    %v369 = vld [vmem:[%s1 + $0xaa8] sm:$0xff]
    %v370 = vld [vmem:[%s1 + $0xab0] sm:$0xff]
    %v371 = vld [vmem:[%s1 + $0xab8] sm:$0xff]
    %v372 = vld [vmem:[%s1 + $0xac0] sm:$0xff]
    %v373 = vld [vmem:[%s1 + $0xac8] sm:$0xff]
    %v374 = vld [vmem:[%s1 + $0xad0] sm:$0xff]
    %v375 = vld [vmem:[%s1 + $0xad8] sm:$0xff]
    %v376 = vld [vmem:[%s1 + $0xae0] sm:$0xff]
    %v377 = vld [vmem:[%s1 + $0xae8] sm:$0xff]
    %v378 = vld [vmem:[%s1 + $0xaf0] sm:$0xff]
    %v379 = vld [vmem:[%s1 + $0xaf8] sm:$0xff]
    %v380 = vld [vmem:[%s1 + $0xb00] sm:$0xff]
    %v381 = vld [vmem:[%s1 + $0xb08] sm:$0xff]
    %v382 = vld [vmem:[%s1 + $0xb10] sm:$0xff]
    %v383 = vld [vmem:[%s1 + $0xb18] sm:$0xff]
    %v384 = vld [vmem:[%s1 + $0xb20] sm:$0xff]
    %v385 = vld [vmem:[%s1 + $0xb28] sm:$0xff]
    %v386 = vld [vmem:[%s1 + $0xb30] sm:$0xff]
    %v387 = vld [vmem:[%s1 + $0xb38] sm:$0xff]
    %v388 = vld [vmem:[%s1 + $0xb40] sm:$0xff]
    %v389 = vld [vmem:[%s1 + $0xb48] sm:$0xff]
    %v390 = vld [vmem:[%s1 + $0xb50] sm:$0xff]
    %v391 = vld [vmem:[%s1 + $0xb58] sm:$0xff]
    %v392 = vld [vmem:[%s1 + $0xb60] sm:$0xff]
    %v393 = vld [vmem:[%s1 + $0xb68] sm:$0xff]
    %v394 = vld [vmem:[%s1 + $0xb70] sm:$0xff]
    %v395 = vld [vmem:[%s1 + $0xb78] sm:$0xff]
    %v396 = vld [vmem:[%s1 + $0xb80] sm:$0xff]
    %v397 = vld [vmem:[%s1 + $0xb88] sm:$0xff]
    %v398 = vld [vmem:[%s1 + $0xb90] sm:$0xff]
    %v399 = vld [vmem:[%s1 + $0xb98] sm:$0xff]
    %v400 = vld [vmem:[%s1 + $0xba0] sm:$0xff]
    %v401 = vld [vmem:[%s1 + $0xba8] sm:$0xff]
    %v402 = vld [vmem:[%s1 + $0xbb0] sm:$0xff]
    %v403 = vld [vmem:[%s1 + $0xbb8] sm:$0xff]
    %v404 = vld [vmem:[%s1 + $0xbc0] sm:$0xff]
    %v405 = vld [vmem:[%s1 + $0xbc8] sm:$0xff]
    %v406 = vld [vmem:[%s1 + $0xbd0] sm:$0xff]
    %v407 = vld [vmem:[%s1 + $0xbd8] sm:$0xff]
    %v408 = vld [vmem:[%s1 + $0xbe0] sm:$0xff]
    %v409 = vld [vmem:[%s1 + $0xbe8] sm:$0xff]
    %v410 = vld [vmem:[%s1 + $0xbf0] sm:$0xff]
    %v411 = vld [vmem:[%s1 + $0xbf8] sm:$0xff]
    %v412 = vld [vmem:[%s1 + $0xc00] sm:$0xff]
    %v413 = vld [vmem:[%s1 + $0xc08] sm:$0xff]
    %v414 = vld [vmem:[%s1 + $0xc10] sm:$0xff]
    %v415 = vld [vmem:[%s1 + $0xc18] sm:$0xff]
    %v416 = vld [vmem:[%s1 + $0xc20] sm:$0xff]
    %v417 = vld [vmem:[%s1 + $0xc28] sm:$0xff]
    %v418 = vld [vmem:[%s1 + $0xc30] sm:$0xff]
    %v419 = vld [vmem:[%s1 + $0xc38] sm:$0xff]
    %v420 = vld [vmem:[%s1 + $0xc40] sm:$0xff]
    %v421 = vld [vmem:[%s1 + $0xc48] sm:$0xff]
    %v422 = vld [vmem:[%s1 + $0xc50] sm:$0xff]
    %v423 = vld [vmem:[%s1 + $0xc58] sm:$0xff]
    %v424 = vld [vmem:[%s1 + $0xc60] sm:$0xff]
    %v425 = vld [vmem:[%s1 + $0xc68] sm:$0xff]
    %v426 = vld [vmem:[%s1 + $0xc70] sm:$0xff]
    %v427 = vld [vmem:[%s1 + $0xc78] sm:$0xff]
    %v428 = vld [vmem:[%s1 + $0xc80] sm:$0xff]
    %v429 = vld [vmem:[%s1 + $0xc88] sm:$0xff]
    %v430 = vld [vmem:[%s1 + $0xc90] sm:$0xff]
    %v431 = vld [vmem:[%s1 + $0xc98] sm:$0xff]
    %v432 = vld [vmem:[%s1 + $0xca0] sm:$0xff]
    %v433 = vld [vmem:[%s1 + $0xca8] sm:$0xff]
    %v434 = vld [vmem:[%s1 + $0xcb0] sm:$0xff]
    %v435 = vld [vmem:[%s1 + $0xcb8] sm:$0xff]
    %v436 = vld [vmem:[%s1 + $0xcc0] sm:$0xff]
    %v437 = vld [vmem:[%s1 + $0xcc8] sm:$0xff]
    %v438 = vld [vmem:[%s1 + $0xcd0] sm:$0xff]
    %v439 = vld [vmem:[%s1 + $0xcd8] sm:$0xff]
    %v440 = vld [vmem:[%s1 + $0xce0] sm:$0xff]
    %v441 = vld [vmem:[%s1 + $0xce8] sm:$0xff]
    %v442 = vld [vmem:[%s1 + $0xcf0] sm:$0xff]
    %v443 = vld [vmem:[%s1 + $0xcf8] sm:$0xff]
    %v444 = vld [vmem:[%s1 + $0xd00] sm:$0xff]
    %v445 = vld [vmem:[%s1 + $0xd08] sm:$0xff]
    %v446 = vld [vmem:[%s1 + $0xd10] sm:$0xff]
    %v447 = vld [vmem:[%s1 + $0xd18] sm:$0xff]
    %v448 = vld [vmem:[%s1 + $0xd20] sm:$0xff]
    %v449 = vld [vmem:[%s1 + $0xd28] sm:$0xff]
    %v450 = vld [vmem:[%s1 + $0xd30] sm:$0xff]
    %v451 = vld [vmem:[%s1 + $0xd38] sm:$0xff]
    %v452 = vld [vmem:[%s1 + $0xd40] sm:$0xff]
    %v453 = vld [vmem:[%s1 + $0xd48] sm:$0xff]
    %v454 = vld [vmem:[%s1 + $0xd50] sm:$0xff]
    %v455 = vld [vmem:[%s1 + $0xd58] sm:$0xff]
    %v456 = vld [vmem:[%s1 + $0xd60] sm:$0xff]
    %v457 = vld [vmem:[%s1 + $0xd68] sm:$0xff]
    %v458 = vld [vmem:[%s1 + $0xd70] sm:$0xff]
    %v459 = vld [vmem:[%s1 + $0xd78] sm:$0xff]
    %v460 = vld [vmem:[%s1 + $0xd80] sm:$0xff]
    %v461 = vld [vmem:[%s1 + $0xd88] sm:$0xff]
    %v462 = vld [vmem:[%s1 + $0xd90] sm:$0xff]
    %v463 = vld [vmem:[%s1 + $0xd98] sm:$0xff]
    %v464 = vld [vmem:[%s1 + $0xda0] sm:$0xff]
    %v465 = vld [vmem:[%s1 + $0xda8] sm:$0xff]
    %v466 = vld [vmem:[%s1 + $0xdb0] sm:$0xff]
    %v467 = vld [vmem:[%s1 + $0xdb8] sm:$0xff]
    %v468 = vld [vmem:[%s1 + $0xdc0] sm:$0xff]
    %v469 = vld [vmem:[%s1 + $0xdc8] sm:$0xff]
    %v470 = vld [vmem:[%s1 + $0xdd0] sm:$0xff]
    %v471 = vld [vmem:[%s1 + $0xdd8] sm:$0xff]
    %v472 = vld [vmem:[%s1 + $0xde0] sm:$0xff]
    %v473 = vld [vmem:[%s1 + $0xde8] sm:$0xff]
    %v474 = vld [vmem:[%s1 + $0xdf0] sm:$0xff]
    %v475 = vld [vmem:[%s1 + $0xdf8] sm:$0xff]
    %v476 = vld [vmem:[%s1 + $0xe00] sm:$0xff]
    %v477 = vld [vmem:[%s1 + $0xe08] sm:$0xff]
    %v478 = vld [vmem:[%s1 + $0xe10] sm:$0xff]
    %v479 = vld [vmem:[%s1 + $0xe18] sm:$0xff]
    %v480 = vld [vmem:[%s1 + $0xe20] sm:$0xff]
    %v481 = vld [vmem:[%s1 + $0xe28] sm:$0xff]
    %v482 = vld [vmem:[%s1 + $0xe30] sm:$0xff]
    %v483 = vld [vmem:[%s1 + $0xe38] sm:$0xff]
    %v484 = vld [vmem:[%s1 + $0xe40] sm:$0xff]
    %v485 = vld [vmem:[%s1 + $0xe48] sm:$0xff]
    %v486 = vld [vmem:[%s1 + $0xe50] sm:$0xff]
    %v487 = vld [vmem:[%s1 + $0xe58] sm:$0xff]
    %v488 = vld [vmem:[%s1 + $0xe60] sm:$0xff]
    %v489 = vld [vmem:[%s1 + $0xe68] sm:$0xff]
    %v490 = vld [vmem:[%s1 + $0xe70] sm:$0xff]
    %v491 = vld [vmem:[%s1 + $0xe78] sm:$0xff]
    %v492 = vld [vmem:[%s1 + $0xe80] sm:$0xff]
    %v493 = vld [vmem:[%s1 + $0xe88] sm:$0xff]
    %v494 = vld [vmem:[%s1 + $0xe90] sm:$0xff]
    %v495 = vld [vmem:[%s1 + $0xe98] sm:$0xff]
    %v496 = vld [vmem:[%s1 + $0xea0] sm:$0xff]
    %v497 = vld [vmem:[%s1 + $0xea8] sm:$0xff]
    %v498 = vld [vmem:[%s1 + $0xeb0] sm:$0xff]
    %v499 = vld [vmem:[%s1 + $0xeb8] sm:$0xff]
    %v500 = vld [vmem:[%s1 + $0xec0] sm:$0xff]
    %v501 = vld [vmem:[%s1 + $0xec8] sm:$0xff]
    %v502 = vld [vmem:[%s1 + $0xed0] sm:$0xff]
    %v503 = vld [vmem:[%s1 + $0xed8] sm:$0xff]
    %v504 = vld [vmem:[%s1 + $0xee0] sm:$0xff]
    %v505 = vld [vmem:[%s1 + $0xee8] sm:$0xff]
    %v506 = vld [vmem:[%s1 + $0xef0] sm:$0xff]
    %v507 = vld [vmem:[%s1 + $0xef8] sm:$0xff]
    %v508 = vld [vmem:[%s1 + $0xf00] sm:$0xff]
    %v509 = vld [vmem:[%s1 + $0xf08] sm:$0xff]
    %v510 = vld [vmem:[%s1 + $0xf10] sm:$0xff]
    %v511 = vld [vmem:[%s1 + $0xf18] sm:$0xff]
    %v512 = vld [vmem:[%s1 + $0xf20] sm:$0xff]
    %v513 = vld [vmem:[%s1 + $0xf28] sm:$0xff]
    %v514 = vld [vmem:[%s1 + $0xf30] sm:$0xff]
    %v515 = vld [vmem:[%s1 + $0xf38] sm:$0xff]
    %v516 = vld [vmem:[%s1 + $0xf40] sm:$0xff]
    %v517 = vld [vmem:[%s1 + $0xf48] sm:$0xff]
    %v518 = vld [vmem:[%s1 + $0xf50] sm:$0xff]
    %v519 = vld [vmem:[%s1 + $0xf58] sm:$0xff]
    %v520 = vld [vmem:[%s1 + $0xf60] sm:$0xff]
    %v521 = vld [vmem:[%s1 + $0xf68] sm:$0xff]
    %v522 = vld [vmem:[%s1 + $0xf70] sm:$0xff]
    %v523 = vld [vmem:[%s1 + $0xf78] sm:$0xff]
    %v524 = vld [vmem:[%s1 + $0xf80] sm:$0xff]
    %v525 = vld [vmem:[%s1 + $0xf88] sm:$0xff]
    %v526 = vld [vmem:[%s1 + $0xf90] sm:$0xff]
    %v527 = vld [vmem:[%s1 + $0xf98] sm:$0xff]
    %v528 = vld [vmem:[%s1 + $0xfa0] sm:$0xff]
    %v529 = vld [vmem:[%s1 + $0xfa8] sm:$0xff]
    %v530 = vld [vmem:[%s1 + $0xfb0] sm:$0xff]
    %v531 = vld [vmem:[%s1 + $0xfb8] sm:$0xff]
    %v532 = vld [vmem:[%s1 + $0xfc0] sm:$0xff]
    %v533 = vld [vmem:[%s1 + $0xfc8] sm:$0xff]
    %v534 = vld [vmem:[%s1 + $0xfd0] sm:$0xff]
    %v535 = vld [vmem:[%s1 + $0xfd8] sm:$0xff]
    %v536 = vld [vmem:[%s1 + $0xfe0] sm:$0xff]
    %v537 = vld [vmem:[%s1 + $0xfe8] sm:$0xff]
    %v538 = vld [vmem:[%s1 + $0xff0] sm:$0xff]
    %v539 = vld [vmem:[%s1 + $0xff8] sm:$0xff]
    %v540 = vld [vmem:[%s1 + $0x1000] sm:$0xff]
    %v541 = vld [vmem:[%s1 + $0x1008] sm:$0xff]
    %v542 = vld [vmem:[%s1 + $0x1010] sm:$0xff]
    %v543 = vld [vmem:[%s1 + $0x1018] sm:$0xff]
    %v544 = vld [vmem:[%s1 + $0x1020] sm:$0xff]
    %v545 = vld [vmem:[%s1 + $0x1028] sm:$0xff]
    %v546 = vld [vmem:[%s1 + $0x1030] sm:$0xff]
    %v547 = vld [vmem:[%s1 + $0x1038] sm:$0xff]
    %v548 = vld [vmem:[%s1 + $0x1040] sm:$0xff]
    %v549 = vld [vmem:[%s1 + $0x1048] sm:$0xff]
    %v550 = vld [vmem:[%s1 + $0x1050] sm:$0xff]
    %v551 = vld [vmem:[%s1 + $0x1058] sm:$0xff]
    %v552 = vld [vmem:[%s1 + $0x1060] sm:$0xff]
    %v553 = vld [vmem:[%s1 + $0x1068] sm:$0xff]
    %v554 = vld [vmem:[%s1 + $0x1070] sm:$0xff]
    %v555 = vld [vmem:[%s1 + $0x1078] sm:$0xff]
    %v556 = vld [vmem:[%s1 + $0x1080] sm:$0xff]
    %v557 = vld [vmem:[%s1 + $0x1088] sm:$0xff]
    %v558 = vld [vmem:[%s1 + $0x1090] sm:$0xff]
    %v559 = vld [vmem:[%s1 + $0x1098] sm:$0xff]
    %v560 = vld [vmem:[%s1 + $0x10a0] sm:$0xff]
    %v561 = vld [vmem:[%s1 + $0x10a8] sm:$0xff]
    %v562 = vld [vmem:[%s1 + $0x10b0] sm:$0xff]
    %v563 = vld [vmem:[%s1 + $0x10b8] sm:$0xff]
    %v564 = vld [vmem:[%s1 + $0x10c0] sm:$0xff]
    %v565 = vld [vmem:[%s1 + $0x10c8] sm:$0xff]
    %v566 = vld [vmem:[%s1 + $0x10d0] sm:$0xff]
    %v567 = vld [vmem:[%s1 + $0x10d8] sm:$0xff]
    %v568 = vld [vmem:[%s1 + $0x10e0] sm:$0xff]
    %v569 = vld [vmem:[%s1 + $0x10e8] sm:$0xff]
    %v570 = vld [vmem:[%s1 + $0x10f0] sm:$0xff]
    %v571 = vld [vmem:[%s1 + $0x10f8] sm:$0xff]
    %v572 = vld [vmem:[%s1 + $0x1100] sm:$0xff]
    %v573 = vld [vmem:[%s1 + $0x1108] sm:$0xff]
    %v574 = vld [vmem:[%s1 + $0x1110] sm:$0xff]
    %v575 = vld [vmem:[%s1 + $0x1118] sm:$0xff]
    %v576 = vld [vmem:[%s1 + $0x1120] sm:$0xff]
    %v577 = vld [vmem:[%s1 + $0x1128] sm:$0xff]
    %v578 = vld [vmem:[%s1 + $0x1130] sm:$0xff]
    %v579 = vld [vmem:[%s1 + $0x1138] sm:$0xff]
    %v580 = vld [vmem:[%s1 + $0x1140] sm:$0xff]
    %v581 = vld [vmem:[%s1 + $0x1148] sm:$0xff]
    %v582 = vld [vmem:[%s1 + $0x1150] sm:$0xff]
    %v583 = vld [vmem:[%s1 + $0x1158] sm:$0xff]
    %v584 = vld [vmem:[%s1 + $0x1160] sm:$0xff]
    %v585 = vld [vmem:[%s1 + $0x1168] sm:$0xff]
    %v586 = vld [vmem:[%s1 + $0x1170] sm:$0xff]
    %v587 = vld [vmem:[%s1 + $0x1178] sm:$0xff]
    %v588 = vld [vmem:[%s1 + $0x1180] sm:$0xff]
    %v589 = vld [vmem:[%s1 + $0x1188] sm:$0xff]
    %v590 = vld [vmem:[%s1 + $0x1190] sm:$0xff]
    %v591 = vld [vmem:[%s1 + $0x1198] sm:$0xff]
    %v592 = vld [vmem:[%s1 + $0x11a0] sm:$0xff]
    %v593 = vld [vmem:[%s1 + $0x11a8] sm:$0xff]
    %v594 = vld [vmem:[%s1 + $0x11b0] sm:$0xff]
    %v595 = vld [vmem:[%s1 + $0x11b8] sm:$0xff]
    %v596 = vld [vmem:[%s1 + $0x11c0] sm:$0xff]
    %v597 = vld [vmem:[%s1 + $0x11c8] sm:$0xff]
    %v598 = vld [vmem:[%s1 + $0x11d0] sm:$0xff]
    %v599 = vld [vmem:[%s1 + $0x11d8] sm:$0xff]
    %v600 = vld [vmem:[%s1 + $0x11e0] sm:$0xff]
    %v601 = vld [vmem:[%s1 + $0x11e8] sm:$0xff]
    %v602 = vld [vmem:[%s1 + $0x11f0] sm:$0xff]
    %v603 = vld [vmem:[%s1 + $0x11f8] sm:$0xff]
    %v604 = vld [vmem:[%s1 + $0x1200] sm:$0xff]
    %v605 = vld [vmem:[%s1 + $0x1208] sm:$0xff]
    %v606 = vld [vmem:[%s1 + $0x1210] sm:$0xff]
    %v607 = vld [vmem:[%s1 + $0x1218] sm:$0xff]
    %v608 = vld [vmem:[%s1 + $0x1220] sm:$0xff]
    %v609 = vld [vmem:[%s1 + $0x1228] sm:$0xff]
    %v610 = vld [vmem:[%s1 + $0x1230] sm:$0xff]
    %v611 = vld [vmem:[%s1 + $0x1238] sm:$0xff]
    %v612 = vld [vmem:[%s1 + $0x1240] sm:$0xff]
    %v613 = vld [vmem:[%s1 + $0x1248] sm:$0xff]
    %v614 = vld [vmem:[%s1 + $0x1250] sm:$0xff]
    %v615 = vld [vmem:[%s1 + $0x1258] sm:$0xff]
    %v616 = vld [vmem:[%s1 + $0x1260] sm:$0xff]
    %v617 = vld [vmem:[%s1 + $0x1268] sm:$0xff]
    %v618 = vld [vmem:[%s1 + $0x1270] sm:$0xff]
    %v619 = vld [vmem:[%s1 + $0x1278] sm:$0xff]
    %v620 = vld [vmem:[%s1 + $0x1280] sm:$0xff]
    %v621 = vld [vmem:[%s1 + $0x1288] sm:$0xff]
    %v622 = vld [vmem:[%s1 + $0x1290] sm:$0xff]
    %v623 = vld [vmem:[%s1 + $0x1298] sm:$0xff]
    %v624 = vld [vmem:[%s1 + $0x12a0] sm:$0xff]
    %v625 = vld [vmem:[%s1 + $0x12a8] sm:$0xff]
    %v626 = vld [vmem:[%s1 + $0x12b0] sm:$0xff]
    %v627 = vld [vmem:[%s1 + $0x12b8] sm:$0xff]
    %v628 = vld [vmem:[%s1 + $0x12c0] sm:$0xff]
    %v629 = vld [vmem:[%s1 + $0x12c8] sm:$0xff]
    %v630 = vld [vmem:[%s1 + $0x12d0] sm:$0xff]
    %v631 = vld [vmem:[%s1 + $0x12d8] sm:$0xff]
    %v632 = vld [vmem:[%s1 + $0x12e0] sm:$0xff]
    %v633 = vld [vmem:[%s1 + $0x12e8] sm:$0xff]
    %v634 = vld [vmem:[%s1 + $0x12f0] sm:$0xff]
    %v635 = vld [vmem:[%s1 + $0x12f8] sm:$0xff]
    %v636 = vld [vmem:[%s1 + $0x1300] sm:$0xff]
    %v637 = vld [vmem:[%s1 + $0x1308] sm:$0xff]
    %v638 = vld [vmem:[%s1 + $0x1310] sm:$0xff]
    %v639 = vld [vmem:[%s1 + $0x1318] sm:$0xff]
    %v640 = vld [vmem:[%s1 + $0x1320] sm:$0xff]
    %v641 = vld [vmem:[%s1 + $0x1328] sm:$0xff]
    %v642 = vld [vmem:[%s1 + $0x1330] sm:$0xff]
    %v643 = vld [vmem:[%s1 + $0x1338] sm:$0xff]
    %v644 = vld [vmem:[%s1 + $0x1340] sm:$0xff]
    %v645 = vld [vmem:[%s1 + $0x1348] sm:$0xff]
    %v646 = vld [vmem:[%s1 + $0x1350] sm:$0xff]
    %v647 = vld [vmem:[%s1 + $0x1358] sm:$0xff]
    %v648 = vld [vmem:[%s1 + $0x1360] sm:$0xff]
    %v649 = vld [vmem:[%s1 + $0x1368] sm:$0xff]
    %v650 = vld [vmem:[%s1 + $0x1370] sm:$0xff]
    %v651 = vld [vmem:[%s1 + $0x1378] sm:$0xff]
    %v652 = vld [vmem:[%s1 + $0x1380] sm:$0xff]
    %v653 = vld [vmem:[%s1 + $0x1388] sm:$0xff]
    %v654 = vld [vmem:[%s1 + $0x1390] sm:$0xff]
    %v655 = vld [vmem:[%s1 + $0x1398] sm:$0xff]
    %v656 = vld [vmem:[%s1 + $0x13a0] sm:$0xff]
    %v657 = vld [vmem:[%s1 + $0x13a8] sm:$0xff]
    %v658 = vld [vmem:[%s1 + $0x13b0] sm:$0xff]
    %v659 = vld [vmem:[%s1 + $0x13b8] sm:$0xff]
    %v660 = vld [vmem:[%s1 + $0x13c0] sm:$0xff]
    %v661 = vld [vmem:[%s1 + $0x13c8] sm:$0xff]
    %v662 = vld [vmem:[%s1 + $0x13d0] sm:$0xff]
    %v663 = vld [vmem:[%s1 + $0x13d8] sm:$0xff]
    %v664 = vld [vmem:[%s1 + $0x13e0] sm:$0xff]
    %v665 = vld [vmem:[%s1 + $0x13e8] sm:$0xff]
    %v666 = vld [vmem:[%s1 + $0x13f0] sm:$0xff]
    %v667 = vld [vmem:[%s1 + $0x13f8] sm:$0xff]
    %v668 = vld [vmem:[%s1 + $0x1400] sm:$0xff]
    %v669 = vld [vmem:[%s1 + $0x1408] sm:$0xff]
    %v670 = vld [vmem:[%s1 + $0x1410] sm:$0xff]
    %v671 = vld [vmem:[%s1 + $0x1418] sm:$0xff]
    %v672 = vld [vmem:[%s1 + $0x1420] sm:$0xff]
    %v673 = vld [vmem:[%s1 + $0x1428] sm:$0xff]
    %v674 = vld [vmem:[%s1 + $0x1430] sm:$0xff]
    %v675 = vld [vmem:[%s1 + $0x1438] sm:$0xff]
    %v676 = vld [vmem:[%s1 + $0x1440] sm:$0xff]
    %v677 = vld [vmem:[%s1 + $0x1448] sm:$0xff]
    %v678 = vld [vmem:[%s1 + $0x1450] sm:$0xff]
    %v679 = vld [vmem:[%s1 + $0x1458] sm:$0xff]
    %v680 = vld [vmem:[%s1 + $0x1460] sm:$0xff]
    %v681 = vld [vmem:[%s1 + $0x1468] sm:$0xff]
    %v682 = vld [vmem:[%s1 + $0x1470] sm:$0xff]
    %v683 = vld [vmem:[%s1 + $0x1478] sm:$0xff]
    %v684 = vld [vmem:[%s1 + $0x1480] sm:$0xff]
    %v685 = vld [vmem:[%s1 + $0x1488] sm:$0xff]
    %v686 = vld [vmem:[%s1 + $0x1490] sm:$0xff]
    %v687 = vld [vmem:[%s1 + $0x1498] sm:$0xff]
    %v688 = vld [vmem:[%s1 + $0x14a0] sm:$0xff]
    %v689 = vld [vmem:[%s1 + $0x14a8] sm:$0xff]
    %v690 = vld [vmem:[%s1 + $0x14b0] sm:$0xff]
    %v691 = vld [vmem:[%s1 + $0x14b8] sm:$0xff]
    %v692 = vld [vmem:[%s1 + $0x14c0] sm:$0xff]
    %v693 = vld [vmem:[%s1 + $0x14c8] sm:$0xff]
    %v694 = vld [vmem:[%s1 + $0x14d0] sm:$0xff]
    %v695 = vld [vmem:[%s1 + $0x14d8] sm:$0xff]
    %v696 = vld [vmem:[%s1 + $0x14e0] sm:$0xff]
    %v697 = vld [vmem:[%s1 + $0x14e8] sm:$0xff]
    %v698 = vld [vmem:[%s1 + $0x14f0] sm:$0xff]
    %v699 = vld [vmem:[%s1 + $0x14f8] sm:$0xff]
    %v700 = vld [vmem:[%s1 + $0x1500] sm:$0xff]
    %v701 = vld [vmem:[%s1 + $0x1508] sm:$0xff]
    %v702 = vld [vmem:[%s1 + $0x1510] sm:$0xff]
    %v703 = vld [vmem:[%s1 + $0x1518] sm:$0xff]
    %v704 = vld [vmem:[%s1 + $0x1520] sm:$0xff]
    %v705 = vld [vmem:[%s1 + $0x1528] sm:$0xff]
    %v706 = vld [vmem:[%s1 + $0x1530] sm:$0xff]
    %v707 = vld [vmem:[%s1 + $0x1538] sm:$0xff]
    %v708 = vld [vmem:[%s1 + $0x1540] sm:$0xff]
    %v709 = vld [vmem:[%s1 + $0x1548] sm:$0xff]
    %v710 = vld [vmem:[%s1 + $0x1550] sm:$0xff]
    %v711 = vld [vmem:[%s1 + $0x1558] sm:$0xff]
    %v712 = vld [vmem:[%s1 + $0x1560] sm:$0xff]
    %v713 = vld [vmem:[%s1 + $0x1568] sm:$0xff]
    %v714 = vld [vmem:[%s1 + $0x1570] sm:$0xff]
    %v715 = vld [vmem:[%s1 + $0x1578] sm:$0xff]
    %v716 = vld [vmem:[%s1 + $0x1580] sm:$0xff]
    %v717 = vld [vmem:[%s1 + $0x1588] sm:$0xff]
    %v718 = vld [vmem:[%s1 + $0x1590] sm:$0xff]
    %v719 = vld [vmem:[%s1 + $0x1598] sm:$0xff]
    %v720 = vld [vmem:[%s1 + $0x15a0] sm:$0xff]
    %v721 = vld [vmem:[%s1 + $0x15a8] sm:$0xff]
    %v722 = vld [vmem:[%s1 + $0x15b0] sm:$0xff]
    %v723 = vld [vmem:[%s1 + $0x15b8] sm:$0xff]
    %v724 = vld [vmem:[%s1 + $0x15c0] sm:$0xff]
    %v725 = vld [vmem:[%s1 + $0x15c8] sm:$0xff]
    %v726 = vld [vmem:[%s1 + $0x15d0] sm:$0xff]
    %v727 = vld [vmem:[%s1 + $0x15d8] sm:$0xff]
    %v728 = vld [vmem:[%s1 + $0x15e0] sm:$0xff]
    %v729 = vld [vmem:[%s1 + $0x15e8] sm:$0xff]
    %v730 = vld [vmem:[%s1 + $0x15f0] sm:$0xff]
    %v731 = vld [vmem:[%s1 + $0x15f8] sm:$0xff]
    %v732 = vld [vmem:[%s1 + $0x1600] sm:$0xff]
    %v733 = vld [vmem:[%s1 + $0x1608] sm:$0xff]
    %v734 = vld [vmem:[%s1 + $0x1610] sm:$0xff]
    %v735 = vld [vmem:[%s1 + $0x1618] sm:$0xff]
    %v736 = vld [vmem:[%s1 + $0x1620] sm:$0xff]
    %v737 = vld [vmem:[%s1 + $0x1628] sm:$0xff]
    %v738 = vld [vmem:[%s1 + $0x1630] sm:$0xff]
    %v739 = vld [vmem:[%s1 + $0x1638] sm:$0xff]
    %v740 = vld [vmem:[%s1 + $0x1640] sm:$0xff]
    %v741 = vld [vmem:[%s1 + $0x1648] sm:$0xff]
    %v742 = vld [vmem:[%s1 + $0x1650] sm:$0xff]
    %v743 = vld [vmem:[%s1 + $0x1658] sm:$0xff]
    %v744 = vld [vmem:[%s1 + $0x1660] sm:$0xff]
    %v745 = vld [vmem:[%s1 + $0x1668] sm:$0xff]
    %v746 = vld [vmem:[%s1 + $0x1670] sm:$0xff]
    %v747 = vld [vmem:[%s1 + $0x1678] sm:$0xff]
    %v748 = vld [vmem:[%s1 + $0x1680] sm:$0xff]
    %v749 = vld [vmem:[%s1 + $0x1688] sm:$0xff]
    %v750 = vld [vmem:[%s1 + $0x1690] sm:$0xff]
    %v751 = vld [vmem:[%s1 + $0x1698] sm:$0xff]
    %v752 = vld [vmem:[%s1 + $0x16a0] sm:$0xff]
    %v753 = vld [vmem:[%s1 + $0x16a8] sm:$0xff]
    %v754 = vld [vmem:[%s1 + $0x16b0] sm:$0xff]
    %v755 = vld [vmem:[%s1 + $0x16b8] sm:$0xff]
    %v756 = vld [vmem:[%s1 + $0x16c0] sm:$0xff]
    %v757 = vld [vmem:[%s1 + $0x16c8] sm:$0xff]
    %v758 = vld [vmem:[%s1 + $0x16d0] sm:$0xff]
    %v759 = vld [vmem:[%s1 + $0x16d8] sm:$0xff]
    %v760 = vld [vmem:[%s1 + $0x16e0] sm:$0xff]
    %v761 = vld [vmem:[%s1 + $0x16e8] sm:$0xff]
    %v762 = vld [vmem:[%s1 + $0x16f0] sm:$0xff]
    %v763 = vld [vmem:[%s1 + $0x16f8] sm:$0xff]
    %v764 = vld [vmem:[%s1 + $0x1700] sm:$0xff]
    %v765 = vld [vmem:[%s1 + $0x1708] sm:$0xff]
    %v766 = vld [vmem:[%s1 + $0x1710] sm:$0xff]
    %v767 = vld [vmem:[%s1 + $0x1718] sm:$0xff]
    %v768 = vld [vmem:[%s1 + $0x1720] sm:$0xff]
    %v769 = vld [vmem:[%s1 + $0x1728] sm:$0xff]
    %v770 = vld [vmem:[%s1 + $0x1730] sm:$0xff]
    %v771 = vld [vmem:[%s1 + $0x1738] sm:$0xff]
    %v772 = vld [vmem:[%s1 + $0x1740] sm:$0xff]
    %v773 = vld [vmem:[%s1 + $0x1748] sm:$0xff]
    %v774 = vld [vmem:[%s1 + $0x1750] sm:$0xff]
    %v775 = vld [vmem:[%s1 + $0x1758] sm:$0xff]
    %v776 = vld [vmem:[%s1 + $0x1760] sm:$0xff]
    %v777 = vld [vmem:[%s1 + $0x1768] sm:$0xff]
    %v778 = vld [vmem:[%s1 + $0x1770] sm:$0xff]
    %v779 = vld [vmem:[%s1 + $0x1778] sm:$0xff]
    %v780 = vld [vmem:[%s1 + $0x1780] sm:$0xff]
    %v781 = vld [vmem:[%s1 + $0x1788] sm:$0xff]
    %v782 = vld [vmem:[%s1 + $0x1790] sm:$0xff]
    %v783 = vld [vmem:[%s1 + $0x1798] sm:$0xff]
    %v784 = vld [vmem:[%s1 + $0x17a0] sm:$0xff]
    %v785 = vld [vmem:[%s1 + $0x17a8] sm:$0xff]
    %v786 = vld [vmem:[%s1 + $0x17b0] sm:$0xff]
    %v787 = vld [vmem:[%s1 + $0x17b8] sm:$0xff]
    %v788 = vld [vmem:[%s1 + $0x17c0] sm:$0xff]
    %v789 = vld [vmem:[%s1 + $0x17c8] sm:$0xff]
    %v790 = vld [vmem:[%s1 + $0x17d0] sm:$0xff]
    %v791 = vld [vmem:[%s1 + $0x17d8] sm:$0xff]
    %v792 = vld [vmem:[%s1 + $0x17e0] sm:$0xff]
    %v793 = vld [vmem:[%s1 + $0x17e8] sm:$0xff]
    %v794 = vld [vmem:[%s1 + $0x17f0] sm:$0xff]
    %v795 = vld [vmem:[%s1 + $0x17f8] sm:$0xff]
    %v796 = vld [vmem:[%s1 + $0x1800] sm:$0xff]
    %v797 = vld [vmem:[%s1 + $0x1808] sm:$0xff]
    %v798 = vld [vmem:[%s1 + $0x1810] sm:$0xff]
    %v799 = vld [vmem:[%s1 + $0x1818] sm:$0xff]
    %v800 = vld [vmem:[%s1 + $0x1820] sm:$0xff]
    %v801 = vld [vmem:[%s1 + $0x1828] sm:$0xff]
    %v802 = vld [vmem:[%s1 + $0x1830] sm:$0xff]
    %v803 = vld [vmem:[%s1 + $0x1838] sm:$0xff]
    %v804 = vld [vmem:[%s1 + $0x1840] sm:$0xff]
    %v805 = vld [vmem:[%s1 + $0x1848] sm:$0xff]
    %v806 = vld [vmem:[%s1 + $0x1850] sm:$0xff]
    %v807 = vld [vmem:[%s1 + $0x1858] sm:$0xff]
    %v808 = vld [vmem:[%s1 + $0x1860] sm:$0xff]
    %v809 = vld [vmem:[%s1 + $0x1868] sm:$0xff]
    %v810 = vld [vmem:[%s1 + $0x1870] sm:$0xff]
    %v811 = vld [vmem:[%s1 + $0x1878] sm:$0xff]
    %v812 = vld [vmem:[%s1 + $0x1880] sm:$0xff]
    %v813 = vld [vmem:[%s1 + $0x1888] sm:$0xff]
    %v814 = vld [vmem:[%s1 + $0x1890] sm:$0xff]
    %v815 = vld [vmem:[%s1 + $0x1898] sm:$0xff]
    %v816 = vld [vmem:[%s1 + $0x18a0] sm:$0xff]
    %v817 = vld [vmem:[%s1 + $0x18a8] sm:$0xff]
    %v818 = vld [vmem:[%s1 + $0x18b0] sm:$0xff]
    %v819 = vld [vmem:[%s1 + $0x18b8] sm:$0xff]
    %v820 = vld [vmem:[%s1 + $0x18c0] sm:$0xff]
    %v821 = vld [vmem:[%s1 + $0x18c8] sm:$0xff]
    %v822 = vld [vmem:[%s1 + $0x18d0] sm:$0xff]
    %v823 = vld [vmem:[%s1 + $0x18d8] sm:$0xff]
    %v824 = vld [vmem:[%s1 + $0x18e0] sm:$0xff]
    %v825 = vld [vmem:[%s1 + $0x18e8] sm:$0xff]
    %v826 = vld [vmem:[%s1 + $0x18f0] sm:$0xff]
    %v827 = vld [vmem:[%s1 + $0x18f8] sm:$0xff]
    %v828 = vld [vmem:[%s1 + $0x1900] sm:$0xff]
    %v829 = vld [vmem:[%s1 + $0x1908] sm:$0xff]
    %v830 = vld [vmem:[%s1 + $0x1910] sm:$0xff]
    %v831 = vld [vmem:[%s1 + $0x1918] sm:$0xff]
    %v832 = vld [vmem:[%s1 + $0x1920] sm:$0xff]
    %v833 = vld [vmem:[%s1 + $0x1928] sm:$0xff]
    %v834 = vld [vmem:[%s1 + $0x1930] sm:$0xff]
    %v835 = vld [vmem:[%s1 + $0x1938] sm:$0xff]
    %v836 = vld [vmem:[%s1 + $0x1940] sm:$0xff]
    %v837 = vld [vmem:[%s1 + $0x1948] sm:$0xff]
    %v838 = vld [vmem:[%s1 + $0x1950] sm:$0xff]
    %v839 = vld [vmem:[%s1 + $0x1958] sm:$0xff]
    %v840 = vld [vmem:[%s1 + $0x1960] sm:$0xff]
    %v841 = vld [vmem:[%s1 + $0x1968] sm:$0xff]
    %v842 = vld [vmem:[%s1 + $0x1970] sm:$0xff]
    %v843 = vld [vmem:[%s1 + $0x1978] sm:$0xff]
    %v844 = vld [vmem:[%s1 + $0x1980] sm:$0xff]
    %v845 = vld [vmem:[%s1 + $0x1988] sm:$0xff]
    %v846 = vld [vmem:[%s1 + $0x1990] sm:$0xff]
    %v847 = vld [vmem:[%s1 + $0x1998] sm:$0xff]
    %v848 = vld [vmem:[%s1 + $0x19a0] sm:$0xff]
    %v849 = vld [vmem:[%s1 + $0x19a8] sm:$0xff]
    %v850 = vld [vmem:[%s1 + $0x19b0] sm:$0xff]
    %v851 = vld [vmem:[%s1 + $0x19b8] sm:$0xff]
    %v852 = vld [vmem:[%s1 + $0x19c0] sm:$0xff]
    %v853 = vld [vmem:[%s1 + $0x19c8] sm:$0xff]
    %v854 = vld [vmem:[%s1 + $0x19d0] sm:$0xff]
    %v855 = vld [vmem:[%s1 + $0x19d8] sm:$0xff]
    %v856 = vld [vmem:[%s1 + $0x19e0] sm:$0xff]
    %v857 = vld [vmem:[%s1 + $0x19e8] sm:$0xff]
    %v858 = vld [vmem:[%s1 + $0x19f0] sm:$0xff]
    %v859 = vld [vmem:[%s1 + $0x19f8] sm:$0xff]
    %v860 = vld [vmem:[%s1 + $0x1a00] sm:$0xff]
    %v861 = vld [vmem:[%s1 + $0x1a08] sm:$0xff]
    %v862 = vld [vmem:[%s1 + $0x1a10] sm:$0xff]
    %v863 = vld [vmem:[%s1 + $0x1a18] sm:$0xff]
    %v864 = vld [vmem:[%s1 + $0x1a20] sm:$0xff]
    %v865 = vld [vmem:[%s1 + $0x1a28] sm:$0xff]
    %v866 = vld [vmem:[%s1 + $0x1a30] sm:$0xff]
    %v867 = vld [vmem:[%s1 + $0x1a38] sm:$0xff]
    %v868 = vld [vmem:[%s1 + $0x1a40] sm:$0xff]
    %v869 = vld [vmem:[%s1 + $0x1a48] sm:$0xff]
    %v870 = vld [vmem:[%s1 + $0x1a50] sm:$0xff]
    %v871 = vld [vmem:[%s1 + $0x1a58] sm:$0xff]
    %v872 = vld [vmem:[%s1 + $0x1a60] sm:$0xff]
    %v873 = vld [vmem:[%s1 + $0x1a68] sm:$0xff]
    %v874 = vld [vmem:[%s1 + $0x1a70] sm:$0xff]
    %v875 = vld [vmem:[%s1 + $0x1a78] sm:$0xff]
    %v876 = vld [vmem:[%s1 + $0x1a80] sm:$0xff]
    %v877 = vld [vmem:[%s1 + $0x1a88] sm:$0xff]
    %v878 = vld [vmem:[%s1 + $0x1a90] sm:$0xff]
    %v879 = vld [vmem:[%s1 + $0x1a98] sm:$0xff]
    %v880 = vld [vmem:[%s1 + $0x1aa0] sm:$0xff]
    %v881 = vld [vmem:[%s1 + $0x1aa8] sm:$0xff]
    %v882 = vld [vmem:[%s1 + $0x1ab0] sm:$0xff]
    %v883 = vld [vmem:[%s1 + $0x1ab8] sm:$0xff]
    %v884 = vld [vmem:[%s1 + $0x1ac0] sm:$0xff]
    %v885 = vld [vmem:[%s1 + $0x1ac8] sm:$0xff]
    %v886 = vld [vmem:[%s1 + $0x1ad0] sm:$0xff]
    %v887 = vld [vmem:[%s1 + $0x1ad8] sm:$0xff]
    %v888 = vld [vmem:[%s1 + $0x1ae0] sm:$0xff]
    %v889 = vld [vmem:[%s1 + $0x1ae8] sm:$0xff]
    %v890 = vld [vmem:[%s1 + $0x1af0] sm:$0xff]
    %v891 = vld [vmem:[%s1 + $0x1af8] sm:$0xff]
    %v892 = vld [vmem:[%s1 + $0x1b00] sm:$0xff]
    %v893 = vld [vmem:[%s1 + $0x1b08] sm:$0xff]
    %v894 = vld [vmem:[%s1 + $0x1b10] sm:$0xff]
    %v895 = vld [vmem:[%s1 + $0x1b18] sm:$0xff]
    %v896 = vld [vmem:[%s1 + $0x1b20] sm:$0xff]
    %v897 = vld [vmem:[%s1 + $0x1b28] sm:$0xff]
    %v898 = vld [vmem:[%s1 + $0x1b30] sm:$0xff]
    %v899 = vld [vmem:[%s1 + $0x1b38] sm:$0xff]
    %v900 = vld [vmem:[%s1 + $0x1b40] sm:$0xff]
    %v901 = vld [vmem:[%s1 + $0x1b48] sm:$0xff]
    %v902 = vld [vmem:[%s1 + $0x1b50] sm:$0xff]
    %v903 = vld [vmem:[%s1 + $0x1b58] sm:$0xff]
    %v904 = vld [vmem:[%s1 + $0x1b60] sm:$0xff]
    %v905 = vld [vmem:[%s1 + $0x1b68] sm:$0xff]
    %v906 = vld [vmem:[%s1 + $0x1b70] sm:$0xff]
    %v907 = vld [vmem:[%s1 + $0x1b78] sm:$0xff]
    %v908 = vld [vmem:[%s1 + $0x1b80] sm:$0xff]
    %v909 = vld [vmem:[%s1 + $0x1b88] sm:$0xff]
    %v910 = vld [vmem:[%s1 + $0x1b90] sm:$0xff]
    %v911 = vld [vmem:[%s1 + $0x1b98] sm:$0xff]
    %v912 = vld [vmem:[%s1 + $0x1ba0] sm:$0xff]
    %v913 = vld [vmem:[%s1 + $0x1ba8] sm:$0xff]
    %v914 = vld [vmem:[%s1 + $0x1bb0] sm:$0xff]
    %v915 = vld [vmem:[%s1 + $0x1bb8] sm:$0xff]
    %v916 = vld [vmem:[%s1 + $0x1bc0] sm:$0xff]
    %v917 = vld [vmem:[%s1 + $0x1bc8] sm:$0xff]
    %v918 = vld [vmem:[%s1 + $0x1bd0] sm:$0xff]
    %v919 = vld [vmem:[%s1 + $0x1bd8] sm:$0xff]
    %v920 = vld [vmem:[%s1 + $0x1be0] sm:$0xff]
    %v921 = vld [vmem:[%s1 + $0x1be8] sm:$0xff]
    %v922 = vld [vmem:[%s1 + $0x1bf0] sm:$0xff]
    %v923 = vld [vmem:[%s1 + $0x1bf8] sm:$0xff]
    %v924 = vld [vmem:[%s1 + $0x1c00] sm:$0xff]
    %v925 = vld [vmem:[%s1 + $0x1c08] sm:$0xff]
    %v926 = vld [vmem:[%s1 + $0x1c10] sm:$0xff]
    %v927 = vld [vmem:[%s1 + $0x1c18] sm:$0xff]
    %v928 = vld [vmem:[%s1 + $0x1c20] sm:$0xff]
    %v929 = vld [vmem:[%s1 + $0x1c28] sm:$0xff]
    %v930 = vld [vmem:[%s1 + $0x1c30] sm:$0xff]
    %v931 = vld [vmem:[%s1 + $0x1c38] sm:$0xff]
    %v932 = vld [vmem:[%s1 + $0x1c40] sm:$0xff]
    %v933 = vld [vmem:[%s1 + $0x1c48] sm:$0xff]
    %v934 = vld [vmem:[%s1 + $0x1c50] sm:$0xff]
    %v935 = vld [vmem:[%s1 + $0x1c58] sm:$0xff]
    %v936 = vld [vmem:[%s1 + $0x1c60] sm:$0xff]
    %v937 = vld [vmem:[%s1 + $0x1c68] sm:$0xff]
    %v938 = vld [vmem:[%s1 + $0x1c70] sm:$0xff]
    %v939 = vld [vmem:[%s1 + $0x1c78] sm:$0xff]
    %v940 = vld [vmem:[%s1 + $0x1c80] sm:$0xff]
    %v941 = vld [vmem:[%s1 + $0x1c88] sm:$0xff]
    %v942 = vld [vmem:[%s1 + $0x1c90] sm:$0xff]
    %v943 = vld [vmem:[%s1 + $0x1c98] sm:$0xff]
    %v944 = vld [vmem:[%s1 + $0x1ca0] sm:$0xff]
    %v945 = vld [vmem:[%s1 + $0x1ca8] sm:$0xff]
    %v946 = vld [vmem:[%s1 + $0x1cb0] sm:$0xff]
    %v947 = vld [vmem:[%s1 + $0x1cb8] sm:$0xff]
    %v948 = vld [vmem:[%s1 + $0x1cc0] sm:$0xff]
    %v949 = vld [vmem:[%s1 + $0x1cc8] sm:$0xff]
    %v950 = vld [vmem:[%s1 + $0x1cd0] sm:$0xff]
    %v951 = vld [vmem:[%s1 + $0x1cd8] sm:$0xff]
    %v952 = vld [vmem:[%s1 + $0x1ce0] sm:$0xff]
    %v953 = vld [vmem:[%s1 + $0x1ce8] sm:$0xff]
    %v954 = vld [vmem:[%s1 + $0x1cf0] sm:$0xff]
    %v955 = vld [vmem:[%s1 + $0x1cf8] sm:$0xff]
    %v956 = vld [vmem:[%s1 + $0x1d00] sm:$0xff]
    %v957 = vld [vmem:[%s1 + $0x1d08] sm:$0xff]
    %v958 = vld [vmem:[%s1 + $0x1d10] sm:$0xff]
    %v959 = vld [vmem:[%s1 + $0x1d18] sm:$0xff]
    %v960 = vld [vmem:[%s1 + $0x1d20] sm:$0xff]
    %v961 = vld [vmem:[%s1 + $0x1d28] sm:$0xff]
    %v962 = vld [vmem:[%s1 + $0x1d30] sm:$0xff]
    %v963 = vld [vmem:[%s1 + $0x1d38] sm:$0xff]
    %v964 = vld [vmem:[%s1 + $0x1d40] sm:$0xff]
    %v965 = vld [vmem:[%s1 + $0x1d48] sm:$0xff]
    %v966 = vld [vmem:[%s1 + $0x1d50] sm:$0xff]
    %v967 = vld [vmem:[%s1 + $0x1d58] sm:$0xff]
    %v968 = vld [vmem:[%s1 + $0x1d60] sm:$0xff]
    %v969 = vld [vmem:[%s1 + $0x1d68] sm:$0xff]
    %v970 = vld [vmem:[%s1 + $0x1d70] sm:$0xff]
    %v971 = vld [vmem:[%s1 + $0x1d78] sm:$0xff]
    %v972 = vld [vmem:[%s1 + $0x1d80] sm:$0xff]
    %v973 = vld [vmem:[%s1 + $0x1d88] sm:$0xff]
    %v974 = vld [vmem:[%s1 + $0x1d90] sm:$0xff]
    %v975 = vld [vmem:[%s1 + $0x1d98] sm:$0xff]
    %v976 = vld [vmem:[%s1 + $0x1da0] sm:$0xff]
    %v977 = vld [vmem:[%s1 + $0x1da8] sm:$0xff]
    %v978 = vld [vmem:[%s1 + $0x1db0] sm:$0xff]
    %v979 = vld [vmem:[%s1 + $0x1db8] sm:$0xff]
    %v980 = vld [vmem:[%s1 + $0x1dc0] sm:$0xff]
    %v981 = vld [vmem:[%s1 + $0x1dc8] sm:$0xff]
    %v982 = vld [vmem:[%s1 + $0x1dd0] sm:$0xff]
    %v983 = vld [vmem:[%s1 + $0x1dd8] sm:$0xff]
    %v984 = vld [vmem:[%s1 + $0x1de0] sm:$0xff]
    %v985 = vld [vmem:[%s1 + $0x1de8] sm:$0xff]
    %v986 = vld [vmem:[%s1 + $0x1df0] sm:$0xff]
    %v987 = vld [vmem:[%s1 + $0x1df8] sm:$0xff]
    %v988 = vld [vmem:[%s1 + $0x1e00] sm:$0xff]
    %v989 = vld [vmem:[%s1 + $0x1e08] sm:$0xff]
    %v990 = vld [vmem:[%s1 + $0x1e10] sm:$0xff]
    %v991 = vld [vmem:[%s1 + $0x1e18] sm:$0xff]
    %v992 = vld [vmem:[%s1 + $0x1e20] sm:$0xff]
    %v993 = vld [vmem:[%s1 + $0x1e28] sm:$0xff]
    %v994 = vld [vmem:[%s1 + $0x1e30] sm:$0xff]
    %v995 = vld [vmem:[%s1 + $0x1e38] sm:$0xff]
    %v996 = vld [vmem:[%s1 + $0x1e40] sm:$0xff]
    %v997 = vld [vmem:[%s1 + $0x1e48] sm:$0xff]
    %v998 = vld [vmem:[%s1 + $0x1e50] sm:$0xff]
    %v999 = vld [vmem:[%s1 + $0x1e58] sm:$0xff]
    %v1000 = vld [vmem:[%s1 + $0x1e60] sm:$0xff]
    %v1001 = vld [vmem:[%s1 + $0x1e68] sm:$0xff]
    %v1002 = vld [vmem:[%s1 + $0x1e70] sm:$0xff]
    %v1003 = vld [vmem:[%s1 + $0x1e78] sm:$0xff]
    %v1004 = vld [vmem:[%s1 + $0x1e80] sm:$0xff]
    %v1005 = vld [vmem:[%s1 + $0x1e88] sm:$0xff]
    %v1006 = vld [vmem:[%s1 + $0x1e90] sm:$0xff]
    %v1007 = vld [vmem:[%s1 + $0x1e98] sm:$0xff]
    %v1008 = vld [vmem:[%s1 + $0x1ea0] sm:$0xff]
    %v1009 = vld [vmem:[%s1 + $0x1ea8] sm:$0xff]
    %v1010 = vld [vmem:[%s1 + $0x1eb0] sm:$0xff]
    %v1011 = vld [vmem:[%s1 + $0x1eb8] sm:$0xff]
    %v1012 = vld [vmem:[%s1 + $0x1ec0] sm:$0xff]
    %v1013 = vld [vmem:[%s1 + $0x1ec8] sm:$0xff]
    %v1014 = vld [vmem:[%s1 + $0x1ed0] sm:$0xff]
    %v1015 = vld [vmem:[%s1 + $0x1ed8] sm:$0xff]
    %v1016 = vld [vmem:[%s1 + $0x1ee0] sm:$0xff]
    %v1017 = vld [vmem:[%s1 + $0x1ee8] sm:$0xff]
    %v1018 = vld [vmem:[%s1 + $0x1ef0] sm:$0xff]
    %v1019 = vld [vmem:[%s1 + $0x1ef8] sm:$0xff]
    %v1020 = vld [vmem:[%s1 + $0x1f00] sm:$0xff]
    %v1021 = vld [vmem:[%s1 + $0x1f08] sm:$0xff]
    %v1022 = vld [vmem:[%s1 + $0x1f10] sm:$0xff]
    %v1023 = vld [vmem:[%s1 + $0x1f18] sm:$0xff]
    %v1024 = vld [vmem:[%s1 + $0x1f20] sm:$0xff]
    %v1025 = vld [vmem:[%s1 + $0x1f28] sm:$0xff]
    %v1026 = vld [vmem:[%s1 + $0x1f30] sm:$0xff]
    %v1027 = vld [vmem:[%s1 + $0x1f38] sm:$0xff]
    %v1028 = vld [vmem:[%s1 + $0x1f40] sm:$0xff]
    %v1029 = vld [vmem:[%s1 + $0x1f48] sm:$0xff]
    %v1030 = vld [vmem:[%s1 + $0x1f50] sm:$0xff]
    %v1031 = vld [vmem:[%s1 + $0x1f58] sm:$0xff]
    %v1032 = vld [vmem:[%s1 + $0x1f60] sm:$0xff]
    %v1033 = vld [vmem:[%s1 + $0x1f68] sm:$0xff]
    %v1034 = vld [vmem:[%s1 + $0x1f70] sm:$0xff]
    %v1035 = vld [vmem:[%s1 + $0x1f78] sm:$0xff]
    %v1036 = vld [vmem:[%s1 + $0x1f80] sm:$0xff]
    %v1037 = vld [vmem:[%s1 + $0x1f88] sm:$0xff]
    %v1038 = vld [vmem:[%s1 + $0x1f90] sm:$0xff]
    %v1039 = vld [vmem:[%s1 + $0x1f98] sm:$0xff]
    %v1040 = vld [vmem:[%s1 + $0x1fa0] sm:$0xff]
    %v1041 = vld [vmem:[%s1 + $0x1fa8] sm:$0xff]
    %v1042 = vld [vmem:[%s1 + $0x1fb0] sm:$0xff]
    %v1043 = vld [vmem:[%s1 + $0x1fb8] sm:$0xff]
    %v1044 = vld [vmem:[%s1 + $0x1fc0] sm:$0xff]
    %v1045 = vld [vmem:[%s1 + $0x1fc8] sm:$0xff]
    %v1046 = vld [vmem:[%s1 + $0x1fd0] sm:$0xff]
    %v1047 = vld [vmem:[%s1 + $0x1fd8] sm:$0xff]
    %v1048 = vld [vmem:[%s1 + $0x1fe0] sm:$0xff]
    %v1049 = vld [vmem:[%s1 + $0x1fe8] sm:$0xff]
    %v1050 = vld [vmem:[%s1 + $0x1ff0] sm:$0xff]
    %v1051 = vld [vmem:[%s1 + $0x1ff8] sm:$0xff]
    %v1052 = vld [vmem:[%s1 + $0x2000] sm:$0xff]
    %v1053 = vld [vmem:[%s1 + $0x2008] sm:$0xff]
    %v1054 = vld [vmem:[%s1 + $0x2010] sm:$0xff]
    %v1055 = vld [vmem:[%s1 + $0x2018] sm:$0xff]
    %v1056 = vld [vmem:[%s1 + $0x2020] sm:$0xff]
    %v1057 = vld [vmem:[%s1 + $0x2028] sm:$0xff]
    %v1058 = vld [vmem:[%s1 + $0x2030] sm:$0xff]
    %v1059 = vld [vmem:[%s1 + $0x2038] sm:$0xff]
    %v1060 = vld [vmem:[%s1 + $0x2040] sm:$0xff]
    %v1061 = vld [vmem:[%s1 + $0x2048] sm:$0xff]
    %v1062 = vld [vmem:[%s1 + $0x2050] sm:$0xff]
    %v1063 = vld [vmem:[%s1 + $0x2058] sm:$0xff]
    %v1064 = vld [vmem:[%s1 + $0x2060] sm:$0xff]
    %v1065 = vld [vmem:[%s1 + $0x2068] sm:$0xff]
    %v1066 = vld [vmem:[%s1 + $0x2070] sm:$0xff]
    %v1067 = vld [vmem:[%s1 + $0x2078] sm:$0xff]
    %v1068 = vld [vmem:[%s1 + $0x2080] sm:$0xff]
    %v1069 = vld [vmem:[%s1 + $0x2088] sm:$0xff]
    %v1070 = vld [vmem:[%s1 + $0x2090] sm:$0xff]
    %v1071 = vld [vmem:[%s1 + $0x2098] sm:$0xff]
    %v1072 = vld [vmem:[%s1 + $0x20a0] sm:$0xff]
    %v1073 = vld [vmem:[%s1 + $0x20a8] sm:$0xff]
    %v1074 = vld [vmem:[%s1 + $0x20b0] sm:$0xff]
    %v1075 = vld [vmem:[%s1 + $0x20b8] sm:$0xff]
    %v1076 = vld [vmem:[%s1 + $0x20c0] sm:$0xff]
    %v1077 = vld [vmem:[%s1 + $0x20c8] sm:$0xff]
    %v1078 = vld [vmem:[%s1 + $0x20d0] sm:$0xff]
    %v1079 = vld [vmem:[%s1 + $0x20d8] sm:$0xff]
    %v1080 = vld [vmem:[%s1 + $0x20e0] sm:$0xff]
    %v1081 = vld [vmem:[%s1 + $0x20e8] sm:$0xff]
    %v1082 = vld [vmem:[%s1 + $0x20f0] sm:$0xff]
    %v1083 = vld [vmem:[%s1 + $0x20f8] sm:$0xff]
    %v1084 = vld [vmem:[%s1 + $0x2100] sm:$0xff]
    %v1085 = vld [vmem:[%s1 + $0x2108] sm:$0xff]
    %v1086 = vld [vmem:[%s1 + $0x2110] sm:$0xff]
    %v1087 = vld [vmem:[%s1 + $0x2118] sm:$0xff]
    %v1088 = vld [vmem:[%s1 + $0x2120] sm:$0xff]
    %v1089 = vld [vmem:[%s1 + $0x2128] sm:$0xff]
    %v1090 = vld [vmem:[%s1 + $0x2130] sm:$0xff]
    %v1091 = vld [vmem:[%s1 + $0x2138] sm:$0xff]
    %v1092 = vld [vmem:[%s1 + $0x2140] sm:$0xff]
    %v1093 = vld [vmem:[%s1 + $0x2148] sm:$0xff]
    %v1094 = vld [vmem:[%s1 + $0x2150] sm:$0xff]
    %v1095 = vld [vmem:[%s1 + $0x2158] sm:$0xff]
    %v1096 = vld [vmem:[%s1 + $0x2160] sm:$0xff]
    %v1097 = vld [vmem:[%s1 + $0x2168] sm:$0xff]
    %v1098 = vld [vmem:[%s1 + $0x2170] sm:$0xff]
    %v1099 = vld [vmem:[%s1 + $0x2178] sm:$0xff]
    %v1100 = vld [vmem:[%s1 + $0x2180] sm:$0xff]
    %v1101 = vld [vmem:[%s1 + $0x2188] sm:$0xff]
    %v1102 = vld [vmem:[%s1 + $0x2190] sm:$0xff]
    %v1103 = vld [vmem:[%s1 + $0x2198] sm:$0xff]
    %v1104 = vld [vmem:[%s1 + $0x21a0] sm:$0xff]
    %v1105 = vld [vmem:[%s1 + $0x21a8] sm:$0xff]
    %v1106 = vld [vmem:[%s1 + $0x21b0] sm:$0xff]
    %v1107 = vld [vmem:[%s1 + $0x21b8] sm:$0xff]
    %v1108 = vld [vmem:[%s1 + $0x21c0] sm:$0xff]
    %v1109 = vld [vmem:[%s1 + $0x21c8] sm:$0xff]
    %v1110 = vld [vmem:[%s1 + $0x21d0] sm:$0xff]
    %v1111 = vld [vmem:[%s1 + $0x21d8] sm:$0xff]
    %v1112 = vld [vmem:[%s1 + $0x21e0] sm:$0xff]
    %v1113 = vld [vmem:[%s1 + $0x21e8] sm:$0xff]
    %v1114 = vld [vmem:[%s1 + $0x21f0] sm:$0xff]
    %v1115 = vld [vmem:[%s1 + $0x21f8] sm:$0xff]
    %v1116 = vld [vmem:[%s1 + $0x2200] sm:$0xff]
    %v1117 = vld [vmem:[%s1 + $0x2208] sm:$0xff]
    %v1118 = vld [vmem:[%s1 + $0x2210] sm:$0xff]
    %v1119 = vld [vmem:[%s1 + $0x2218] sm:$0xff]
    %v1120 = vld [vmem:[%s1 + $0x2220] sm:$0xff]
    %v1121 = vld [vmem:[%s1 + $0x2228] sm:$0xff]
    %v1122 = vld [vmem:[%s1 + $0x2230] sm:$0xff]
    %v1123 = vld [vmem:[%s1 + $0x2238] sm:$0xff]
    %v1124 = vld [vmem:[%s1 + $0x2240] sm:$0xff]
    %v1125 = vld [vmem:[%s1 + $0x2248] sm:$0xff]
    %v1126 = vld [vmem:[%s1 + $0x2250] sm:$0xff]
    %v1127 = vld [vmem:[%s1 + $0x2258] sm:$0xff]
    %v1128 = vld [vmem:[%s1 + $0x2260] sm:$0xff]
    %v1129 = vld [vmem:[%s1 + $0x2268] sm:$0xff]
    %v1130 = vld [vmem:[%s1 + $0x2270] sm:$0xff]
    %v1131 = vld [vmem:[%s1 + $0x2278] sm:$0xff]
    %v1132 = vld [vmem:[%s1 + $0x2280] sm:$0xff]
    %v1133 = vld [vmem:[%s1 + $0x2288] sm:$0xff]
    %v1134 = vld [vmem:[%s1 + $0x2290] sm:$0xff]
    %v1135 = vld [vmem:[%s1 + $0x2298] sm:$0xff]
    %v1136 = vld [vmem:[%s1 + $0x22a0] sm:$0xff]
    %v1137 = vld [vmem:[%s1 + $0x22a8] sm:$0xff]
    %v1138 = vld [vmem:[%s1 + $0x22b0] sm:$0xff]
    %v1139 = vld [vmem:[%s1 + $0x22b8] sm:$0xff]
    %v1140 = vld [vmem:[%s1 + $0x22c0] sm:$0xff]
    %v1141 = vld [vmem:[%s1 + $0x22c8] sm:$0xff]
    %v1142 = vld [vmem:[%s1 + $0x22d0] sm:$0xff]
    %v1143 = vld [vmem:[%s1 + $0x22d8] sm:$0xff]
    %v1144 = vld [vmem:[%s1 + $0x22e0] sm:$0xff]
    %v1145 = vld [vmem:[%s1 + $0x22e8] sm:$0xff]
    %v1146 = vld [vmem:[%s1 + $0x22f0] sm:$0xff]
    %v1147 = vld [vmem:[%s1 + $0x22f8] sm:$0xff]
    %v1148 = vld [vmem:[%s1 + $0x2300] sm:$0xff]
    %v1149 = vld [vmem:[%s1 + $0x2308] sm:$0xff]
    %v1150 = vld [vmem:[%s1 + $0x2310] sm:$0xff]
    %v1151 = vld [vmem:[%s1 + $0x2318] sm:$0xff]
    %v1152 = vld [vmem:[%s1 + $0x2320] sm:$0xff]
    %v1153 = vld [vmem:[%s1 + $0x2328] sm:$0xff]
    %v1154 = vld [vmem:[%s1 + $0x2330] sm:$0xff]
    %v1155 = vld [vmem:[%s1 + $0x2338] sm:$0xff]
    %v1156 = vld [vmem:[%s1 + $0x2340] sm:$0xff]
    %v1157 = vld [vmem:[%s1 + $0x2348] sm:$0xff]
    %v1158 = vld [vmem:[%s1 + $0x2350] sm:$0xff]
    %v1159 = vld [vmem:[%s1 + $0x2358] sm:$0xff]
    %v1160 = vld [vmem:[%s1 + $0x2360] sm:$0xff]
    %v1161 = vld [vmem:[%s1 + $0x2368] sm:$0xff]
    %v1162 = vld [vmem:[%s1 + $0x2370] sm:$0xff]
    %v1163 = vld [vmem:[%s1 + $0x2378] sm:$0xff]
    %v1164 = vld [vmem:[%s1 + $0x2380] sm:$0xff]
    %v1165 = vld [vmem:[%s1 + $0x2388] sm:$0xff]
    %v1166 = vld [vmem:[%s1 + $0x2390] sm:$0xff]
    %v1167 = vld [vmem:[%s1 + $0x2398] sm:$0xff]
    %v1168 = vld [vmem:[%s1 + $0x23a0] sm:$0xff]
    %v1169 = vld [vmem:[%s1 + $0x23a8] sm:$0xff]
    %v1170 = vld [vmem:[%s1 + $0x23b0] sm:$0xff]
    %v1171 = vld [vmem:[%s1 + $0x23b8] sm:$0xff]
    %v1172 = vld [vmem:[%s1 + $0x23c0] sm:$0xff]
    %v1173 = vld [vmem:[%s1 + $0x23c8] sm:$0xff]
    %v1174 = vld [vmem:[%s1 + $0x23d0] sm:$0xff]
    %v1175 = vld [vmem:[%s1 + $0x23d8] sm:$0xff]
    %v1176 = vld [vmem:[%s1 + $0x23e0] sm:$0xff]
    %v1177 = vld [vmem:[%s1 + $0x23e8] sm:$0xff]
    %v1178 = vld [vmem:[%s1 + $0x23f0] sm:$0xff]
    %v1179 = vld [vmem:[%s1 + $0x23f8] sm:$0xff]
    %v1180 = vld [vmem:[%s1 + $0x2400] sm:$0xff]
    %v1181 = vld [vmem:[%s1 + $0x2408] sm:$0xff]
    %v1182 = vld [vmem:[%s1 + $0x2410] sm:$0xff]
    %v1183 = vld [vmem:[%s1 + $0x2418] sm:$0xff]
    %v1184 = vld [vmem:[%s1 + $0x2420] sm:$0xff]
    %v1185 = vld [vmem:[%s1 + $0x2428] sm:$0xff]
    %v1186 = vld [vmem:[%s1 + $0x2430] sm:$0xff]
    %v1187 = vld [vmem:[%s1 + $0x2438] sm:$0xff]
    %v1188 = vld [vmem:[%s1 + $0x2440] sm:$0xff]
    %v1189 = vld [vmem:[%s1 + $0x2448] sm:$0xff]
    %v1190 = vld [vmem:[%s1 + $0x2450] sm:$0xff]
    %v1191 = vld [vmem:[%s1 + $0x2458] sm:$0xff]
    %v1192 = vld [vmem:[%s1 + $0x2460] sm:$0xff]
    %v1193 = vld [vmem:[%s1 + $0x2468] sm:$0xff]
    %v1194 = vld [vmem:[%s1 + $0x2470] sm:$0xff]
    %v1195 = vld [vmem:[%s1 + $0x2478] sm:$0xff]
    %v1196 = vld [vmem:[%s1 + $0x2480] sm:$0xff]
    %v1197 = vld [vmem:[%s1 + $0x2488] sm:$0xff]
    %v1198 = vld [vmem:[%s1 + $0x2490] sm:$0xff]
    %v1199 = vld [vmem:[%s1 + $0x2498] sm:$0xff]
    %v1200 = vld [vmem:[%s1 + $0x24a0] sm:$0xff]
    %v1201 = vld [vmem:[%s1 + $0x24a8] sm:$0xff]
    %v1202 = vld [vmem:[%s1 + $0x24b0] sm:$0xff]
    %v1203 = vld [vmem:[%s1 + $0x24b8] sm:$0xff]
    %v1204 = vld [vmem:[%s1 + $0x24c0] sm:$0xff]
    %v1205 = vld [vmem:[%s1 + $0x24c8] sm:$0xff]
    %v1206 = vld [vmem:[%s1 + $0x24d0] sm:$0xff]
    %v1207 = vld [vmem:[%s1 + $0x24d8] sm:$0xff]
    %v1208 = vld [vmem:[%s1 + $0x24e0] sm:$0xff]
    %v1209 = vld [vmem:[%s1 + $0x24e8] sm:$0xff]
    %v1210 = vld [vmem:[%s1 + $0x24f0] sm:$0xff]
    %v1211 = vld [vmem:[%s1 + $0x24f8] sm:$0xff]
    %v1212 = vld [vmem:[%s1 + $0x2500] sm:$0xff]
    %v1213 = vld [vmem:[%s1 + $0x2508] sm:$0xff]
    %v1214 = vld [vmem:[%s1 + $0x2510] sm:$0xff]
    %v1215 = vld [vmem:[%s1 + $0x2518] sm:$0xff]
    %v1216 = vld [vmem:[%s1 + $0x2520] sm:$0xff]
    %v1217 = vld [vmem:[%s1 + $0x2528] sm:$0xff]
    %v1218 = vld [vmem:[%s1 + $0x2530] sm:$0xff]
    %v1219 = vld [vmem:[%s1 + $0x2538] sm:$0xff]
    %v1220 = vld [vmem:[%s1 + $0x2540] sm:$0xff]
    %v1221 = vld [vmem:[%s1 + $0x2548] sm:$0xff]
    %v1222 = vld [vmem:[%s1 + $0x2550] sm:$0xff]
    %v1223 = vld [vmem:[%s1 + $0x2558] sm:$0xff]
    %v1224 = vld [vmem:[%s1 + $0x2560] sm:$0xff]
    %v1225 = vld [vmem:[%s1 + $0x2568] sm:$0xff]
    %v1226 = vld [vmem:[%s1 + $0x2570] sm:$0xff]
    %v1227 = vld [vmem:[%s1 + $0x2578] sm:$0xff]
    %v1228 = vld [vmem:[%s1 + $0x2580] sm:$0xff]
    %v1229 = vld [vmem:[%s1 + $0x2588] sm:$0xff]
    %v1230 = vld [vmem:[%s1 + $0x2590] sm:$0xff]
    %v1231 = vld [vmem:[%s1 + $0x2598] sm:$0xff]
    %v1232 = vld [vmem:[%s1 + $0x25a0] sm:$0xff]
    %v1233 = vld [vmem:[%s1 + $0x25a8] sm:$0xff]
    %v1234 = vld [vmem:[%s1 + $0x25b0] sm:$0xff]
    %v1235 = vld [vmem:[%s1 + $0x25b8] sm:$0xff]
    %v1236 = vld [vmem:[%s1 + $0x25c0] sm:$0xff]
    %v1237 = vld [vmem:[%s1 + $0x25c8] sm:$0xff]
    %v1238 = vld [vmem:[%s1 + $0x25d0] sm:$0xff]
    %v1239 = vld [vmem:[%s1 + $0x25d8] sm:$0xff]
    %v1240 = vld [vmem:[%s1 + $0x25e0] sm:$0xff]
    %v1241 = vld [vmem:[%s1 + $0x25e8] sm:$0xff]
    %v1242 = vld [vmem:[%s1 + $0x25f0] sm:$0xff]
    %v1243 = vld [vmem:[%s1 + $0x25f8] sm:$0xff]
    %v1244 = vld [vmem:[%s1 + $0x2600] sm:$0xff]
    %v1245 = vld [vmem:[%s1 + $0x2608] sm:$0xff]
    %v1246 = vld [vmem:[%s1 + $0x2610] sm:$0xff]
    %v1247 = vld [vmem:[%s1 + $0x2618] sm:$0xff]
    %v1248 = vld [vmem:[%s1 + $0x2620] sm:$0xff]
    %v1249 = vld [vmem:[%s1 + $0x2628] sm:$0xff]
    %v1250 = vld [vmem:[%s1 + $0x2630] sm:$0xff]
    %v1251 = vld [vmem:[%s1 + $0x2638] sm:$0xff]
    %v1252 = vld [vmem:[%s1 + $0x2640] sm:$0xff]
    %v1253 = vld [vmem:[%s1 + $0x2648] sm:$0xff]
    %v1254 = vld [vmem:[%s1 + $0x2650] sm:$0xff]
    %v1255 = vld [vmem:[%s1 + $0x2658] sm:$0xff]
    %v1256 = vld [vmem:[%s1 + $0x2660] sm:$0xff]
    %v1257 = vld [vmem:[%s1 + $0x2668] sm:$0xff]
    %v1258 = vld [vmem:[%s1 + $0x2670] sm:$0xff]
    %v1259 = vld [vmem:[%s1 + $0x2678] sm:$0xff]
    %v1260 = vld [vmem:[%s1 + $0x2680] sm:$0xff]
    %v1261 = vld [vmem:[%s1 + $0x2688] sm:$0xff]
    %v1262 = vld [vmem:[%s1 + $0x2690] sm:$0xff]
    %v1263 = vld [vmem:[%s1 + $0x2698] sm:$0xff]
    %v1264 = vld [vmem:[%s1 + $0x26a0] sm:$0xff]
    %v1265 = vld [vmem:[%s1 + $0x26a8] sm:$0xff]
    %v1266 = vld [vmem:[%s1 + $0x26b0] sm:$0xff]
    %v1267 = vld [vmem:[%s1 + $0x26b8] sm:$0xff]
    %v1268 = vld [vmem:[%s1 + $0x26c0] sm:$0xff]
    %v1269 = vld [vmem:[%s1 + $0x26c8] sm:$0xff]
    %v1270 = vld [vmem:[%s1 + $0x26d0] sm:$0xff]
    %v1271 = vld [vmem:[%s1 + $0x26d8] sm:$0xff]
    %v1272 = vld [vmem:[%s1 + $0x26e0] sm:$0xff]
    %v1273 = vld [vmem:[%s1 + $0x26e8] sm:$0xff]
    %v1274 = vld [vmem:[%s1 + $0x26f0] sm:$0xff]
    %v1275 = vld [vmem:[%s1 + $0x26f8] sm:$0xff]
    %v1276 = vld [vmem:[%s1 + $0x2700] sm:$0xff]
    %v1277 = vld [vmem:[%s1 + $0x2708] sm:$0xff]
    %v1278 = vld [vmem:[%s1 + $0x2710] sm:$0xff]
    %v1279 = vld [vmem:[%s1 + $0x2718] sm:$0xff]
    %v1280 = vld [vmem:[%s1 + $0x2720] sm:$0xff]
    %v1281 = vld [vmem:[%s1 + $0x2728] sm:$0xff]
    %v1282 = vld [vmem:[%s1 + $0x2730] sm:$0xff]
    %v1283 = vld [vmem:[%s1 + $0x2738] sm:$0xff]
    %v1284 = vld [vmem:[%s1 + $0x2740] sm:$0xff]
    %v1285 = vld [vmem:[%s1 + $0x2748] sm:$0xff]
    %v1286 = vld [vmem:[%s1 + $0x2750] sm:$0xff]
    %v1287 = vld [vmem:[%s1 + $0x2758] sm:$0xff]
    %v1288 = vld [vmem:[%s1 + $0x2760] sm:$0xff]
    %v1289 = vld [vmem:[%s1 + $0x2768] sm:$0xff]
    %v1290 = vld [vmem:[%s1 + $0x2770] sm:$0xff]
    %v1291 = vld [vmem:[%s1 + $0x2778] sm:$0xff]
    %v1292 = vld [vmem:[%s1 + $0x2780] sm:$0xff]
    %v1293 = vld [vmem:[%s1 + $0x2788] sm:$0xff]
    %v1294 = vld [vmem:[%s1 + $0x2790] sm:$0xff]
    %v1295 = vld [vmem:[%s1 + $0x2798] sm:$0xff]
    %v1296 = vld [vmem:[%s1 + $0x27a0] sm:$0xff]
    %v1297 = vld [vmem:[%s1 + $0x27a8] sm:$0xff]
    %v1298 = vld [vmem:[%s1 + $0x27b0] sm:$0xff]
    %v1299 = vld [vmem:[%s1 + $0x27b8] sm:$0xff]
    %v1300 = vld [vmem:[%s1 + $0x27c0] sm:$0xff]
    %v1301 = vld [vmem:[%s1 + $0x27c8] sm:$0xff]
    %v1302 = vld [vmem:[%s1 + $0x27d0] sm:$0xff]
    %v1303 = vld [vmem:[%s1 + $0x27d8] sm:$0xff]
    %v1304 = vld [vmem:[%s1 + $0x27e0] sm:$0xff]
    %v1305 = vld [vmem:[%s1 + $0x27e8] sm:$0xff]
    %v1306 = vld [vmem:[%s1 + $0x27f0] sm:$0xff]
    %v1307 = vld [vmem:[%s1 + $0x27f8] sm:$0xff]
    %v1308 = vld [vmem:[%s1 + $0x2800] sm:$0xff]
    %v1309 = vld [vmem:[%s1 + $0x2808] sm:$0xff]
    %v1310 = vld [vmem:[%s1 + $0x2810] sm:$0xff]
    %v1311 = vld [vmem:[%s1 + $0x2818] sm:$0xff]
    %v1312 = vld [vmem:[%s1 + $0x2820] sm:$0xff]
    %v1313 = vld [vmem:[%s1 + $0x2828] sm:$0xff]
    %v1314 = vld [vmem:[%s1 + $0x2830] sm:$0xff]
    %v1315 = vld [vmem:[%s1 + $0x2838] sm:$0xff]
    %v1316 = vld [vmem:[%s1 + $0x2840] sm:$0xff]
    %v1317 = vld [vmem:[%s1 + $0x2848] sm:$0xff]
    %v1318 = vld [vmem:[%s1 + $0x2850] sm:$0xff]
    %v1319 = vld [vmem:[%s1 + $0x2858] sm:$0xff]
    %v1320 = vld [vmem:[%s1 + $0x2860] sm:$0xff]
    %v1321 = vld [vmem:[%s1 + $0x2868] sm:$0xff]
    %v1322 = vld [vmem:[%s1 + $0x2870] sm:$0xff]
    %v1323 = vld [vmem:[%s1 + $0x2878] sm:$0xff]
    %v1324 = vld [vmem:[%s1 + $0x2880] sm:$0xff]
    %v1325 = vld [vmem:[%s1 + $0x2888] sm:$0xff]
    %v1326 = vld [vmem:[%s1 + $0x2890] sm:$0xff]
    %v1327 = vld [vmem:[%s1 + $0x2898] sm:$0xff]
    %v1328 = vld [vmem:[%s1 + $0x28a0] sm:$0xff]
    %v1329 = vld [vmem:[%s1 + $0x28a8] sm:$0xff]
    %v1330 = vld [vmem:[%s1 + $0x28b0] sm:$0xff]
    %v1331 = vld [vmem:[%s1 + $0x28b8] sm:$0xff]
    %v1332 = vld [vmem:[%s1 + $0x28c0] sm:$0xff]
    %v1333 = vld [vmem:[%s1 + $0x28c8] sm:$0xff]
    %v1334 = vld [vmem:[%s1 + $0x28d0] sm:$0xff]
    %v1335 = vld [vmem:[%s1 + $0x28d8] sm:$0xff]
    %v1336 = vld [vmem:[%s1 + $0x28e0] sm:$0xff]
    %v1337 = vld [vmem:[%s1 + $0x28e8] sm:$0xff]
    %v1338 = vld [vmem:[%s1 + $0x28f0] sm:$0xff]
    %v1339 = vld [vmem:[%s1 + $0x28f8] sm:$0xff]
    %v1340 = vld [vmem:[%s1 + $0x2900] sm:$0xff]
    %v1341 = vld [vmem:[%s1 + $0x2908] sm:$0xff]
    %v1342 = vld [vmem:[%s1 + $0x2910] sm:$0xff]
    %v1343 = vld [vmem:[%s1 + $0x2918] sm:$0xff]
    %v1344 = vld [vmem:[%s1 + $0x2920] sm:$0xff]
    %v1345 = vld [vmem:[%s1 + $0x2928] sm:$0xff]
    %v1346 = vld [vmem:[%s1 + $0x2930] sm:$0xff]
    %v1347 = vld [vmem:[%s1 + $0x2938] sm:$0xff]
    %v1348 = vld [vmem:[%s1 + $0x2940] sm:$0xff]
    %v1349 = vld [vmem:[%s1 + $0x2948] sm:$0xff]
    %v1350 = vld [vmem:[%s1 + $0x2950] sm:$0xff]
    %v1351 = vld [vmem:[%s1 + $0x2958] sm:$0xff]
    %v1352 = vld [vmem:[%s1 + $0x2960] sm:$0xff]
    %v1353 = vld [vmem:[%s1 + $0x2968] sm:$0xff]
    %v1354 = vld [vmem:[%s1 + $0x2970] sm:$0xff]
    %v1355 = vld [vmem:[%s1 + $0x2978] sm:$0xff]
    %v1356 = vld [vmem:[%s1 + $0x2980] sm:$0xff]
    %v1357 = vld [vmem:[%s1 + $0x2988] sm:$0xff]
    %v1358 = vld [vmem:[%s1 + $0x2990] sm:$0xff]
    %v1359 = vld [vmem:[%s1 + $0x2998] sm:$0xff]
    %v1360 = vld [vmem:[%s1 + $0x29a0] sm:$0xff]
    %v1361 = vld [vmem:[%s1 + $0x29a8] sm:$0xff]
    %v1362 = vld [vmem:[%s1 + $0x29b0] sm:$0xff]
    %v1363 = vld [vmem:[%s1 + $0x29b8] sm:$0xff]
    %v1364 = vld [vmem:[%s1 + $0x29c0] sm:$0xff]
    %v1365 = vld [vmem:[%s1 + $0x29c8] sm:$0xff]
    %v1366 = vld [vmem:[%s1 + $0x29d0] sm:$0xff]
    %v1367 = vld [vmem:[%s1 + $0x29d8] sm:$0xff]
    %v1368 = vld [vmem:[%s1 + $0x29e0] sm:$0xff]
    %v1369 = vld [vmem:[%s1 + $0x29e8] sm:$0xff]
    %v1370 = vld [vmem:[%s1 + $0x29f0] sm:$0xff]
    %v1371 = vld [vmem:[%s1 + $0x29f8] sm:$0xff]
    %v1372 = vld [vmem:[%s1 + $0x2a00] sm:$0xff]
    %v1373 = vld [vmem:[%s1 + $0x2a08] sm:$0xff]
    %v1374 = vld [vmem:[%s1 + $0x2a10] sm:$0xff]
    %v1375 = vld [vmem:[%s1 + $0x2a18] sm:$0xff]
    %v1376 = vld [vmem:[%s1 + $0x2a20] sm:$0xff]
    %v1377 = vld [vmem:[%s1 + $0x2a28] sm:$0xff]
    %v1378 = vld [vmem:[%s1 + $0x2a30] sm:$0xff]
    %v1379 = vld [vmem:[%s1 + $0x2a38] sm:$0xff]
    %v1380 = vld [vmem:[%s1 + $0x2a40] sm:$0xff]
    %v1381 = vld [vmem:[%s1 + $0x2a48] sm:$0xff]
    %v1382 = vld [vmem:[%s1 + $0x2a50] sm:$0xff]
    %v1383 = vld [vmem:[%s1 + $0x2a58] sm:$0xff]
    %v1384 = vld [vmem:[%s1 + $0x2a60] sm:$0xff]
    %v1385 = vld [vmem:[%s1 + $0x2a68] sm:$0xff]
    %v1386 = vld [vmem:[%s1 + $0x2a70] sm:$0xff]
    %v1387 = vld [vmem:[%s1 + $0x2a78] sm:$0xff]
    %v1388 = vld [vmem:[%s1 + $0x2a80] sm:$0xff]
    %v1389 = vld [vmem:[%s1 + $0x2a88] sm:$0xff]
    %v1390 = vld [vmem:[%s1 + $0x2a90] sm:$0xff]
    %v1391 = vld [vmem:[%s1 + $0x2a98] sm:$0xff]
    %v1392 = vld [vmem:[%s1 + $0x2aa0] sm:$0xff]
    %v1393 = vld [vmem:[%s1 + $0x2aa8] sm:$0xff]
    %v1394 = vld [vmem:[%s1 + $0x2ab0] sm:$0xff]
    %v1395 = vld [vmem:[%s1 + $0x2ab8] sm:$0xff]
    %v1396 = vld [vmem:[%s1 + $0x2ac0] sm:$0xff]
    %v1397 = vld [vmem:[%s1 + $0x2ac8] sm:$0xff]
    %v1398 = vld [vmem:[%s1 + $0x2ad0] sm:$0xff]
    %v1399 = vld [vmem:[%s1 + $0x2ad8] sm:$0xff]
    %v1400 = vld [vmem:[%s1 + $0x2ae0] sm:$0xff]
    %v1401 = vld [vmem:[%s1 + $0x2ae8] sm:$0xff]
    %v1402 = vld [vmem:[%s1 + $0x2af0] sm:$0xff]
    %v1403 = vld [vmem:[%s1 + $0x2af8] sm:$0xff]
    %v1404 = vld [vmem:[%s1 + $0x2b00] sm:$0xff]
    %v1405 = vld [vmem:[%s1 + $0x2b08] sm:$0xff]
    %v1406 = vld [vmem:[%s1 + $0x2b10] sm:$0xff]
    %v1407 = vld [vmem:[%s1 + $0x2b18] sm:$0xff]
    %v1408 = vld [vmem:[%s1 + $0x2b20] sm:$0xff]
    %v1409 = vld [vmem:[%s1 + $0x2b28] sm:$0xff]
    %v1410 = vld [vmem:[%s1 + $0x2b30] sm:$0xff]
    %v1411 = vld [vmem:[%s1 + $0x2b38] sm:$0xff]
    %v1412 = vld [vmem:[%s1 + $0x2b40] sm:$0xff]
    %v1413 = vld [vmem:[%s1 + $0x2b48] sm:$0xff]
    %v1414 = vld [vmem:[%s1 + $0x2b50] sm:$0xff]
    %v1415 = vld [vmem:[%s1 + $0x2b58] sm:$0xff]
    %v1416 = vld [vmem:[%s1 + $0x2b60] sm:$0xff]
    %v1417 = vld [vmem:[%s1 + $0x2b68] sm:$0xff]
    %v1418 = vld [vmem:[%s1 + $0x2b70] sm:$0xff]
    %v1419 = vld [vmem:[%s1 + $0x2b78] sm:$0xff]
    %v1420 = vld [vmem:[%s1 + $0x2b80] sm:$0xff]
    %v1421 = vld [vmem:[%s1 + $0x2b88] sm:$0xff]
    %v1422 = vld [vmem:[%s1 + $0x2b90] sm:$0xff]
    %v1423 = vld [vmem:[%s1 + $0x2b98] sm:$0xff]
    %v1424 = vld [vmem:[%s1 + $0x2ba0] sm:$0xff]
    %v1425 = vld [vmem:[%s1 + $0x2ba8] sm:$0xff]
    %v1426 = vld [vmem:[%s1 + $0x2bb0] sm:$0xff]
    %v1427 = vld [vmem:[%s1 + $0x2bb8] sm:$0xff]
    %v1428 = vld [vmem:[%s1 + $0x2bc0] sm:$0xff]
    %v1429 = vld [vmem:[%s1 + $0x2bc8] sm:$0xff]
    %v1430 = vld [vmem:[%s1 + $0x2bd0] sm:$0xff]
    %v1431 = vld [vmem:[%s1 + $0x2bd8] sm:$0xff]
    %v1432 = vld [vmem:[%s1 + $0x2be0] sm:$0xff]
    %v1433 = vld [vmem:[%s1 + $0x2be8] sm:$0xff]
    %v1434 = vld [vmem:[%s1 + $0x2bf0] sm:$0xff]
    %v1435 = vld [vmem:[%s1 + $0x2bf8] sm:$0xff]
    %v1436 = vld [vmem:[%s1 + $0x2c00] sm:$0xff]
    %v1437 = vld [vmem:[%s1 + $0x2c08] sm:$0xff]
    %v1438 = vld [vmem:[%s1 + $0x2c10] sm:$0xff]
    %v1439 = vld [vmem:[%s1 + $0x2c18] sm:$0xff]
    %v1440 = vld [vmem:[%s1 + $0x2c20] sm:$0xff]
    %v1441 = vld [vmem:[%s1 + $0x2c28] sm:$0xff]
    %v1442 = vld [vmem:[%s1 + $0x2c30] sm:$0xff]
    %v1443 = vld [vmem:[%s1 + $0x2c38] sm:$0xff]
    %v1444 = vld [vmem:[%s1 + $0x2c40] sm:$0xff]
    %v1445 = vld [vmem:[%s1 + $0x2c48] sm:$0xff]
    %v1446 = vld [vmem:[%s1 + $0x2c50] sm:$0xff]
    %v1447 = vld [vmem:[%s1 + $0x2c58] sm:$0xff]
    %v1448 = vld [vmem:[%s1 + $0x2c60] sm:$0xff]
    %v1449 = vld [vmem:[%s1 + $0x2c68] sm:$0xff]
    %v1450 = vld [vmem:[%s1 + $0x2c70] sm:$0xff]
    %v1451 = vld [vmem:[%s1 + $0x2c78] sm:$0xff]
    %v1452 = vld [vmem:[%s1 + $0x2c80] sm:$0xff]
    %v1453 = vld [vmem:[%s1 + $0x2c88] sm:$0xff]
    %v1454 = vld [vmem:[%s1 + $0x2c90] sm:$0xff]
    %v1455 = vld [vmem:[%s1 + $0x2c98] sm:$0xff]
    %v1456 = vld [vmem:[%s1 + $0x2ca0] sm:$0xff]
    %v1457 = vld [vmem:[%s1 + $0x2ca8] sm:$0xff]
    %v1458 = vld [vmem:[%s1 + $0x2cb0] sm:$0xff]
    %v1459 = vld [vmem:[%s1 + $0x2cb8] sm:$0xff]
    %v1460 = vld [vmem:[%s1 + $0x2cc0] sm:$0xff]
    %v1461 = vld [vmem:[%s1 + $0x2cc8] sm:$0xff]
    %v1462 = vld [vmem:[%s1 + $0x2cd0] sm:$0xff]
    %v1463 = vld [vmem:[%s1 + $0x2cd8] sm:$0xff]
    %v1464 = vld [vmem:[%s1 + $0x2ce0] sm:$0xff]
    %v1465 = vld [vmem:[%s1 + $0x2ce8] sm:$0xff]
    %v1466 = vld [vmem:[%s1 + $0x2cf0] sm:$0xff]
    %v1467 = vld [vmem:[%s1 + $0x2cf8] sm:$0xff]
    %v1468 = vld [vmem:[%s1 + $0x2d00] sm:$0xff]
    %v1469 = vld [vmem:[%s1 + $0x2d08] sm:$0xff]
    %v1470 = vld [vmem:[%s1 + $0x2d10] sm:$0xff]
    %v1471 = vld [vmem:[%s1 + $0x2d18] sm:$0xff]
    %v1472 = vld [vmem:[%s1 + $0x2d20] sm:$0xff]
    %v1473 = vld [vmem:[%s1 + $0x2d28] sm:$0xff]
    %v1474 = vld [vmem:[%s1 + $0x2d30] sm:$0xff]
    %v1475 = vld [vmem:[%s1 + $0x2d38] sm:$0xff]
    %v1476 = vld [vmem:[%s1 + $0x2d40] sm:$0xff]
    %v1477 = vld [vmem:[%s1 + $0x2d48] sm:$0xff]
    %v1478 = vld [vmem:[%s1 + $0x2d50] sm:$0xff]
    %v1479 = vld [vmem:[%s1 + $0x2d58] sm:$0xff]
    %v1480 = vld [vmem:[%s1 + $0x2d60] sm:$0xff]
    %v1481 = vld [vmem:[%s1 + $0x2d68] sm:$0xff]
    %v1482 = vld [vmem:[%s1 + $0x2d70] sm:$0xff]
    %v1483 = vld [vmem:[%s1 + $0x2d78] sm:$0xff]
    %v1484 = vld [vmem:[%s1 + $0x2d80] sm:$0xff]
    %v1485 = vld [vmem:[%s1 + $0x2d88] sm:$0xff]
    %v1486 = vld [vmem:[%s1 + $0x2d90] sm:$0xff]
    %v1487 = vld [vmem:[%s1 + $0x2d98] sm:$0xff]
    %v1488 = vld [vmem:[%s1 + $0x2da0] sm:$0xff]
    %v1489 = vld [vmem:[%s1 + $0x2da8] sm:$0xff]
    %v1490 = vld [vmem:[%s1 + $0x2db0] sm:$0xff]
    %v1491 = vld [vmem:[%s1 + $0x2db8] sm:$0xff]
    %v1492 = vld [vmem:[%s1 + $0x2dc0] sm:$0xff]
    %v1493 = vld [vmem:[%s1 + $0x2dc8] sm:$0xff]
    %v1494 = vld [vmem:[%s1 + $0x2dd0] sm:$0xff]
    %v1495 = vld [vmem:[%s1 + $0x2dd8] sm:$0xff]
    %v1496 = vld [vmem:[%s1 + $0x2de0] sm:$0xff]
    %v1497 = vld [vmem:[%s1 + $0x2de8] sm:$0xff]
    %v1498 = vld [vmem:[%s1 + $0x2df0] sm:$0xff]
    %v1499 = vld [vmem:[%s1 + $0x2df8] sm:$0xff]
    %v1500 = vld [vmem:[%s1 + $0x2e00] sm:$0xff]
    %v1501 = vld [vmem:[%s1 + $0x2e08] sm:$0xff]
    %v1502 = vld [vmem:[%s1 + $0x2e10] sm:$0xff]
    %v1503 = vld [vmem:[%s1 + $0x2e18] sm:$0xff]
    %v1504 = vld [vmem:[%s1 + $0x2e20] sm:$0xff]
    %v1505 = vld [vmem:[%s1 + $0x2e28] sm:$0xff]
    %v1506 = vld [vmem:[%s1 + $0x2e30] sm:$0xff]
    %v1507 = vld [vmem:[%s1 + $0x2e38] sm:$0xff]
    %v1508 = vld [vmem:[%s1 + $0x2e40] sm:$0xff]
    %v1509 = vld [vmem:[%s1 + $0x2e48] sm:$0xff]
    %v1510 = vld [vmem:[%s1 + $0x2e50] sm:$0xff]
    %v1511 = vld [vmem:[%s1 + $0x2e58] sm:$0xff]
    %v1512 = vld [vmem:[%s1 + $0x2e60] sm:$0xff]
    %v1513 = vld [vmem:[%s1 + $0x2e68] sm:$0xff]
    %v1514 = vld [vmem:[%s1 + $0x2e70] sm:$0xff]
    %v1515 = vld [vmem:[%s1 + $0x2e78] sm:$0xff]
    %v1516 = vld [vmem:[%s1 + $0x2e80] sm:$0xff]
    %v1517 = vld [vmem:[%s1 + $0x2e88] sm:$0xff]
    %v1518 = vld [vmem:[%s1 + $0x2e90] sm:$0xff]
    %v1519 = vld [vmem:[%s1 + $0x2e98] sm:$0xff]
    %v1520 = vld [vmem:[%s1 + $0x2ea0] sm:$0xff]
    %v1521 = vld [vmem:[%s1 + $0x2ea8] sm:$0xff]
    %v1522 = vld [vmem:[%s1 + $0x2eb0] sm:$0xff]
    %v1523 = vld [vmem:[%s1 + $0x2eb8] sm:$0xff]
    %v1524 = vld [vmem:[%s1 + $0x2ec0] sm:$0xff]
    %v1525 = vld [vmem:[%s1 + $0x2ec8] sm:$0xff]
    %v1526 = vld [vmem:[%s1 + $0x2ed0] sm:$0xff]
    %v1527 = vld [vmem:[%s1 + $0x2ed8] sm:$0xff]
    %v1528 = vld [vmem:[%s1 + $0x2ee0] sm:$0xff]
    %v1529 = vld [vmem:[%s1 + $0x2ee8] sm:$0xff]
    %v1530 = vld [vmem:[%s1 + $0x2ef0] sm:$0xff]
    %v1531 = vld [vmem:[%s1 + $0x2ef8] sm:$0xff]
    %v1532 = vld [vmem:[%s1 + $0x2f00] sm:$0xff]
    %v1533 = vld [vmem:[%s1 + $0x2f08] sm:$0xff]
    %v1534 = vld [vmem:[%s1 + $0x2f10] sm:$0xff]
    %v1535 = vld [vmem:[%s1 + $0x2f18] sm:$0xff]
    %v1536 = vld [vmem:[%s1 + $0x2f20] sm:$0xff]
    %v1537 = vld [vmem:[%s1 + $0x2f28] sm:$0xff]
    %v1538 = vld [vmem:[%s1 + $0x2f30] sm:$0xff]
    %v1539 = vld [vmem:[%s1 + $0x2f38] sm:$0xff]
    %v1540 = vld [vmem:[%s1 + $0x2f40] sm:$0xff]
    %v1541 = vld [vmem:[%s1 + $0x2f48] sm:$0xff]
    %v1542 = vld [vmem:[%s1 + $0x2f50] sm:$0xff]
    %v1543 = vld [vmem:[%s1 + $0x2f58] sm:$0xff]
    %v1544 = vld [vmem:[%s1 + $0x2f60] sm:$0xff]
    %v1545 = vld [vmem:[%s1 + $0x2f68] sm:$0xff]
    %v1546 = vld [vmem:[%s1 + $0x2f70] sm:$0xff]
    %v1547 = vld [vmem:[%s1 + $0x2f78] sm:$0xff]
    %v1548 = vld [vmem:[%s1 + $0x2f80] sm:$0xff]
    %v1549 = vld [vmem:[%s1 + $0x2f88] sm:$0xff]
    %v1550 = vld [vmem:[%s1 + $0x2f90] sm:$0xff]
    %v1551 = vld [vmem:[%s1 + $0x2f98] sm:$0xff]
    %v1552 = vld [vmem:[%s1 + $0x2fa0] sm:$0xff]
    %v1553 = vld [vmem:[%s1 + $0x2fa8] sm:$0xff]
    %v1554 = vld [vmem:[%s1 + $0x2fb0] sm:$0xff]
    %v1555 = vld [vmem:[%s1 + $0x2fb8] sm:$0xff]
    %v1556 = vld [vmem:[%s1 + $0x2fc0] sm:$0xff]
    %v1557 = vld [vmem:[%s1 + $0x2fc8] sm:$0xff]
    %v1558 = vld [vmem:[%s1 + $0x2fd0] sm:$0xff]
    %v1559 = vld [vmem:[%s1 + $0x2fd8] sm:$0xff]
    %v1560 = vld [vmem:[%s1 + $0x2fe0] sm:$0xff]
    %v1561 = vld [vmem:[%s1 + $0x2fe8] sm:$0xff]
    %v1562 = vld [vmem:[%s1 + $0x2ff0] sm:$0xff]
    %v1563 = vld [vmem:[%s1 + $0x2ff8] sm:$0xff]
    %v1564 = vld [vmem:[%s1 + $0x3000] sm:$0xff]
    %v1565 = vld [vmem:[%s1 + $0x3008] sm:$0xff]
    %v1566 = vld [vmem:[%s1 + $0x3010] sm:$0xff]
    %v1567 = vld [vmem:[%s1 + $0x3018] sm:$0xff]
    %v1568 = vld [vmem:[%s1 + $0x3020] sm:$0xff]
    %v1569 = vld [vmem:[%s1 + $0x3028] sm:$0xff]
    %v1570 = vld [vmem:[%s1 + $0x3030] sm:$0xff]
    %v1571 = vld [vmem:[%s1 + $0x3038] sm:$0xff]
    %v1572 = vld [vmem:[%s1 + $0x3040] sm:$0xff]
    %v1573 = vld [vmem:[%s1 + $0x3048] sm:$0xff]
    %v1574 = vld [vmem:[%s1 + $0x3050] sm:$0xff]
    %v1575 = vld [vmem:[%s1 + $0x3058] sm:$0xff]
    %v1576 = vld [vmem:[%s1 + $0x3060] sm:$0xff]
    %v1577 = vld [vmem:[%s1 + $0x3068] sm:$0xff]
    %v1578 = vld [vmem:[%s1 + $0x3070] sm:$0xff]
    %v1579 = vld [vmem:[%s1 + $0x3078] sm:$0xff]
    %v1580 = vld [vmem:[%s1 + $0x3080] sm:$0xff]
    %v1581 = vld [vmem:[%s1 + $0x3088] sm:$0xff]
    %v1582 = vld [vmem:[%s1 + $0x3090] sm:$0xff]
    %v1583 = vld [vmem:[%s1 + $0x3098] sm:$0xff]
    %v1584 = vld [vmem:[%s1 + $0x30a0] sm:$0xff]
    %v1585 = vld [vmem:[%s1 + $0x30a8] sm:$0xff]
    %v1586 = vld [vmem:[%s1 + $0x30b0] sm:$0xff]
    %v1587 = vld [vmem:[%s1 + $0x30b8] sm:$0xff]
    %v1588 = vld [vmem:[%s1 + $0x30c0] sm:$0xff]
    %v1589 = vld [vmem:[%s1 + $0x30c8] sm:$0xff]
    %v1590 = vld [vmem:[%s1 + $0x30d0] sm:$0xff]
    %v1591 = vld [vmem:[%s1 + $0x30d8] sm:$0xff]
    %v1592 = vld [vmem:[%s1 + $0x30e0] sm:$0xff]
    %v1593 = vld [vmem:[%s1 + $0x30e8] sm:$0xff]
    %v1594 = vld [vmem:[%s1 + $0x30f0] sm:$0xff]
    %v1595 = vld [vmem:[%s1 + $0x30f8] sm:$0xff]
    %v1596 = vld [vmem:[%s2] sm:$0xf]
    %v1598 = vlaneseq
    %v1599 = vshrl.u32 %v1598, 7
    %v1600 = vsub.s32 0, %v1599
    %v1601 = vrot.slane %v1596, %v1600
    %v1602 = vlaneseq
    %v1603 = vshrl.u32 %v1602, 7
    %v1604 = vsub.s32 1, %v1603
    %v1605 = vrot.slane %v1596, %v1604
    %v1606 = vlaneseq
    %v1607 = vshrl.u32 %v1606, 7
    %v1608 = vsub.s32 2, %v1607
    %v1609 = vrot.slane %v1596, %v1608
    %v1610 = vlaneseq
    %v1611 = vshrl.u32 %v1610, 7
    %v1612 = vsub.s32 3, %v1611
    %v1613 = vrot.slane %v1596, %v1612
    %v1625 = vcombine.high %v21, %v21
    %v1627 = vunpack.c.l.s4 1983009808
    %v1628 = vunpack.c.0.s8 %v1627
    %v1629 = vlaneseq
    %v1630 = vshrl.u32 %v1629, 7
    %v1631 = vsub.s32 %v1628, %v1630
    %v1632 = vrot.slane %v21, %v1631
    %v1634 = vunpack.c.l.s4 1983009808
    %v1635 = vunpack.c.0.s8 %v1634
    %v1636 = vlaneseq
    %v1637 = vshrl.u32 %v1636, 7
    %v1638 = vsub.s32 %v1635, %v1637
    %v1639 = vrot.slane %v1625, %v1638
    %v1640 = vcombine.high %v1632, %v1632
    %v1641 = vcombine.high %v1639, %v1639
    %v1642 = vcombine.high %v22, %v22
    %v1644 = vunpack.c.l.s4 1983009808
    %v1645 = vunpack.c.0.s8 %v1644
    %v1646 = vlaneseq
    %v1647 = vshrl.u32 %v1646, 7
    %v1648 = vsub.s32 %v1645, %v1647
    %v1649 = vrot.slane %v22, %v1648
    %v1651 = vunpack.c.l.s4 1983009808
    %v1652 = vunpack.c.0.s8 %v1651
    %v1653 = vlaneseq
    %v1654 = vshrl.u32 %v1653, 7
    %v1655 = vsub.s32 %v1652, %v1654
    %v1656 = vrot.slane %v1642, %v1655
    %v1657 = vcombine.high %v1649, %v1649
    %v1658 = vcombine.high %v1656, %v1656
    %v1659 = vcombine.high %v23, %v23
    %v1661 = vunpack.c.l.s4 1983009808
    %v1662 = vunpack.c.0.s8 %v1661
    %v1663 = vlaneseq
    %v1664 = vshrl.u32 %v1663, 7
    %v1665 = vsub.s32 %v1662, %v1664
    %v1666 = vrot.slane %v23, %v1665
    %v1668 = vunpack.c.l.s4 1983009808
    %v1669 = vunpack.c.0.s8 %v1668
    %v1670 = vlaneseq
    %v1671 = vshrl.u32 %v1670, 7
    %v1672 = vsub.s32 %v1669, %v1671
    %v1673 = vrot.slane %v1659, %v1672
    %v1674 = vcombine.high %v1666, %v1666
    %v1675 = vcombine.high %v1673, %v1673
    %v1676 = vcombine.high %v24, %v24
    %v1678 = vunpack.c.l.s4 1983009808
    %v1679 = vunpack.c.0.s8 %v1678
    %v1680 = vlaneseq
    %v1681 = vshrl.u32 %v1680, 7
    %v1682 = vsub.s32 %v1679, %v1681
    %v1683 = vrot.slane %v24, %v1682
    %v1685 = vunpack.c.l.s4 1983009808
    %v1686 = vunpack.c.0.s8 %v1685
    %v1687 = vlaneseq
    %v1688 = vshrl.u32 %v1687, 7
    %v1689 = vsub.s32 %v1686, %v1688
    %v1690 = vrot.slane %v1676, %v1689
    %v1691 = vcombine.high %v1683, %v1683
    %v1692 = vcombine.high %v1690, %v1690
    %v1693 = vcombine.high %v25, %v25
    %v1695 = vunpack.c.l.s4 1983009808
    %v1696 = vunpack.c.0.s8 %v1695
    %v1697 = vlaneseq
    %v1698 = vshrl.u32 %v1697, 7
    %v1699 = vsub.s32 %v1696, %v1698
    %v1700 = vrot.slane %v25, %v1699
    %v1702 = vunpack.c.l.s4 1983009808
    %v1703 = vunpack.c.0.s8 %v1702
    %v1704 = vlaneseq
    %v1705 = vshrl.u32 %v1704, 7
    %v1706 = vsub.s32 %v1703, %v1705
    %v1707 = vrot.slane %v1693, %v1706
    %v1708 = vcombine.high %v1700, %v1700
    %v1709 = vcombine.high %v1707, %v1707
    %v1710 = vcombine.high %v26, %v26
    %v1712 = vunpack.c.l.s4 1983009808
    %v1713 = vunpack.c.0.s8 %v1712
    %v1714 = vlaneseq
    %v1715 = vshrl.u32 %v1714, 7
    %v1716 = vsub.s32 %v1713, %v1715
    %v1717 = vrot.slane %v26, %v1716
    %v1719 = vunpack.c.l.s4 1983009808
    %v1720 = vunpack.c.0.s8 %v1719
    %v1721 = vlaneseq
    %v1722 = vshrl.u32 %v1721, 7
    %v1723 = vsub.s32 %v1720, %v1722
    %v1724 = vrot.slane %v1710, %v1723
    %v1725 = vcombine.high %v1717, %v1717
    %v1726 = vcombine.high %v1724, %v1724
    %v1728 = vunpack.c.l.s4 1983009808
    %v1729 = vunpack.c.0.s8 %v1728
    %v1730 = vlaneseq
    %v1731 = vshrl.u32 %v1730, 7
    %v1732 = vsub.s32 %v1729, %v1731
    %v1733 = vrot.slane %v27, %v1732
    %vm1758 = vcmask 523264
    %v1759 = vsel %vm1758, %v1733, 0
    %1761 = vmatprep.subr.mxu0 %v29
    %1762 = vmatpush1.msra.mxu0 %v28
    %1763 = vmatprep.subr.mxu0 %v33
    %1764 = vmatpush1.msra.mxu0 %v32
    %1765 = vmatprep.subr.mxu0 %v37
    %1766 = vmatpush1.msra.mxu0 %v36
    %1767 = vmatprep.subr.mxu0 %v41
    %1768 = vmatpush1.msra.mxu0 %v40
    %1769 = vmatprep.subr.mxu0 %v45
    %1770 = vmatpush1.msra.mxu0 %v44
    %1771 = vmatprep.subr.mxu0 %v49
    %1772 = vmatpush1.msra.mxu0 %v48
    %1773 = vmatprep.subr.mxu0 %v53
    %1774 = vmatpush1.msra.mxu0 %v52
    %1775 = vmatprep.subr.mxu0 %v57
    %1776 = vmatpush1.msra.mxu0 %v56
    %1777 = vmatprep.subr.mxu0 %v61
    %1778 = vmatpush1.msra.mxu0 %v60
    %1779 = vmatprep.subr.mxu0 %v65
    %1780 = vmatpush1.msra.mxu0 %v64
    %1781 = vmatprep.subr.mxu0 %v69
    %1782 = vmatpush1.msra.mxu0 %v68
    %1783 = vmatprep.subr.mxu0 %v73
    %1784 = vmatpush1.msra.mxu0 %v72
    %1785 = vmatprep.subr.mxu0 %v77
    %1786 = vmatpush1.msra.mxu0 %v76
    %1787 = vmatprep.subr.mxu0 %v81
    %1788 = vmatpush1.msra.mxu0 %v80
    %1789 = vmatprep.subr.mxu0 %v85
    %1790 = vmatpush1.msra.mxu0 %v84
    %1791 = vmatprep.subr.mxu0 %v89
    %1792 = vmatpush1.msra.mxu0 %v88
    %1793 = vmatprep.subr.mxu0 %v93
    %1794 = vmatpush1.msra.mxu0 %v92
    %1795 = vmatprep.subr.mxu0 %v97
    %1796 = vmatpush1.msra.mxu0 %v96
    %1797 = vmatprep.subr.mxu0 %v101
    %1798 = vmatpush1.msra.mxu0 %v100
    %1799 = vmatprep.subr.mxu0 %v105
    %1800 = vmatpush1.msra.mxu0 %v104
    %1801 = vmatprep.subr.mxu0 %v109
    %1802 = vmatpush1.msra.mxu0 %v108
    %1803 = vmatprep.subr.mxu0 %v113
    %1804 = vmatpush1.msra.mxu0 %v112
    %1805 = vmatprep.subr.mxu0 %v117
    %1806 = vmatpush1.msra.mxu0 %v116
    %1807 = vmatprep.subr.mxu0 %v121
    %1808 = vmatpush1.msra.mxu0 %v120
    %1809 = vmatprep.subr.mxu0 %v125
    %1810 = vmatpush1.msra.mxu0 %v124
    %1811 = vmatprep.subr.mxu0 %v129
    %1812 = vmatpush1.msra.mxu0 %v128
    %1813 = vmatprep.subr.mxu0 %v133
    %1814 = vmatpush1.msra.mxu0 %v132
    %1815 = vmatprep.subr.mxu0 %v137
    %1816 = vmatpush1.msra.mxu0 %v136
    %1817 = vmatprep.subr.mxu0 %v141
    %1818 = vmatpush1.msra.mxu0 %v140
    %1819 = vmatprep.subr.mxu0 %v145
    %1820 = vmatpush1.msra.mxu0 %v144
    %1821 = vmatprep.subr.mxu0 %v149
    %1822 = vmatpush1.msra.mxu0 %v148
    %1823 = vmatprep.subr.mxu0 %v153
    %1824 = vmatpush1.msra.mxu0 %v152
    %1825 = vmatprep.mubr.f32.mxu0 %v1640
    %1826 = vmatmul.mubr.f32.gmra.mrb[0].mxu0 %v1632
    %v1827 = vpop.f32.mrb[0].mxu0
    %v1828 = vadd.f32 %v1601, %v1827
    %v1829 = vpop.f32.mrb[0].mxu0
    %v1830 = vadd.f32 %v1605, %v1829
    %1831 = vdwg.mxu0
    %1832 = vmatprep.subr.mxu0 %v157
    %1833 = vmatpush1.msra.mxu0 %v156
    %1834 = vmatprep.subr.mxu0 %v161
    %1835 = vmatpush1.msra.mxu0 %v160
    %1836 = vmatprep.subr.mxu0 %v165
    %1837 = vmatpush1.msra.mxu0 %v164
    %1838 = vmatprep.subr.mxu0 %v169
    %1839 = vmatpush1.msra.mxu0 %v168
    %1840 = vmatprep.subr.mxu0 %v173
    %1841 = vmatpush1.msra.mxu0 %v172
    %1842 = vmatprep.subr.mxu0 %v177
    %1843 = vmatpush1.msra.mxu0 %v176
    %1844 = vmatprep.subr.mxu0 %v181
    %1845 = vmatpush1.msra.mxu0 %v180
    %1846 = vmatprep.subr.mxu0 %v185
    %1847 = vmatpush1.msra.mxu0 %v184
    %1848 = vmatprep.subr.mxu0 %v189
    %1849 = vmatpush1.msra.mxu0 %v188
    %1850 = vmatprep.subr.mxu0 %v193
    %1851 = vmatpush1.msra.mxu0 %v192
    %1852 = vmatprep.subr.mxu0 %v197
    %1853 = vmatpush1.msra.mxu0 %v196
    %1854 = vmatprep.subr.mxu0 %v201
    %1855 = vmatpush1.msra.mxu0 %v200
    %1856 = vmatprep.subr.mxu0 %v205
    %1857 = vmatpush1.msra.mxu0 %v204
    %1858 = vmatprep.subr.mxu0 %v209
    %1859 = vmatpush1.msra.mxu0 %v208
    %1860 = vmatprep.subr.mxu0 %v213
    %1861 = vmatpush1.msra.mxu0 %v212
    %1862 = vmatprep.subr.mxu0 %v217
    %1863 = vmatpush1.msra.mxu0 %v216
    %1864 = vmatprep.subr.mxu0 %v221
    %1865 = vmatpush1.msra.mxu0 %v220
    %1866 = vmatprep.subr.mxu0 %v225
    %1867 = vmatpush1.msra.mxu0 %v224
    %1868 = vmatprep.subr.mxu0 %v229
    %1869 = vmatpush1.msra.mxu0 %v228
    %1870 = vmatprep.subr.mxu0 %v233
    %1871 = vmatpush1.msra.mxu0 %v232
    %1872 = vmatprep.subr.mxu0 %v237
    %1873 = vmatpush1.msra.mxu0 %v236
    %1874 = vmatprep.subr.mxu0 %v241
    %1875 = vmatpush1.msra.mxu0 %v240
    %1876 = vmatprep.subr.mxu0 %v245
    %1877 = vmatpush1.msra.mxu0 %v244
    %1878 = vmatprep.subr.mxu0 %v249
    %1879 = vmatpush1.msra.mxu0 %v248
    %1880 = vmatprep.subr.mxu0 %v253
    %1881 = vmatpush1.msra.mxu0 %v252
    %1882 = vmatprep.subr.mxu0 %v257
    %1883 = vmatpush1.msra.mxu0 %v256
    %1884 = vmatprep.subr.mxu0 %v261
    %1885 = vmatpush1.msra.mxu0 %v260
    %1886 = vmatprep.subr.mxu0 %v265
    %1887 = vmatpush1.msra.mxu0 %v264
    %1888 = vmatprep.subr.mxu0 %v269
    %1889 = vmatpush1.msra.mxu0 %v268
    %1890 = vmatprep.subr.mxu0 %v273
    %1891 = vmatpush1.msra.mxu0 %v272
    %1892 = vmatprep.subr.mxu0 %v277
    %1893 = vmatpush1.msra.mxu0 %v276
    %1894 = vmatprep.subr.mxu0 %v281
    %1895 = vmatpush1.msra.mxu0 %v280
    %1896 = vmatprep.mubr.f32.mxu0 %v1641
    %1897 = vmatmul.mubr.f32.gmra.mrb[0].mxu0 %v1639
    %v1898 = vpop.f32.mrb[0].mxu0
    %v1899 = vadd.f32 %v1828, %v1898
    %v1900 = vpop.f32.mrb[0].mxu0
    %v1901 = vadd.f32 %v1830, %v1900
    %1902 = vdwg.mxu0
    %1903 = vmatprep.subr.mxu0 %v285
    %1904 = vmatpush1.msra.mxu0 %v284
    %1905 = vmatprep.subr.mxu0 %v289
    %1906 = vmatpush1.msra.mxu0 %v288
    %1907 = vmatprep.subr.mxu0 %v293
    %1908 = vmatpush1.msra.mxu0 %v292
    %1909 = vmatprep.subr.mxu0 %v297
    %1910 = vmatpush1.msra.mxu0 %v296
    %1911 = vmatprep.subr.mxu0 %v301
    %1912 = vmatpush1.msra.mxu0 %v300
    %1913 = vmatprep.subr.mxu0 %v305
    %1914 = vmatpush1.msra.mxu0 %v304
    %1915 = vmatprep.subr.mxu0 %v309
    %1916 = vmatpush1.msra.mxu0 %v308
    %1917 = vmatprep.subr.mxu0 %v313
    %1918 = vmatpush1.msra.mxu0 %v312
    %1919 = vmatprep.subr.mxu0 %v317
    %1920 = vmatpush1.msra.mxu0 %v316
    %1921 = vmatprep.subr.mxu0 %v321
    %1922 = vmatpush1.msra.mxu0 %v320
    %1923 = vmatprep.subr.mxu0 %v325
    %1924 = vmatpush1.msra.mxu0 %v324
    %1925 = vmatprep.subr.mxu0 %v329
    %1926 = vmatpush1.msra.mxu0 %v328
    %1927 = vmatprep.subr.mxu0 %v333
    %1928 = vmatpush1.msra.mxu0 %v332
    %1929 = vmatprep.subr.mxu0 %v337
    %1930 = vmatpush1.msra.mxu0 %v336
    %1931 = vmatprep.subr.mxu0 %v341
    %1932 = vmatpush1.msra.mxu0 %v340
    %1933 = vmatprep.subr.mxu0 %v345
    %1934 = vmatpush1.msra.mxu0 %v344
    %1935 = vmatprep.subr.mxu0 %v349
    %1936 = vmatpush1.msra.mxu0 %v348
    %1937 = vmatprep.subr.mxu0 %v353
    %1938 = vmatpush1.msra.mxu0 %v352
    %1939 = vmatprep.subr.mxu0 %v357
    %1940 = vmatpush1.msra.mxu0 %v356
    %1941 = vmatprep.subr.mxu0 %v361
    %1942 = vmatpush1.msra.mxu0 %v360
    %1943 = vmatprep.subr.mxu0 %v365
    %1944 = vmatpush1.msra.mxu0 %v364
    %1945 = vmatprep.subr.mxu0 %v369
    %1946 = vmatpush1.msra.mxu0 %v368
    %1947 = vmatprep.subr.mxu0 %v373
    %1948 = vmatpush1.msra.mxu0 %v372
    %1949 = vmatprep.subr.mxu0 %v377
    %1950 = vmatpush1.msra.mxu0 %v376
    %1951 = vmatprep.subr.mxu0 %v381
    %1952 = vmatpush1.msra.mxu0 %v380
    %1953 = vmatprep.subr.mxu0 %v385
    %1954 = vmatpush1.msra.mxu0 %v384
    %1955 = vmatprep.subr.mxu0 %v389
    %1956 = vmatpush1.msra.mxu0 %v388
    %1957 = vmatprep.subr.mxu0 %v393
    %1958 = vmatpush1.msra.mxu0 %v392
    %1959 = vmatprep.subr.mxu0 %v397
    %1960 = vmatpush1.msra.mxu0 %v396
    %1961 = vmatprep.subr.mxu0 %v401
    %1962 = vmatpush1.msra.mxu0 %v400
    %1963 = vmatprep.subr.mxu0 %v405
    %1964 = vmatpush1.msra.mxu0 %v404
    %1965 = vmatprep.subr.mxu0 %v409
    %1966 = vmatpush1.msra.mxu0 %v408
    %1967 = vmatprep.mubr.f32.mxu0 %v1657
    %1968 = vmatmul.mubr.f32.gmra.mrb[0].mxu0 %v1649
    %v1969 = vpop.f32.mrb[0].mxu0
    %v1970 = vadd.f32 %v1899, %v1969
    %v1971 = vpop.f32.mrb[0].mxu0
    %v1972 = vadd.f32 %v1901, %v1971
    %1973 = vdwg.mxu0
    %1974 = vmatprep.subr.mxu0 %v413
    %1975 = vmatpush1.msra.mxu0 %v412
    %1976 = vmatprep.subr.mxu0 %v417
    %1977 = vmatpush1.msra.mxu0 %v416
    %1978 = vmatprep.subr.mxu0 %v421
    %1979 = vmatpush1.msra.mxu0 %v420
    %1980 = vmatprep.subr.mxu0 %v425
    %1981 = vmatpush1.msra.mxu0 %v424
    %1982 = vmatprep.subr.mxu0 %v429
    %1983 = vmatpush1.msra.mxu0 %v428
    %1984 = vmatprep.subr.mxu0 %v433
    %1985 = vmatpush1.msra.mxu0 %v432
    %1986 = vmatprep.subr.mxu0 %v437
    %1987 = vmatpush1.msra.mxu0 %v436
    %1988 = vmatprep.subr.mxu0 %v441
    %1989 = vmatpush1.msra.mxu0 %v440
    %1990 = vmatprep.subr.mxu0 %v445
    %1991 = vmatpush1.msra.mxu0 %v444
    %1992 = vmatprep.subr.mxu0 %v449
    %1993 = vmatpush1.msra.mxu0 %v448
    %1994 = vmatprep.subr.mxu0 %v453
    %1995 = vmatpush1.msra.mxu0 %v452
    %1996 = vmatprep.subr.mxu0 %v457
    %1997 = vmatpush1.msra.mxu0 %v456
    %1998 = vmatprep.subr.mxu0 %v461
    %1999 = vmatpush1.msra.mxu0 %v460
    %2000 = vmatprep.subr.mxu0 %v465
    %2001 = vmatpush1.msra.mxu0 %v464
    %2002 = vmatprep.subr.mxu0 %v469
    %2003 = vmatpush1.msra.mxu0 %v468
    %2004 = vmatprep.subr.mxu0 %v473
    %2005 = vmatpush1.msra.mxu0 %v472
    %2006 = vmatprep.subr.mxu0 %v477
    %2007 = vmatpush1.msra.mxu0 %v476
    %2008 = vmatprep.subr.mxu0 %v481
    %2009 = vmatpush1.msra.mxu0 %v480
    %2010 = vmatprep.subr.mxu0 %v485
    %2011 = vmatpush1.msra.mxu0 %v484
    %2012 = vmatprep.subr.mxu0 %v489
    %2013 = vmatpush1.msra.mxu0 %v488
    %2014 = vmatprep.subr.mxu0 %v493
    %2015 = vmatpush1.msra.mxu0 %v492
    %2016 = vmatprep.subr.mxu0 %v497
    %2017 = vmatpush1.msra.mxu0 %v496
    %2018 = vmatprep.subr.mxu0 %v501
    %2019 = vmatpush1.msra.mxu0 %v500
    %2020 = vmatprep.subr.mxu0 %v505
    %2021 = vmatpush1.msra.mxu0 %v504
    %2022 = vmatprep.subr.mxu0 %v509
    %2023 = vmatpush1.msra.mxu0 %v508
    %2024 = vmatprep.subr.mxu0 %v513
    %2025 = vmatpush1.msra.mxu0 %v512
    %2026 = vmatprep.subr.mxu0 %v517
    %2027 = vmatpush1.msra.mxu0 %v516
    %2028 = vmatprep.subr.mxu0 %v521
    %2029 = vmatpush1.msra.mxu0 %v520
    %2030 = vmatprep.subr.mxu0 %v525
    %2031 = vmatpush1.msra.mxu0 %v524
    %2032 = vmatprep.subr.mxu0 %v529
    %2033 = vmatpush1.msra.mxu0 %v528
    %2034 = vmatprep.subr.mxu0 %v533
    %2035 = vmatpush1.msra.mxu0 %v532
    %2036 = vmatprep.subr.mxu0 %v537
    %2037 = vmatpush1.msra.mxu0 %v536
    %2038 = vmatprep.mubr.f32.mxu0 %v1658
    %2039 = vmatmul.mubr.f32.gmra.mrb[0].mxu0 %v1656
    %v2040 = vpop.f32.mrb[0].mxu0
    %v2041 = vadd.f32 %v1970, %v2040
    %v2042 = vpop.f32.mrb[0].mxu0
    %v2043 = vadd.f32 %v1972, %v2042
    %2044 = vdwg.mxu0
    %2045 = vmatprep.subr.mxu0 %v541
    %2046 = vmatpush1.msra.mxu0 %v540
    %2047 = vmatprep.subr.mxu0 %v545
    %2048 = vmatpush1.msra.mxu0 %v544
    %2049 = vmatprep.subr.mxu0 %v549
    %2050 = vmatpush1.msra.mxu0 %v548
    %2051 = vmatprep.subr.mxu0 %v553
    %2052 = vmatpush1.msra.mxu0 %v552
    %2053 = vmatprep.subr.mxu0 %v557
    %2054 = vmatpush1.msra.mxu0 %v556
    %2055 = vmatprep.subr.mxu0 %v561
    %2056 = vmatpush1.msra.mxu0 %v560
    %2057 = vmatprep.subr.mxu0 %v565
    %2058 = vmatpush1.msra.mxu0 %v564
    %2059 = vmatprep.subr.mxu0 %v569
    %2060 = vmatpush1.msra.mxu0 %v568
    %2061 = vmatprep.subr.mxu0 %v573
    %2062 = vmatpush1.msra.mxu0 %v572
    %2063 = vmatprep.subr.mxu0 %v577
    %2064 = vmatpush1.msra.mxu0 %v576
    %2065 = vmatprep.subr.mxu0 %v581
    %2066 = vmatpush1.msra.mxu0 %v580
    %2067 = vmatprep.subr.mxu0 %v585
    %2068 = vmatpush1.msra.mxu0 %v584
    %2069 = vmatprep.subr.mxu0 %v589
    %2070 = vmatpush1.msra.mxu0 %v588
    %2071 = vmatprep.subr.mxu0 %v593
    %2072 = vmatpush1.msra.mxu0 %v592
    %2073 = vmatprep.subr.mxu0 %v597
    %2074 = vmatpush1.msra.mxu0 %v596
    %2075 = vmatprep.subr.mxu0 %v601
    %2076 = vmatpush1.msra.mxu0 %v600
    %2077 = vmatprep.subr.mxu0 %v605
    %2078 = vmatpush1.msra.mxu0 %v604
    %2079 = vmatprep.subr.mxu0 %v609
    %2080 = vmatpush1.msra.mxu0 %v608
    %2081 = vmatprep.subr.mxu0 %v613
    %2082 = vmatpush1.msra.mxu0 %v612
    %2083 = vmatprep.subr.mxu0 %v617
    %2084 = vmatpush1.msra.mxu0 %v616
    %2085 = vmatprep.subr.mxu0 %v621
    %2086 = vmatpush1.msra.mxu0 %v620
    %2087 = vmatprep.subr.mxu0 %v625
    %2088 = vmatpush1.msra.mxu0 %v624
    %2089 = vmatprep.subr.mxu0 %v629
    %2090 = vmatpush1.msra.mxu0 %v628
    %2091 = vmatprep.subr.mxu0 %v633
    %2092 = vmatpush1.msra.mxu0 %v632
    %2093 = vmatprep.subr.mxu0 %v637
    %2094 = vmatpush1.msra.mxu0 %v636
    %2095 = vmatprep.subr.mxu0 %v641
    %2096 = vmatpush1.msra.mxu0 %v640
    %2097 = vmatprep.subr.mxu0 %v645
    %2098 = vmatpush1.msra.mxu0 %v644
    %2099 = vmatprep.subr.mxu0 %v649
    %2100 = vmatpush1.msra.mxu0 %v648
    %2101 = vmatprep.subr.mxu0 %v653
    %2102 = vmatpush1.msra.mxu0 %v652
    %2103 = vmatprep.subr.mxu0 %v657
    %2104 = vmatpush1.msra.mxu0 %v656
    %2105 = vmatprep.subr.mxu0 %v661
    %2106 = vmatpush1.msra.mxu0 %v660
    %2107 = vmatprep.subr.mxu0 %v665
    %2108 = vmatpush1.msra.mxu0 %v664
    %2109 = vmatprep.mubr.f32.mxu0 %v1674
    %2110 = vmatmul.mubr.f32.gmra.mrb[0].mxu0 %v1666
    %v2111 = vpop.f32.mrb[0].mxu0
    %v2112 = vadd.f32 %v2041, %v2111
    %v2113 = vpop.f32.mrb[0].mxu0
    %v2114 = vadd.f32 %v2043, %v2113
    %2115 = vdwg.mxu0
    %2116 = vmatprep.subr.mxu0 %v669
    %2117 = vmatpush1.msra.mxu0 %v668
    %2118 = vmatprep.subr.mxu0 %v673
    %2119 = vmatpush1.msra.mxu0 %v672
    %2120 = vmatprep.subr.mxu0 %v677
    %2121 = vmatpush1.msra.mxu0 %v676
    %2122 = vmatprep.subr.mxu0 %v681
    %2123 = vmatpush1.msra.mxu0 %v680
    %2124 = vmatprep.subr.mxu0 %v685
    %2125 = vmatpush1.msra.mxu0 %v684
    %2126 = vmatprep.subr.mxu0 %v689
    %2127 = vmatpush1.msra.mxu0 %v688
    %2128 = vmatprep.subr.mxu0 %v693
    %2129 = vmatpush1.msra.mxu0 %v692
    %2130 = vmatprep.subr.mxu0 %v697
    %2131 = vmatpush1.msra.mxu0 %v696
    %2132 = vmatprep.subr.mxu0 %v701
    %2133 = vmatpush1.msra.mxu0 %v700
    %2134 = vmatprep.subr.mxu0 %v705
    %2135 = vmatpush1.msra.mxu0 %v704
    %2136 = vmatprep.subr.mxu0 %v709
    %2137 = vmatpush1.msra.mxu0 %v708
    %2138 = vmatprep.subr.mxu0 %v713
    %2139 = vmatpush1.msra.mxu0 %v712
    %2140 = vmatprep.subr.mxu0 %v717
    %2141 = vmatpush1.msra.mxu0 %v716
    %2142 = vmatprep.subr.mxu0 %v721
    %2143 = vmatpush1.msra.mxu0 %v720
    %2144 = vmatprep.subr.mxu0 %v725
    %2145 = vmatpush1.msra.mxu0 %v724
    %2146 = vmatprep.subr.mxu0 %v729
    %2147 = vmatpush1.msra.mxu0 %v728
    %2148 = vmatprep.subr.mxu0 %v733
    %2149 = vmatpush1.msra.mxu0 %v732
    %2150 = vmatprep.subr.mxu0 %v737
    %2151 = vmatpush1.msra.mxu0 %v736
    %2152 = vmatprep.subr.mxu0 %v741
    %2153 = vmatpush1.msra.mxu0 %v740
    %2154 = vmatprep.subr.mxu0 %v745
    %2155 = vmatpush1.msra.mxu0 %v744
    %2156 = vmatprep.subr.mxu0 %v749
    %2157 = vmatpush1.msra.mxu0 %v748
    %2158 = vmatprep.subr.mxu0 %v753
    %2159 = vmatpush1.msra.mxu0 %v752
    %2160 = vmatprep.subr.mxu0 %v757
    %2161 = vmatpush1.msra.mxu0 %v756
    %2162 = vmatprep.subr.mxu0 %v761
    %2163 = vmatpush1.msra.mxu0 %v760
    %2164 = vmatprep.subr.mxu0 %v765
    %2165 = vmatpush1.msra.mxu0 %v764
    %2166 = vmatprep.subr.mxu0 %v769
    %2167 = vmatpush1.msra.mxu0 %v768
    %2168 = vmatprep.subr.mxu0 %v773
    %2169 = vmatpush1.msra.mxu0 %v772
    %2170 = vmatprep.subr.mxu0 %v777
    %2171 = vmatpush1.msra.mxu0 %v776
    %2172 = vmatprep.subr.mxu0 %v781
    %2173 = vmatpush1.msra.mxu0 %v780
    %2174 = vmatprep.subr.mxu0 %v785
    %2175 = vmatpush1.msra.mxu0 %v784
    %2176 = vmatprep.subr.mxu0 %v789
    %2177 = vmatpush1.msra.mxu0 %v788
    %2178 = vmatprep.subr.mxu0 %v793
    %2179 = vmatpush1.msra.mxu0 %v792
    %2180 = vmatprep.mubr.f32.mxu0 %v1675
    %2181 = vmatmul.mubr.f32.gmra.mrb[0].mxu0 %v1673
    %v2182 = vpop.f32.mrb[0].mxu0
    %v2183 = vadd.f32 %v2112, %v2182
    %v2184 = vpop.f32.mrb[0].mxu0
    %v2185 = vadd.f32 %v2114, %v2184
    %2186 = vdwg.mxu0
    %2187 = vmatprep.subr.mxu0 %v797
    %2188 = vmatpush1.msra.mxu0 %v796
    %2189 = vmatprep.subr.mxu0 %v801
    %2190 = vmatpush1.msra.mxu0 %v800
    %2191 = vmatprep.subr.mxu0 %v805
    %2192 = vmatpush1.msra.mxu0 %v804
    %2193 = vmatprep.subr.mxu0 %v809
    %2194 = vmatpush1.msra.mxu0 %v808
    %2195 = vmatprep.subr.mxu0 %v813
    %2196 = vmatpush1.msra.mxu0 %v812
    %2197 = vmatprep.subr.mxu0 %v817
    %2198 = vmatpush1.msra.mxu0 %v816
    %2199 = vmatprep.subr.mxu0 %v821
    %2200 = vmatpush1.msra.mxu0 %v820
    %2201 = vmatprep.subr.mxu0 %v825
    %2202 = vmatpush1.msra.mxu0 %v824
    %2203 = vmatprep.subr.mxu0 %v829
    %2204 = vmatpush1.msra.mxu0 %v828
    %2205 = vmatprep.subr.mxu0 %v833
    %2206 = vmatpush1.msra.mxu0 %v832
    %2207 = vmatprep.subr.mxu0 %v837
    %2208 = vmatpush1.msra.mxu0 %v836
    %2209 = vmatprep.subr.mxu0 %v841
    %2210 = vmatpush1.msra.mxu0 %v840
    %2211 = vmatprep.subr.mxu0 %v845
    %2212 = vmatpush1.msra.mxu0 %v844
    %2213 = vmatprep.subr.mxu0 %v849
    %2214 = vmatpush1.msra.mxu0 %v848
    %2215 = vmatprep.subr.mxu0 %v853
    %2216 = vmatpush1.msra.mxu0 %v852
    %2217 = vmatprep.subr.mxu0 %v857
    %2218 = vmatpush1.msra.mxu0 %v856
    %2219 = vmatprep.subr.mxu0 %v861
    %2220 = vmatpush1.msra.mxu0 %v860
    %2221 = vmatprep.subr.mxu0 %v865
    %2222 = vmatpush1.msra.mxu0 %v864
    %2223 = vmatprep.subr.mxu0 %v869
    %2224 = vmatpush1.msra.mxu0 %v868
    %2225 = vmatprep.subr.mxu0 %v873
    %2226 = vmatpush1.msra.mxu0 %v872
    %2227 = vmatprep.subr.mxu0 %v877
    %2228 = vmatpush1.msra.mxu0 %v876
    %2229 = vmatprep.subr.mxu0 %v881
    %2230 = vmatpush1.msra.mxu0 %v880
    %2231 = vmatprep.subr.mxu0 %v885
    %2232 = vmatpush1.msra.mxu0 %v884
    %2233 = vmatprep.subr.mxu0 %v889
    %2234 = vmatpush1.msra.mxu0 %v888
    %2235 = vmatprep.subr.mxu0 %v893
    %2236 = vmatpush1.msra.mxu0 %v892
    %2237 = vmatprep.subr.mxu0 %v897
    %2238 = vmatpush1.msra.mxu0 %v896
    %2239 = vmatprep.subr.mxu0 %v901
    %2240 = vmatpush1.msra.mxu0 %v900
    %2241 = vmatprep.subr.mxu0 %v905
    %2242 = vmatpush1.msra.mxu0 %v904
    %2243 = vmatprep.subr.mxu0 %v909
    %2244 = vmatpush1.msra.mxu0 %v908
    %2245 = vmatprep.subr.mxu0 %v913
    %2246 = vmatpush1.msra.mxu0 %v912
    %2247 = vmatprep.subr.mxu0 %v917
    %2248 = vmatpush1.msra.mxu0 %v916
    %2249 = vmatprep.subr.mxu0 %v921
    %2250 = vmatpush1.msra.mxu0 %v920
    %2251 = vmatprep.mubr.f32.mxu0 %v1691
    %2252 = vmatmul.mubr.f32.gmra.mrb[0].mxu0 %v1683
    %v2253 = vpop.f32.mrb[0].mxu0
    %v2254 = vadd.f32 %v2183, %v2253
    %v2255 = vpop.f32.mrb[0].mxu0
    %v2256 = vadd.f32 %v2185, %v2255
    %2257 = vdwg.mxu0
    %2258 = vmatprep.subr.mxu0 %v925
    %2259 = vmatpush1.msra.mxu0 %v924
    %2260 = vmatprep.subr.mxu0 %v929
    %2261 = vmatpush1.msra.mxu0 %v928
    %2262 = vmatprep.subr.mxu0 %v933
    %2263 = vmatpush1.msra.mxu0 %v932
    %2264 = vmatprep.subr.mxu0 %v937
    %2265 = vmatpush1.msra.mxu0 %v936
    %2266 = vmatprep.subr.mxu0 %v941
    %2267 = vmatpush1.msra.mxu0 %v940
    %2268 = vmatprep.subr.mxu0 %v945
    %2269 = vmatpush1.msra.mxu0 %v944
    %2270 = vmatprep.subr.mxu0 %v949
    %2271 = vmatpush1.msra.mxu0 %v948
    %2272 = vmatprep.subr.mxu0 %v953
    %2273 = vmatpush1.msra.mxu0 %v952
    %2274 = vmatprep.subr.mxu0 %v957
    %2275 = vmatpush1.msra.mxu0 %v956
    %2276 = vmatprep.subr.mxu0 %v961
    %2277 = vmatpush1.msra.mxu0 %v960
    %2278 = vmatprep.subr.mxu0 %v965
    %2279 = vmatpush1.msra.mxu0 %v964
    %2280 = vmatprep.subr.mxu0 %v969
    %2281 = vmatpush1.msra.mxu0 %v968
    %2282 = vmatprep.subr.mxu0 %v973
    %2283 = vmatpush1.msra.mxu0 %v972
    %2284 = vmatprep.subr.mxu0 %v977
    %2285 = vmatpush1.msra.mxu0 %v976
    %2286 = vmatprep.subr.mxu0 %v981
    %2287 = vmatpush1.msra.mxu0 %v980
    %2288 = vmatprep.subr.mxu0 %v985
    %2289 = vmatpush1.msra.mxu0 %v984
    %2290 = vmatprep.subr.mxu0 %v989
    %2291 = vmatpush1.msra.mxu0 %v988
    %2292 = vmatprep.subr.mxu0 %v993
    %2293 = vmatpush1.msra.mxu0 %v992
    %2294 = vmatprep.subr.mxu0 %v997
    %2295 = vmatpush1.msra.mxu0 %v996
    %2296 = vmatprep.subr.mxu0 %v1001
    %2297 = vmatpush1.msra.mxu0 %v1000
    %2298 = vmatprep.subr.mxu0 %v1005
    %2299 = vmatpush1.msra.mxu0 %v1004
    %2300 = vmatprep.subr.mxu0 %v1009
    %2301 = vmatpush1.msra.mxu0 %v1008
    %2302 = vmatprep.subr.mxu0 %v1013
    %2303 = vmatpush1.msra.mxu0 %v1012
    %2304 = vmatprep.subr.mxu0 %v1017
    %2305 = vmatpush1.msra.mxu0 %v1016
    %2306 = vmatprep.subr.mxu0 %v1021
    %2307 = vmatpush1.msra.mxu0 %v1020
    %2308 = vmatprep.subr.mxu0 %v1025
    %2309 = vmatpush1.msra.mxu0 %v1024
    %2310 = vmatprep.subr.mxu0 %v1029
    %2311 = vmatpush1.msra.mxu0 %v1028
    %2312 = vmatprep.subr.mxu0 %v1033
    %2313 = vmatpush1.msra.mxu0 %v1032
    %2314 = vmatprep.subr.mxu0 %v1037
    %2315 = vmatpush1.msra.mxu0 %v1036
    %2316 = vmatprep.subr.mxu0 %v1041
    %2317 = vmatpush1.msra.mxu0 %v1040
    %2318 = vmatprep.subr.mxu0 %v1045
    %2319 = vmatpush1.msra.mxu0 %v1044
    %2320 = vmatprep.subr.mxu0 %v1049
    %2321 = vmatpush1.msra.mxu0 %v1048
    %2322 = vmatprep.mubr.f32.mxu0 %v1692
    %2323 = vmatmul.mubr.f32.gmra.mrb[0].mxu0 %v1690
    %v2324 = vpop.f32.mrb[0].mxu0
    %v2325 = vadd.f32 %v2254, %v2324
    %v2326 = vpop.f32.mrb[0].mxu0
    %v2327 = vadd.f32 %v2256, %v2326
    %2328 = vdwg.mxu0
    %2329 = vmatprep.subr.mxu0 %v1053
    %2330 = vmatpush1.msra.mxu0 %v1052
    %2331 = vmatprep.subr.mxu0 %v1057
    %2332 = vmatpush1.msra.mxu0 %v1056
    %2333 = vmatprep.subr.mxu0 %v1061
    %2334 = vmatpush1.msra.mxu0 %v1060
    %2335 = vmatprep.subr.mxu0 %v1065
    %2336 = vmatpush1.msra.mxu0 %v1064
    %2337 = vmatprep.subr.mxu0 %v1069
    %2338 = vmatpush1.msra.mxu0 %v1068
    %2339 = vmatprep.subr.mxu0 %v1073
    %2340 = vmatpush1.msra.mxu0 %v1072
    %2341 = vmatprep.subr.mxu0 %v1077
    %2342 = vmatpush1.msra.mxu0 %v1076
    %2343 = vmatprep.subr.mxu0 %v1081
    %2344 = vmatpush1.msra.mxu0 %v1080
    %2345 = vmatprep.subr.mxu0 %v1085
    %2346 = vmatpush1.msra.mxu0 %v1084
    %2347 = vmatprep.subr.mxu0 %v1089
    %2348 = vmatpush1.msra.mxu0 %v1088
    %2349 = vmatprep.subr.mxu0 %v1093
    %2350 = vmatpush1.msra.mxu0 %v1092
    %2351 = vmatprep.subr.mxu0 %v1097
    %2352 = vmatpush1.msra.mxu0 %v1096
    %2353 = vmatprep.subr.mxu0 %v1101
    %2354 = vmatpush1.msra.mxu0 %v1100
    %2355 = vmatprep.subr.mxu0 %v1105
    %2356 = vmatpush1.msra.mxu0 %v1104
    %2357 = vmatprep.subr.mxu0 %v1109
    %2358 = vmatpush1.msra.mxu0 %v1108
    %2359 = vmatprep.subr.mxu0 %v1113
    %2360 = vmatpush1.msra.mxu0 %v1112
    %2361 = vmatprep.subr.mxu0 %v1117
    %2362 = vmatpush1.msra.mxu0 %v1116
    %2363 = vmatprep.subr.mxu0 %v1121
    %2364 = vmatpush1.msra.mxu0 %v1120
    %2365 = vmatprep.subr.mxu0 %v1125
    %2366 = vmatpush1.msra.mxu0 %v1124
    %2367 = vmatprep.subr.mxu0 %v1129
    %2368 = vmatpush1.msra.mxu0 %v1128
    %2369 = vmatprep.subr.mxu0 %v1133
    %2370 = vmatpush1.msra.mxu0 %v1132
    %2371 = vmatprep.subr.mxu0 %v1137
    %2372 = vmatpush1.msra.mxu0 %v1136
    %2373 = vmatprep.subr.mxu0 %v1141
    %2374 = vmatpush1.msra.mxu0 %v1140
    %2375 = vmatprep.subr.mxu0 %v1145
    %2376 = vmatpush1.msra.mxu0 %v1144
    %2377 = vmatprep.subr.mxu0 %v1149
    %2378 = vmatpush1.msra.mxu0 %v1148
    %2379 = vmatprep.subr.mxu0 %v1153
    %2380 = vmatpush1.msra.mxu0 %v1152
    %2381 = vmatprep.subr.mxu0 %v1157
    %2382 = vmatpush1.msra.mxu0 %v1156
    %2383 = vmatprep.subr.mxu0 %v1161
    %2384 = vmatpush1.msra.mxu0 %v1160
    %2385 = vmatprep.subr.mxu0 %v1165
    %2386 = vmatpush1.msra.mxu0 %v1164
    %2387 = vmatprep.subr.mxu0 %v1169
    %2388 = vmatpush1.msra.mxu0 %v1168
    %2389 = vmatprep.subr.mxu0 %v1173
    %2390 = vmatpush1.msra.mxu0 %v1172
    %2391 = vmatprep.subr.mxu0 %v1177
    %2392 = vmatpush1.msra.mxu0 %v1176
    %2393 = vmatprep.mubr.f32.mxu0 %v1708
    %2394 = vmatmul.mubr.f32.gmra.mrb[0].mxu0 %v1700
    %v2395 = vpop.f32.mrb[0].mxu0
    %v2396 = vadd.f32 %v2325, %v2395
    %v2397 = vpop.f32.mrb[0].mxu0
    %v2398 = vadd.f32 %v2327, %v2397
    %2399 = vdwg.mxu0
    %2400 = vmatprep.subr.mxu0 %v1181
    %2401 = vmatpush1.msra.mxu0 %v1180
    %2402 = vmatprep.subr.mxu0 %v1185
    %2403 = vmatpush1.msra.mxu0 %v1184
    %2404 = vmatprep.subr.mxu0 %v1189
    %2405 = vmatpush1.msra.mxu0 %v1188
    %2406 = vmatprep.subr.mxu0 %v1193
    %2407 = vmatpush1.msra.mxu0 %v1192
    %2408 = vmatprep.subr.mxu0 %v1197
    %2409 = vmatpush1.msra.mxu0 %v1196
    %2410 = vmatprep.subr.mxu0 %v1201
    %2411 = vmatpush1.msra.mxu0 %v1200
    %2412 = vmatprep.subr.mxu0 %v1205
    %2413 = vmatpush1.msra.mxu0 %v1204
    %2414 = vmatprep.subr.mxu0 %v1209
    %2415 = vmatpush1.msra.mxu0 %v1208
    %2416 = vmatprep.subr.mxu0 %v1213
    %2417 = vmatpush1.msra.mxu0 %v1212
    %2418 = vmatprep.subr.mxu0 %v1217
    %2419 = vmatpush1.msra.mxu0 %v1216
    %2420 = vmatprep.subr.mxu0 %v1221
    %2421 = vmatpush1.msra.mxu0 %v1220
    %2422 = vmatprep.subr.mxu0 %v1225
    %2423 = vmatpush1.msra.mxu0 %v1224
    %2424 = vmatprep.subr.mxu0 %v1229
    %2425 = vmatpush1.msra.mxu0 %v1228
    %2426 = vmatprep.subr.mxu0 %v1233
    %2427 = vmatpush1.msra.mxu0 %v1232
    %2428 = vmatprep.subr.mxu0 %v1237
    %2429 = vmatpush1.msra.mxu0 %v1236
    %2430 = vmatprep.subr.mxu0 %v1241
    %2431 = vmatpush1.msra.mxu0 %v1240
    %2432 = vmatprep.subr.mxu0 %v1245
    %2433 = vmatpush1.msra.mxu0 %v1244
    %2434 = vmatprep.subr.mxu0 %v1249
    %2435 = vmatpush1.msra.mxu0 %v1248
    %2436 = vmatprep.subr.mxu0 %v1253
    %2437 = vmatpush1.msra.mxu0 %v1252
    %2438 = vmatprep.subr.mxu0 %v1257
    %2439 = vmatpush1.msra.mxu0 %v1256
    %2440 = vmatprep.subr.mxu0 %v1261
    %2441 = vmatpush1.msra.mxu0 %v1260
    %2442 = vmatprep.subr.mxu0 %v1265
    %2443 = vmatpush1.msra.mxu0 %v1264
    %2444 = vmatprep.subr.mxu0 %v1269
    %2445 = vmatpush1.msra.mxu0 %v1268
    %2446 = vmatprep.subr.mxu0 %v1273
    %2447 = vmatpush1.msra.mxu0 %v1272
    %2448 = vmatprep.subr.mxu0 %v1277
    %2449 = vmatpush1.msra.mxu0 %v1276
    %2450 = vmatprep.subr.mxu0 %v1281
    %2451 = vmatpush1.msra.mxu0 %v1280
    %2452 = vmatprep.subr.mxu0 %v1285
    %2453 = vmatpush1.msra.mxu0 %v1284
    %2454 = vmatprep.subr.mxu0 %v1289
    %2455 = vmatpush1.msra.mxu0 %v1288
    %2456 = vmatprep.subr.mxu0 %v1293
    %2457 = vmatpush1.msra.mxu0 %v1292
    %2458 = vmatprep.subr.mxu0 %v1297
    %2459 = vmatpush1.msra.mxu0 %v1296
    %2460 = vmatprep.subr.mxu0 %v1301
    %2461 = vmatpush1.msra.mxu0 %v1300
    %2462 = vmatprep.subr.mxu0 %v1305
    %2463 = vmatpush1.msra.mxu0 %v1304
    %2464 = vmatprep.mubr.f32.mxu0 %v1709
    %2465 = vmatmul.mubr.f32.gmra.mrb[0].mxu0 %v1707
    %v2466 = vpop.f32.mrb[0].mxu0
    %v2467 = vadd.f32 %v2396, %v2466
    %v2468 = vpop.f32.mrb[0].mxu0
    %v2469 = vadd.f32 %v2398, %v2468
    %2470 = vdwg.mxu0
    %2471 = vmatprep.subr.mxu0 %v1309
    %2472 = vmatpush1.msra.mxu0 %v1308
    %2473 = vmatprep.subr.mxu0 %v1313
    %2474 = vmatpush1.msra.mxu0 %v1312
    %2475 = vmatprep.subr.mxu0 %v1317
    %2476 = vmatpush1.msra.mxu0 %v1316
    %2477 = vmatprep.subr.mxu0 %v1321
    %2478 = vmatpush1.msra.mxu0 %v1320
    %2479 = vmatprep.subr.mxu0 %v1325
    %2480 = vmatpush1.msra.mxu0 %v1324
    %2481 = vmatprep.subr.mxu0 %v1329
    %2482 = vmatpush1.msra.mxu0 %v1328
    %2483 = vmatprep.subr.mxu0 %v1333
    %2484 = vmatpush1.msra.mxu0 %v1332
    %2485 = vmatprep.subr.mxu0 %v1337
    %2486 = vmatpush1.msra.mxu0 %v1336
    %2487 = vmatprep.subr.mxu0 %v1341
    %2488 = vmatpush1.msra.mxu0 %v1340
    %2489 = vmatprep.subr.mxu0 %v1345
    %2490 = vmatpush1.msra.mxu0 %v1344
    %2491 = vmatprep.subr.mxu0 %v1349
    %2492 = vmatpush1.msra.mxu0 %v1348
    %2493 = vmatprep.subr.mxu0 %v1353
    %2494 = vmatpush1.msra.mxu0 %v1352
    %2495 = vmatprep.subr.mxu0 %v1357
    %2496 = vmatpush1.msra.mxu0 %v1356
    %2497 = vmatprep.subr.mxu0 %v1361
    %2498 = vmatpush1.msra.mxu0 %v1360
    %2499 = vmatprep.subr.mxu0 %v1365
    %2500 = vmatpush1.msra.mxu0 %v1364
    %2501 = vmatprep.subr.mxu0 %v1369
    %2502 = vmatpush1.msra.mxu0 %v1368
    %2503 = vmatprep.subr.mxu0 %v1373
    %2504 = vmatpush1.msra.mxu0 %v1372
    %2505 = vmatprep.subr.mxu0 %v1377
    %2506 = vmatpush1.msra.mxu0 %v1376
    %2507 = vmatprep.subr.mxu0 %v1381
    %2508 = vmatpush1.msra.mxu0 %v1380
    %2509 = vmatprep.subr.mxu0 %v1385
    %2510 = vmatpush1.msra.mxu0 %v1384
    %2511 = vmatprep.subr.mxu0 %v1389
    %2512 = vmatpush1.msra.mxu0 %v1388
    %2513 = vmatprep.subr.mxu0 %v1393
    %2514 = vmatpush1.msra.mxu0 %v1392
    %2515 = vmatprep.subr.mxu0 %v1397
    %2516 = vmatpush1.msra.mxu0 %v1396
    %2517 = vmatprep.subr.mxu0 %v1401
    %2518 = vmatpush1.msra.mxu0 %v1400
    %2519 = vmatprep.subr.mxu0 %v1405
    %2520 = vmatpush1.msra.mxu0 %v1404
    %2521 = vmatprep.subr.mxu0 %v1409
    %2522 = vmatpush1.msra.mxu0 %v1408
    %2523 = vmatprep.subr.mxu0 %v1413
    %2524 = vmatpush1.msra.mxu0 %v1412
    %2525 = vmatprep.subr.mxu0 %v1417
    %2526 = vmatpush1.msra.mxu0 %v1416
    %2527 = vmatprep.subr.mxu0 %v1421
    %2528 = vmatpush1.msra.mxu0 %v1420
    %2529 = vmatprep.subr.mxu0 %v1425
    %2530 = vmatpush1.msra.mxu0 %v1424
    %2531 = vmatprep.subr.mxu0 %v1429
    %2532 = vmatpush1.msra.mxu0 %v1428
    %2533 = vmatprep.subr.mxu0 %v1433
    %2534 = vmatpush1.msra.mxu0 %v1432
    %2535 = vmatprep.mubr.f32.mxu0 %v1725
    %2536 = vmatmul.mubr.f32.gmra.mrb[0].mxu0 %v1717
    %v2537 = vpop.f32.mrb[0].mxu0
    %v2538 = vadd.f32 %v2467, %v2537
    %v2539 = vpop.f32.mrb[0].mxu0
    %v2540 = vadd.f32 %v2469, %v2539
    %2541 = vdwg.mxu0
    %2542 = vmatprep.subr.mxu0 %v1437
    %2543 = vmatpush1.msra.mxu0 %v1436
    %2544 = vmatprep.subr.mxu0 %v1441
    %2545 = vmatpush1.msra.mxu0 %v1440
    %2546 = vmatprep.subr.mxu0 %v1445
    %2547 = vmatpush1.msra.mxu0 %v1444
    %2548 = vmatprep.subr.mxu0 %v1449
    %2549 = vmatpush1.msra.mxu0 %v1448
    %2550 = vmatprep.subr.mxu0 %v1453
    %2551 = vmatpush1.msra.mxu0 %v1452
    %2552 = vmatprep.subr.mxu0 %v1457
    %2553 = vmatpush1.msra.mxu0 %v1456
    %2554 = vmatprep.subr.mxu0 %v1461
    %2555 = vmatpush1.msra.mxu0 %v1460
    %2556 = vmatprep.subr.mxu0 %v1465
    %2557 = vmatpush1.msra.mxu0 %v1464
    %2558 = vmatprep.subr.mxu0 %v1469
    %2559 = vmatpush1.msra.mxu0 %v1468
    %2560 = vmatprep.subr.mxu0 %v1473
    %2561 = vmatpush1.msra.mxu0 %v1472
    %2562 = vmatprep.subr.mxu0 %v1477
    %2563 = vmatpush1.msra.mxu0 %v1476
    %2564 = vmatprep.subr.mxu0 %v1481
    %2565 = vmatpush1.msra.mxu0 %v1480
    %2566 = vmatprep.subr.mxu0 %v1485
    %2567 = vmatpush1.msra.mxu0 %v1484
    %2568 = vmatprep.subr.mxu0 %v1489
    %2569 = vmatpush1.msra.mxu0 %v1488
    %2570 = vmatprep.subr.mxu0 %v1493
    %2571 = vmatpush1.msra.mxu0 %v1492
    %2572 = vmatprep.subr.mxu0 %v1497
    %2573 = vmatpush1.msra.mxu0 %v1496
    %2574 = vmatprep.subr.mxu0 %v1501
    %2575 = vmatpush1.msra.mxu0 %v1500
    %2576 = vmatprep.subr.mxu0 %v1505
    %2577 = vmatpush1.msra.mxu0 %v1504
    %2578 = vmatprep.subr.mxu0 %v1509
    %2579 = vmatpush1.msra.mxu0 %v1508
    %2580 = vmatprep.subr.mxu0 %v1513
    %2581 = vmatpush1.msra.mxu0 %v1512
    %2582 = vmatprep.subr.mxu0 %v1517
    %2583 = vmatpush1.msra.mxu0 %v1516
    %2584 = vmatprep.subr.mxu0 %v1521
    %2585 = vmatpush1.msra.mxu0 %v1520
    %2586 = vmatprep.subr.mxu0 %v1525
    %2587 = vmatpush1.msra.mxu0 %v1524
    %2588 = vmatprep.subr.mxu0 %v1529
    %2589 = vmatpush1.msra.mxu0 %v1528
    %2590 = vmatprep.subr.mxu0 %v1533
    %2591 = vmatpush1.msra.mxu0 %v1532
    %2592 = vmatprep.subr.mxu0 %v1537
    %2593 = vmatpush1.msra.mxu0 %v1536
    %2594 = vmatprep.subr.mxu0 %v1541
    %2595 = vmatpush1.msra.mxu0 %v1540
    %2596 = vmatprep.subr.mxu0 %v1545
    %2597 = vmatpush1.msra.mxu0 %v1544
    %2598 = vmatprep.subr.mxu0 %v1549
    %2599 = vmatpush1.msra.mxu0 %v1548
    %2600 = vmatprep.subr.mxu0 %v1553
    %2601 = vmatpush1.msra.mxu0 %v1552
    %2602 = vmatprep.subr.mxu0 %v1557
    %2603 = vmatpush1.msra.mxu0 %v1556
    %2604 = vmatprep.subr.mxu0 %v1561
    %2605 = vmatpush1.msra.mxu0 %v1560
    %2606 = vmatprep.mubr.f32.mxu0 %v1726
    %2607 = vmatmul.mubr.f32.gmra.mrb[0].mxu0 %v1724
    %v2608 = vpop.f32.mrb[0].mxu0
    %v2609 = vadd.f32 %v2538, %v2608
    %v2610 = vpop.f32.mrb[0].mxu0
    %v2611 = vadd.f32 %v2540, %v2610
    %2612 = vdwg.mxu0
    %2613 = vmatprep.subr.mxu0 %v1565
    %2614 = vmatpush1.msra.mxu0 %v1564
    %2615 = vmatprep.subr.mxu0 %v1569
    %2616 = vmatpush1.msra.mxu0 %v1568
    %2617 = vmatprep.subr.mxu0 %v1573
    %2618 = vmatpush1.msra.mxu0 %v1572
    %2619 = vmatprep.subr.mxu0 %v1577
    %2620 = vmatpush1.msra.mxu0 %v1576
    %2621 = vmatprep.subr.mxu0 %v1581
    %2622 = vmatpush1.msra.mxu0 %v1580
    %2623 = vmatprep.subr.mxu0 %v1585
    %2624 = vmatpush1.msra.mxu0 %v1584
    %2625 = vmatprep.subr.mxu0 %v1589
    %2626 = vmatpush1.msra.mxu0 %v1588
    %2627 = vmatprep.subr.mxu0 %v1593
    %2628 = vmatpush1.msra.mxu0 %v1592
    %2629 = vmatprep.subr.mxu0 0.0
    %2630 = vmatpush1.msra.mxu0 0.0
    %2631 = vmatprep.subr.mxu0 0.0
    %2632 = vmatpush1.msra.mxu0 0.0
    %2633 = vmatprep.subr.mxu0 0.0
    %2634 = vmatpush1.msra.mxu0 0.0
    %2635 = vmatprep.subr.mxu0 0.0
    %2636 = vmatpush1.msra.mxu0 0.0
    %2637 = vmatprep.subr.mxu0 0.0
    %2638 = vmatpush1.msra.mxu0 0.0
    %2639 = vmatprep.subr.mxu0 0.0
    %2640 = vmatpush1.msra.mxu0 0.0
    %2641 = vmatprep.subr.mxu0 0.0
    %2642 = vmatpush1.msra.mxu0 0.0
    %2643 = vmatprep.subr.mxu0 0.0
    %2644 = vmatpush1.msra.mxu0 0.0
    %2645 = vmatprep.subr.mxu0 0.0
    %2646 = vmatpush1.msra.mxu0 0.0
    %2647 = vmatprep.subr.mxu0 0.0
    %2648 = vmatpush1.msra.mxu0 0.0
    %2649 = vmatprep.subr.mxu0 0.0
    %2650 = vmatpush1.msra.mxu0 0.0
    %2651 = vmatprep.subr.mxu0 0.0
    %2652 = vmatpush1.msra.mxu0 0.0
    %2653 = vmatprep.subr.mxu0 0.0
    %2654 = vmatpush1.msra.mxu0 0.0
    %2655 = vmatprep.subr.mxu0 0.0
    %2656 = vmatpush1.msra.mxu0 0.0
    %2657 = vmatprep.subr.mxu0 0.0
    %2658 = vmatpush1.msra.mxu0 0.0
    %2659 = vmatprep.subr.mxu0 0.0
    %2660 = vmatpush1.msra.mxu0 0.0
    %2661 = vmatprep.subr.mxu0 0.0
    %2662 = vmatpush1.msra.mxu0 0.0
    %2663 = vmatprep.subr.mxu0 0.0
    %2664 = vmatpush1.msra.mxu0 0.0
    %2665 = vmatprep.subr.mxu0 0.0
    %2666 = vmatpush1.msra.mxu0 0.0
    %2667 = vmatprep.subr.mxu0 0.0
    %2668 = vmatpush1.msra.mxu0 0.0
    %2669 = vmatprep.subr.mxu0 0.0
    %2670 = vmatpush1.msra.mxu0 0.0
    %2671 = vmatprep.subr.mxu0 0.0
    %2672 = vmatpush1.msra.mxu0 0.0
    %2673 = vmatprep.subr.mxu0 0.0
    %2674 = vmatpush1.msra.mxu0 0.0
    %2675 = vmatprep.subr.mxu0 0.0
    %2676 = vmatpush1.msra.mxu0 0.0
    %2677 = vmatprep.mubr.f32.mxu0 0.0
    %2678 = vmatmul.mubr.f32.gmra.mrb[0].mxu0 %v1759
    %v2679 = vpop.f32.mrb[0].mxu0
    %v2680 = vadd.f32 %v2609, %v2679
    %v2681 = vpop.f32.mrb[0].mxu0
    %v2682 = vadd.f32 %v2611, %v2681
    %2683 = vdwg.mxu0
    %2684 = vmatprep.subr.mxu0 %v31
    %2685 = vmatpush1.msra.mxu0 %v30
    %2686 = vmatprep.subr.mxu0 %v35
    %2687 = vmatpush1.msra.mxu0 %v34
    %2688 = vmatprep.subr.mxu0 %v39
    %2689 = vmatpush1.msra.mxu0 %v38
    %2690 = vmatprep.subr.mxu0 %v43
    %2691 = vmatpush1.msra.mxu0 %v42
    %2692 = vmatprep.subr.mxu0 %v47
    %2693 = vmatpush1.msra.mxu0 %v46
    %2694 = vmatprep.subr.mxu0 %v51
    %2695 = vmatpush1.msra.mxu0 %v50
    %2696 = vmatprep.subr.mxu0 %v55
    %2697 = vmatpush1.msra.mxu0 %v54
    %2698 = vmatprep.subr.mxu0 %v59
    %2699 = vmatpush1.msra.mxu0 %v58
    %2700 = vmatprep.subr.mxu0 %v63
    %2701 = vmatpush1.msra.mxu0 %v62
    %2702 = vmatprep.subr.mxu0 %v67
    %2703 = vmatpush1.msra.mxu0 %v66
    %2704 = vmatprep.subr.mxu0 %v71
    %2705 = vmatpush1.msra.mxu0 %v70
    %2706 = vmatprep.subr.mxu0 %v75
    %2707 = vmatpush1.msra.mxu0 %v74
    %2708 = vmatprep.subr.mxu0 %v79
    %2709 = vmatpush1.msra.mxu0 %v78
    %2710 = vmatprep.subr.mxu0 %v83
    %2711 = vmatpush1.msra.mxu0 %v82
    %2712 = vmatprep.subr.mxu0 %v87
    %2713 = vmatpush1.msra.mxu0 %v86
    %2714 = vmatprep.subr.mxu0 %v91
    %2715 = vmatpush1.msra.mxu0 %v90
    %2716 = vmatprep.subr.mxu0 %v95
    %2717 = vmatpush1.msra.mxu0 %v94
    %2718 = vmatprep.subr.mxu0 %v99
    %2719 = vmatpush1.msra.mxu0 %v98
    %2720 = vmatprep.subr.mxu0 %v103
    %2721 = vmatpush1.msra.mxu0 %v102
    %2722 = vmatprep.subr.mxu0 %v107
    %2723 = vmatpush1.msra.mxu0 %v106
    %2724 = vmatprep.subr.mxu0 %v111
    %2725 = vmatpush1.msra.mxu0 %v110
    %2726 = vmatprep.subr.mxu0 %v115
    %2727 = vmatpush1.msra.mxu0 %v114
    %2728 = vmatprep.subr.mxu0 %v119
    %2729 = vmatpush1.msra.mxu0 %v118
    %2730 = vmatprep.subr.mxu0 %v123
    %2731 = vmatpush1.msra.mxu0 %v122
    %2732 = vmatprep.subr.mxu0 %v127
    %2733 = vmatpush1.msra.mxu0 %v126
    %2734 = vmatprep.subr.mxu0 %v131
    %2735 = vmatpush1.msra.mxu0 %v130
    %2736 = vmatprep.subr.mxu0 %v135
    %2737 = vmatpush1.msra.mxu0 %v134
    %2738 = vmatprep.subr.mxu0 %v139
    %2739 = vmatpush1.msra.mxu0 %v138
    %2740 = vmatprep.subr.mxu0 %v143
    %2741 = vmatpush1.msra.mxu0 %v142
    %2742 = vmatprep.subr.mxu0 %v147
    %2743 = vmatpush1.msra.mxu0 %v146
    %2744 = vmatprep.subr.mxu0 %v151
    %2745 = vmatpush1.msra.mxu0 %v150
    %2746 = vmatprep.subr.mxu0 %v155
    %2747 = vmatpush1.msra.mxu0 %v154
    %2748 = vmatprep.mubr.f32.mxu0 %v1640
    %2749 = vmatmul.mubr.f32.gmra.mrb[0].mxu0 %v1632
    %v2750 = vpop.f32.mrb[0].mxu0
    %v2751 = vadd.f32 %v1609, %v2750
    %v2752 = vpop.f32.mrb[0].mxu0
    %v2753 = vadd.f32 %v1613, %v2752
    %2754 = vdwg.mxu0
    %2755 = vmatprep.subr.mxu0 %v159
    %2756 = vmatpush1.msra.mxu0 %v158
    %2757 = vmatprep.subr.mxu0 %v163
    %2758 = vmatpush1.msra.mxu0 %v162
    %2759 = vmatprep.subr.mxu0 %v167
    %2760 = vmatpush1.msra.mxu0 %v166
    %2761 = vmatprep.subr.mxu0 %v171
    %2762 = vmatpush1.msra.mxu0 %v170
    %2763 = vmatprep.subr.mxu0 %v175
    %2764 = vmatpush1.msra.mxu0 %v174
    %2765 = vmatprep.subr.mxu0 %v179
    %2766 = vmatpush1.msra.mxu0 %v178
    %2767 = vmatprep.subr.mxu0 %v183
    %2768 = vmatpush1.msra.mxu0 %v182
    %2769 = vmatprep.subr.mxu0 %v187
    %2770 = vmatpush1.msra.mxu0 %v186
    %2771 = vmatprep.subr.mxu0 %v191
    %2772 = vmatpush1.msra.mxu0 %v190
    %2773 = vmatprep.subr.mxu0 %v195
    %2774 = vmatpush1.msra.mxu0 %v194
    %2775 = vmatprep.subr.mxu0 %v199
    %2776 = vmatpush1.msra.mxu0 %v198
    %2777 = vmatprep.subr.mxu0 %v203
    %2778 = vmatpush1.msra.mxu0 %v202
    %2779 = vmatprep.subr.mxu0 %v207
    %2780 = vmatpush1.msra.mxu0 %v206
    %2781 = vmatprep.subr.mxu0 %v211
    %2782 = vmatpush1.msra.mxu0 %v210
    %2783 = vmatprep.subr.mxu0 %v215
    %2784 = vmatpush1.msra.mxu0 %v214
    %2785 = vmatprep.subr.mxu0 %v219
    %2786 = vmatpush1.msra.mxu0 %v218
    %2787 = vmatprep.subr.mxu0 %v223
    %2788 = vmatpush1.msra.mxu0 %v222
    %2789 = vmatprep.subr.mxu0 %v227
    %2790 = vmatpush1.msra.mxu0 %v226
    %2791 = vmatprep.subr.mxu0 %v231
    %2792 = vmatpush1.msra.mxu0 %v230
    %2793 = vmatprep.subr.mxu0 %v235
    %2794 = vmatpush1.msra.mxu0 %v234
    %2795 = vmatprep.subr.mxu0 %v239
    %2796 = vmatpush1.msra.mxu0 %v238
    %2797 = vmatprep.subr.mxu0 %v243
    %2798 = vmatpush1.msra.mxu0 %v242
    %2799 = vmatprep.subr.mxu0 %v247
    %2800 = vmatpush1.msra.mxu0 %v246
    %2801 = vmatprep.subr.mxu0 %v251
    %2802 = vmatpush1.msra.mxu0 %v250
    %2803 = vmatprep.subr.mxu0 %v255
    %2804 = vmatpush1.msra.mxu0 %v254
    %2805 = vmatprep.subr.mxu0 %v259
    %2806 = vmatpush1.msra.mxu0 %v258
    %2807 = vmatprep.subr.mxu0 %v263
    %2808 = vmatpush1.msra.mxu0 %v262
    %2809 = vmatprep.subr.mxu0 %v267
    %2810 = vmatpush1.msra.mxu0 %v266
    %2811 = vmatprep.subr.mxu0 %v271
    %2812 = vmatpush1.msra.mxu0 %v270
    %2813 = vmatprep.subr.mxu0 %v275
    %2814 = vmatpush1.msra.mxu0 %v274
    %2815 = vmatprep.subr.mxu0 %v279
    %2816 = vmatpush1.msra.mxu0 %v278
    %2817 = vmatprep.subr.mxu0 %v283
    %2818 = vmatpush1.msra.mxu0 %v282
    %2819 = vmatprep.mubr.f32.mxu0 %v1641
    %2820 = vmatmul.mubr.f32.gmra.mrb[0].mxu0 %v1639
    %v2821 = vpop.f32.mrb[0].mxu0
    %v2822 = vadd.f32 %v2751, %v2821
    %v2823 = vpop.f32.mrb[0].mxu0
    %v2824 = vadd.f32 %v2753, %v2823
    %2825 = vdwg.mxu0
    %2826 = vmatprep.subr.mxu0 %v287
    %2827 = vmatpush1.msra.mxu0 %v286
    %2828 = vmatprep.subr.mxu0 %v291
    %2829 = vmatpush1.msra.mxu0 %v290
    %2830 = vmatprep.subr.mxu0 %v295
    %2831 = vmatpush1.msra.mxu0 %v294
    %2832 = vmatprep.subr.mxu0 %v299
    %2833 = vmatpush1.msra.mxu0 %v298
    %2834 = vmatprep.subr.mxu0 %v303
    %2835 = vmatpush1.msra.mxu0 %v302
    %2836 = vmatprep.subr.mxu0 %v307
    %2837 = vmatpush1.msra.mxu0 %v306
    %2838 = vmatprep.subr.mxu0 %v311
    %2839 = vmatpush1.msra.mxu0 %v310
    %2840 = vmatprep.subr.mxu0 %v315
    %2841 = vmatpush1.msra.mxu0 %v314
    %2842 = vmatprep.subr.mxu0 %v319
    %2843 = vmatpush1.msra.mxu0 %v318
    %2844 = vmatprep.subr.mxu0 %v323
    %2845 = vmatpush1.msra.mxu0 %v322
    %2846 = vmatprep.subr.mxu0 %v327
    %2847 = vmatpush1.msra.mxu0 %v326
    %2848 = vmatprep.subr.mxu0 %v331
    %2849 = vmatpush1.msra.mxu0 %v330
    %2850 = vmatprep.subr.mxu0 %v335
    %2851 = vmatpush1.msra.mxu0 %v334
    %2852 = vmatprep.subr.mxu0 %v339
    %2853 = vmatpush1.msra.mxu0 %v338
    %2854 = vmatprep.subr.mxu0 %v343
    %2855 = vmatpush1.msra.mxu0 %v342
    %2856 = vmatprep.subr.mxu0 %v347
    %2857 = vmatpush1.msra.mxu0 %v346
    %2858 = vmatprep.subr.mxu0 %v351
    %2859 = vmatpush1.msra.mxu0 %v350
    %2860 = vmatprep.subr.mxu0 %v355
    %2861 = vmatpush1.msra.mxu0 %v354
    %2862 = vmatprep.subr.mxu0 %v359
    %2863 = vmatpush1.msra.mxu0 %v358
    %2864 = vmatprep.subr.mxu0 %v363
    %2865 = vmatpush1.msra.mxu0 %v362
    %2866 = vmatprep.subr.mxu0 %v367
    %2867 = vmatpush1.msra.mxu0 %v366
    %2868 = vmatprep.subr.mxu0 %v371
    %2869 = vmatpush1.msra.mxu0 %v370
    %2870 = vmatprep.subr.mxu0 %v375
    %2871 = vmatpush1.msra.mxu0 %v374
    %2872 = vmatprep.subr.mxu0 %v379
    %2873 = vmatpush1.msra.mxu0 %v378
    %2874 = vmatprep.subr.mxu0 %v383
    %2875 = vmatpush1.msra.mxu0 %v382
    %2876 = vmatprep.subr.mxu0 %v387
    %2877 = vmatpush1.msra.mxu0 %v386
    %2878 = vmatprep.subr.mxu0 %v391
    %2879 = vmatpush1.msra.mxu0 %v390
    %2880 = vmatprep.subr.mxu0 %v395
    %2881 = vmatpush1.msra.mxu0 %v394
    %2882 = vmatprep.subr.mxu0 %v399
    %2883 = vmatpush1.msra.mxu0 %v398
    %2884 = vmatprep.subr.mxu0 %v403
    %2885 = vmatpush1.msra.mxu0 %v402
    %2886 = vmatprep.subr.mxu0 %v407
    %2887 = vmatpush1.msra.mxu0 %v406
    %2888 = vmatprep.subr.mxu0 %v411
    %2889 = vmatpush1.msra.mxu0 %v410
    %2890 = vmatprep.mubr.f32.mxu0 %v1657
    %2891 = vmatmul.mubr.f32.gmra.mrb[0].mxu0 %v1649
    %v2892 = vpop.f32.mrb[0].mxu0
    %v2893 = vadd.f32 %v2822, %v2892
    %v2894 = vpop.f32.mrb[0].mxu0
    %v2895 = vadd.f32 %v2824, %v2894
    %2896 = vdwg.mxu0
    %2897 = vmatprep.subr.mxu0 %v415
    %2898 = vmatpush1.msra.mxu0 %v414
    %2899 = vmatprep.subr.mxu0 %v419
    %2900 = vmatpush1.msra.mxu0 %v418
    %2901 = vmatprep.subr.mxu0 %v423
    %2902 = vmatpush1.msra.mxu0 %v422
    %2903 = vmatprep.subr.mxu0 %v427
    %2904 = vmatpush1.msra.mxu0 %v426
    %2905 = vmatprep.subr.mxu0 %v431
    %2906 = vmatpush1.msra.mxu0 %v430
    %2907 = vmatprep.subr.mxu0 %v435
    %2908 = vmatpush1.msra.mxu0 %v434
    %2909 = vmatprep.subr.mxu0 %v439
    %2910 = vmatpush1.msra.mxu0 %v438
    %2911 = vmatprep.subr.mxu0 %v443
    %2912 = vmatpush1.msra.mxu0 %v442
    %2913 = vmatprep.subr.mxu0 %v447
    %2914 = vmatpush1.msra.mxu0 %v446
    %2915 = vmatprep.subr.mxu0 %v451
    %2916 = vmatpush1.msra.mxu0 %v450
    %2917 = vmatprep.subr.mxu0 %v455
    %2918 = vmatpush1.msra.mxu0 %v454
    %2919 = vmatprep.subr.mxu0 %v459
    %2920 = vmatpush1.msra.mxu0 %v458
    %2921 = vmatprep.subr.mxu0 %v463
    %2922 = vmatpush1.msra.mxu0 %v462
    %2923 = vmatprep.subr.mxu0 %v467
    %2924 = vmatpush1.msra.mxu0 %v466
    %2925 = vmatprep.subr.mxu0 %v471
    %2926 = vmatpush1.msra.mxu0 %v470
    %2927 = vmatprep.subr.mxu0 %v475
    %2928 = vmatpush1.msra.mxu0 %v474
    %2929 = vmatprep.subr.mxu0 %v479
    %2930 = vmatpush1.msra.mxu0 %v478
    %2931 = vmatprep.subr.mxu0 %v483
    %2932 = vmatpush1.msra.mxu0 %v482
    %2933 = vmatprep.subr.mxu0 %v487
    %2934 = vmatpush1.msra.mxu0 %v486
    %2935 = vmatprep.subr.mxu0 %v491
    %2936 = vmatpush1.msra.mxu0 %v490
    %2937 = vmatprep.subr.mxu0 %v495
    %2938 = vmatpush1.msra.mxu0 %v494
    %2939 = vmatprep.subr.mxu0 %v499
    %2940 = vmatpush1.msra.mxu0 %v498
    %2941 = vmatprep.subr.mxu0 %v503
    %2942 = vmatpush1.msra.mxu0 %v502
    %2943 = vmatprep.subr.mxu0 %v507
    %2944 = vmatpush1.msra.mxu0 %v506
    %2945 = vmatprep.subr.mxu0 %v511
    %2946 = vmatpush1.msra.mxu0 %v510
    %2947 = vmatprep.subr.mxu0 %v515
    %2948 = vmatpush1.msra.mxu0 %v514
    %2949 = vmatprep.subr.mxu0 %v519
    %2950 = vmatpush1.msra.mxu0 %v518
    %2951 = vmatprep.subr.mxu0 %v523
    %2952 = vmatpush1.msra.mxu0 %v522
    %2953 = vmatprep.subr.mxu0 %v527
    %2954 = vmatpush1.msra.mxu0 %v526
    %2955 = vmatprep.subr.mxu0 %v531
    %2956 = vmatpush1.msra.mxu0 %v530
    %2957 = vmatprep.subr.mxu0 %v535
    %2958 = vmatpush1.msra.mxu0 %v534
    %2959 = vmatprep.subr.mxu0 %v539
    %2960 = vmatpush1.msra.mxu0 %v538
    %2961 = vmatprep.mubr.f32.mxu0 %v1658
    %2962 = vmatmul.mubr.f32.gmra.mrb[0].mxu0 %v1656
    %v2963 = vpop.f32.mrb[0].mxu0
    %v2964 = vadd.f32 %v2893, %v2963
    %v2965 = vpop.f32.mrb[0].mxu0
    %v2966 = vadd.f32 %v2895, %v2965
    %2967 = vdwg.mxu0
    %2968 = vmatprep.subr.mxu0 %v543
    %2969 = vmatpush1.msra.mxu0 %v542
    %2970 = vmatprep.subr.mxu0 %v547
    %2971 = vmatpush1.msra.mxu0 %v546
    %2972 = vmatprep.subr.mxu0 %v551
    %2973 = vmatpush1.msra.mxu0 %v550
    %2974 = vmatprep.subr.mxu0 %v555
    %2975 = vmatpush1.msra.mxu0 %v554
    %2976 = vmatprep.subr.mxu0 %v559
    %2977 = vmatpush1.msra.mxu0 %v558
    %2978 = vmatprep.subr.mxu0 %v563
    %2979 = vmatpush1.msra.mxu0 %v562
    %2980 = vmatprep.subr.mxu0 %v567
    %2981 = vmatpush1.msra.mxu0 %v566
    %2982 = vmatprep.subr.mxu0 %v571
    %2983 = vmatpush1.msra.mxu0 %v570
    %2984 = vmatprep.subr.mxu0 %v575
    %2985 = vmatpush1.msra.mxu0 %v574
    %2986 = vmatprep.subr.mxu0 %v579
    %2987 = vmatpush1.msra.mxu0 %v578
    %2988 = vmatprep.subr.mxu0 %v583
    %2989 = vmatpush1.msra.mxu0 %v582
    %2990 = vmatprep.subr.mxu0 %v587
    %2991 = vmatpush1.msra.mxu0 %v586
    %2992 = vmatprep.subr.mxu0 %v591
    %2993 = vmatpush1.msra.mxu0 %v590
    %2994 = vmatprep.subr.mxu0 %v595
    %2995 = vmatpush1.msra.mxu0 %v594
    %2996 = vmatprep.subr.mxu0 %v599
    %2997 = vmatpush1.msra.mxu0 %v598
    %2998 = vmatprep.subr.mxu0 %v603
    %2999 = vmatpush1.msra.mxu0 %v602
    %3000 = vmatprep.subr.mxu0 %v607
    %3001 = vmatpush1.msra.mxu0 %v606
    %3002 = vmatprep.subr.mxu0 %v611
    %3003 = vmatpush1.msra.mxu0 %v610
    %3004 = vmatprep.subr.mxu0 %v615
    %3005 = vmatpush1.msra.mxu0 %v614
    %3006 = vmatprep.subr.mxu0 %v619
    %3007 = vmatpush1.msra.mxu0 %v618
    %3008 = vmatprep.subr.mxu0 %v623
    %3009 = vmatpush1.msra.mxu0 %v622
    %3010 = vmatprep.subr.mxu0 %v627
    %3011 = vmatpush1.msra.mxu0 %v626
    %3012 = vmatprep.subr.mxu0 %v631
    %3013 = vmatpush1.msra.mxu0 %v630
    %3014 = vmatprep.subr.mxu0 %v635
    %3015 = vmatpush1.msra.mxu0 %v634
    %3016 = vmatprep.subr.mxu0 %v639
    %3017 = vmatpush1.msra.mxu0 %v638
    %3018 = vmatprep.subr.mxu0 %v643
    %3019 = vmatpush1.msra.mxu0 %v642
    %3020 = vmatprep.subr.mxu0 %v647
    %3021 = vmatpush1.msra.mxu0 %v646
    %3022 = vmatprep.subr.mxu0 %v651
    %3023 = vmatpush1.msra.mxu0 %v650
    %3024 = vmatprep.subr.mxu0 %v655
    %3025 = vmatpush1.msra.mxu0 %v654
    %3026 = vmatprep.subr.mxu0 %v659
    %3027 = vmatpush1.msra.mxu0 %v658
    %3028 = vmatprep.subr.mxu0 %v663
    %3029 = vmatpush1.msra.mxu0 %v662
    %3030 = vmatprep.subr.mxu0 %v667
    %3031 = vmatpush1.msra.mxu0 %v666
    %3032 = vmatprep.mubr.f32.mxu0 %v1674
    %3033 = vmatmul.mubr.f32.gmra.mrb[0].mxu0 %v1666
    %v3034 = vpop.f32.mrb[0].mxu0
    %v3035 = vadd.f32 %v2964, %v3034
    %v3036 = vpop.f32.mrb[0].mxu0
    %v3037 = vadd.f32 %v2966, %v3036
    %3038 = vdwg.mxu0
    %3039 = vmatprep.subr.mxu0 %v671
    %3040 = vmatpush1.msra.mxu0 %v670
    %3041 = vmatprep.subr.mxu0 %v675
    %3042 = vmatpush1.msra.mxu0 %v674
    %3043 = vmatprep.subr.mxu0 %v679
    %3044 = vmatpush1.msra.mxu0 %v678
    %3045 = vmatprep.subr.mxu0 %v683
    %3046 = vmatpush1.msra.mxu0 %v682
    %3047 = vmatprep.subr.mxu0 %v687
    %3048 = vmatpush1.msra.mxu0 %v686
    %3049 = vmatprep.subr.mxu0 %v691
    %3050 = vmatpush1.msra.mxu0 %v690
    %3051 = vmatprep.subr.mxu0 %v695
    %3052 = vmatpush1.msra.mxu0 %v694
    %3053 = vmatprep.subr.mxu0 %v699
    %3054 = vmatpush1.msra.mxu0 %v698
    %3055 = vmatprep.subr.mxu0 %v703
    %3056 = vmatpush1.msra.mxu0 %v702
    %3057 = vmatprep.subr.mxu0 %v707
    %3058 = vmatpush1.msra.mxu0 %v706
    %3059 = vmatprep.subr.mxu0 %v711
    %3060 = vmatpush1.msra.mxu0 %v710
    %3061 = vmatprep.subr.mxu0 %v715
    %3062 = vmatpush1.msra.mxu0 %v714
    %3063 = vmatprep.subr.mxu0 %v719
    %3064 = vmatpush1.msra.mxu0 %v718
    %3065 = vmatprep.subr.mxu0 %v723
    %3066 = vmatpush1.msra.mxu0 %v722
    %3067 = vmatprep.subr.mxu0 %v727
    %3068 = vmatpush1.msra.mxu0 %v726
    %3069 = vmatprep.subr.mxu0 %v731
    %3070 = vmatpush1.msra.mxu0 %v730
    %3071 = vmatprep.subr.mxu0 %v735
    %3072 = vmatpush1.msra.mxu0 %v734
    %3073 = vmatprep.subr.mxu0 %v739
    %3074 = vmatpush1.msra.mxu0 %v738
    %3075 = vmatprep.subr.mxu0 %v743
    %3076 = vmatpush1.msra.mxu0 %v742
    %3077 = vmatprep.subr.mxu0 %v747
    %3078 = vmatpush1.msra.mxu0 %v746
    %3079 = vmatprep.subr.mxu0 %v751
    %3080 = vmatpush1.msra.mxu0 %v750
    %3081 = vmatprep.subr.mxu0 %v755
    %3082 = vmatpush1.msra.mxu0 %v754
    %3083 = vmatprep.subr.mxu0 %v759
    %3084 = vmatpush1.msra.mxu0 %v758
    %3085 = vmatprep.subr.mxu0 %v763
    %3086 = vmatpush1.msra.mxu0 %v762
    %3087 = vmatprep.subr.mxu0 %v767
    %3088 = vmatpush1.msra.mxu0 %v766
    %3089 = vmatprep.subr.mxu0 %v771
    %3090 = vmatpush1.msra.mxu0 %v770
    %3091 = vmatprep.subr.mxu0 %v775
    %3092 = vmatpush1.msra.mxu0 %v774
    %3093 = vmatprep.subr.mxu0 %v779
    %3094 = vmatpush1.msra.mxu0 %v778
    %3095 = vmatprep.subr.mxu0 %v783
    %3096 = vmatpush1.msra.mxu0 %v782
    %3097 = vmatprep.subr.mxu0 %v787
    %3098 = vmatpush1.msra.mxu0 %v786
    %3099 = vmatprep.subr.mxu0 %v791
    %3100 = vmatpush1.msra.mxu0 %v790
    %3101 = vmatprep.subr.mxu0 %v795
    %3102 = vmatpush1.msra.mxu0 %v794
    %3103 = vmatprep.mubr.f32.mxu0 %v1675
    %3104 = vmatmul.mubr.f32.gmra.mrb[0].mxu0 %v1673
    %v3105 = vpop.f32.mrb[0].mxu0
    %v3106 = vadd.f32 %v3035, %v3105
    %v3107 = vpop.f32.mrb[0].mxu0
    %v3108 = vadd.f32 %v3037, %v3107
    %3109 = vdwg.mxu0
    %3110 = vmatprep.subr.mxu0 %v799
    %3111 = vmatpush1.msra.mxu0 %v798
    %3112 = vmatprep.subr.mxu0 %v803
    %3113 = vmatpush1.msra.mxu0 %v802
    %3114 = vmatprep.subr.mxu0 %v807
    %3115 = vmatpush1.msra.mxu0 %v806
    %3116 = vmatprep.subr.mxu0 %v811
    %3117 = vmatpush1.msra.mxu0 %v810
    %3118 = vmatprep.subr.mxu0 %v815
    %3119 = vmatpush1.msra.mxu0 %v814
    %3120 = vmatprep.subr.mxu0 %v819
    %3121 = vmatpush1.msra.mxu0 %v818
    %3122 = vmatprep.subr.mxu0 %v823
    %3123 = vmatpush1.msra.mxu0 %v822
    %3124 = vmatprep.subr.mxu0 %v827
    %3125 = vmatpush1.msra.mxu0 %v826
    %3126 = vmatprep.subr.mxu0 %v831
    %3127 = vmatpush1.msra.mxu0 %v830
    %3128 = vmatprep.subr.mxu0 %v835
    %3129 = vmatpush1.msra.mxu0 %v834
    %3130 = vmatprep.subr.mxu0 %v839
    %3131 = vmatpush1.msra.mxu0 %v838
    %3132 = vmatprep.subr.mxu0 %v843
    %3133 = vmatpush1.msra.mxu0 %v842
    %3134 = vmatprep.subr.mxu0 %v847
    %3135 = vmatpush1.msra.mxu0 %v846
    %3136 = vmatprep.subr.mxu0 %v851
    %3137 = vmatpush1.msra.mxu0 %v850
    %3138 = vmatprep.subr.mxu0 %v855
    %3139 = vmatpush1.msra.mxu0 %v854
    %3140 = vmatprep.subr.mxu0 %v859
    %3141 = vmatpush1.msra.mxu0 %v858
    %3142 = vmatprep.subr.mxu0 %v863
    %3143 = vmatpush1.msra.mxu0 %v862
    %3144 = vmatprep.subr.mxu0 %v867
    %3145 = vmatpush1.msra.mxu0 %v866
    %3146 = vmatprep.subr.mxu0 %v871
    %3147 = vmatpush1.msra.mxu0 %v870
    %3148 = vmatprep.subr.mxu0 %v875
    %3149 = vmatpush1.msra.mxu0 %v874
    %3150 = vmatprep.subr.mxu0 %v879
    %3151 = vmatpush1.msra.mxu0 %v878
    %3152 = vmatprep.subr.mxu0 %v883
    %3153 = vmatpush1.msra.mxu0 %v882
    %3154 = vmatprep.subr.mxu0 %v887
    %3155 = vmatpush1.msra.mxu0 %v886
    %3156 = vmatprep.subr.mxu0 %v891
    %3157 = vmatpush1.msra.mxu0 %v890
    %3158 = vmatprep.subr.mxu0 %v895
    %3159 = vmatpush1.msra.mxu0 %v894
    %3160 = vmatprep.subr.mxu0 %v899
    %3161 = vmatpush1.msra.mxu0 %v898
    %3162 = vmatprep.subr.mxu0 %v903
    %3163 = vmatpush1.msra.mxu0 %v902
    %3164 = vmatprep.subr.mxu0 %v907
    %3165 = vmatpush1.msra.mxu0 %v906
    %3166 = vmatprep.subr.mxu0 %v911
    %3167 = vmatpush1.msra.mxu0 %v910
    %3168 = vmatprep.subr.mxu0 %v915
    %3169 = vmatpush1.msra.mxu0 %v914
    %3170 = vmatprep.subr.mxu0 %v919
    %3171 = vmatpush1.msra.mxu0 %v918
    %3172 = vmatprep.subr.mxu0 %v923
    %3173 = vmatpush1.msra.mxu0 %v922
    %3174 = vmatprep.mubr.f32.mxu0 %v1691
    %3175 = vmatmul.mubr.f32.gmra.mrb[0].mxu0 %v1683
    %v3176 = vpop.f32.mrb[0].mxu0
    %v3177 = vadd.f32 %v3106, %v3176
    %v3178 = vpop.f32.mrb[0].mxu0
    %v3179 = vadd.f32 %v3108, %v3178
    %3180 = vdwg.mxu0
    %3181 = vmatprep.subr.mxu0 %v927
    %3182 = vmatpush1.msra.mxu0 %v926
    %3183 = vmatprep.subr.mxu0 %v931
    %3184 = vmatpush1.msra.mxu0 %v930
    %3185 = vmatprep.subr.mxu0 %v935
    %3186 = vmatpush1.msra.mxu0 %v934
    %3187 = vmatprep.subr.mxu0 %v939
    %3188 = vmatpush1.msra.mxu0 %v938
    %3189 = vmatprep.subr.mxu0 %v943
    %3190 = vmatpush1.msra.mxu0 %v942
    %3191 = vmatprep.subr.mxu0 %v947
    %3192 = vmatpush1.msra.mxu0 %v946
    %3193 = vmatprep.subr.mxu0 %v951
    %3194 = vmatpush1.msra.mxu0 %v950
    %3195 = vmatprep.subr.mxu0 %v955
    %3196 = vmatpush1.msra.mxu0 %v954
    %3197 = vmatprep.subr.mxu0 %v959
    %3198 = vmatpush1.msra.mxu0 %v958
    %3199 = vmatprep.subr.mxu0 %v963
    %3200 = vmatpush1.msra.mxu0 %v962
    %3201 = vmatprep.subr.mxu0 %v967
    %3202 = vmatpush1.msra.mxu0 %v966
    %3203 = vmatprep.subr.mxu0 %v971
    %3204 = vmatpush1.msra.mxu0 %v970
    %3205 = vmatprep.subr.mxu0 %v975
    %3206 = vmatpush1.msra.mxu0 %v974
    %3207 = vmatprep.subr.mxu0 %v979
    %3208 = vmatpush1.msra.mxu0 %v978
    %3209 = vmatprep.subr.mxu0 %v983
    %3210 = vmatpush1.msra.mxu0 %v982
    %3211 = vmatprep.subr.mxu0 %v987
    %3212 = vmatpush1.msra.mxu0 %v986
    %3213 = vmatprep.subr.mxu0 %v991
    %3214 = vmatpush1.msra.mxu0 %v990
    %3215 = vmatprep.subr.mxu0 %v995
    %3216 = vmatpush1.msra.mxu0 %v994
    %3217 = vmatprep.subr.mxu0 %v999
    %3218 = vmatpush1.msra.mxu0 %v998
    %3219 = vmatprep.subr.mxu0 %v1003
    %3220 = vmatpush1.msra.mxu0 %v1002
    %3221 = vmatprep.subr.mxu0 %v1007
    %3222 = vmatpush1.msra.mxu0 %v1006
    %3223 = vmatprep.subr.mxu0 %v1011
    %3224 = vmatpush1.msra.mxu0 %v1010
    %3225 = vmatprep.subr.mxu0 %v1015
    %3226 = vmatpush1.msra.mxu0 %v1014
    %3227 = vmatprep.subr.mxu0 %v1019
    %3228 = vmatpush1.msra.mxu0 %v1018
    %3229 = vmatprep.subr.mxu0 %v1023
    %3230 = vmatpush1.msra.mxu0 %v1022
    %3231 = vmatprep.subr.mxu0 %v1027
    %3232 = vmatpush1.msra.mxu0 %v1026
    %3233 = vmatprep.subr.mxu0 %v1031
    %3234 = vmatpush1.msra.mxu0 %v1030
    %3235 = vmatprep.subr.mxu0 %v1035
    %3236 = vmatpush1.msra.mxu0 %v1034
    %3237 = vmatprep.subr.mxu0 %v1039
    %3238 = vmatpush1.msra.mxu0 %v1038
    %3239 = vmatprep.subr.mxu0 %v1043
    %3240 = vmatpush1.msra.mxu0 %v1042
    %3241 = vmatprep.subr.mxu0 %v1047
    %3242 = vmatpush1.msra.mxu0 %v1046
    %3243 = vmatprep.subr.mxu0 %v1051
    %3244 = vmatpush1.msra.mxu0 %v1050
    %3245 = vmatprep.mubr.f32.mxu0 %v1692
    %3246 = vmatmul.mubr.f32.gmra.mrb[0].mxu0 %v1690
    %v3247 = vpop.f32.mrb[0].mxu0
    %v3248 = vadd.f32 %v3177, %v3247
    %v3249 = vpop.f32.mrb[0].mxu0
    %v3250 = vadd.f32 %v3179, %v3249
    %3251 = vdwg.mxu0
    %3252 = vmatprep.subr.mxu0 %v1055
    %3253 = vmatpush1.msra.mxu0 %v1054
    %3254 = vmatprep.subr.mxu0 %v1059
    %3255 = vmatpush1.msra.mxu0 %v1058
    %3256 = vmatprep.subr.mxu0 %v1063
    %3257 = vmatpush1.msra.mxu0 %v1062
    %3258 = vmatprep.subr.mxu0 %v1067
    %3259 = vmatpush1.msra.mxu0 %v1066
    %3260 = vmatprep.subr.mxu0 %v1071
    %3261 = vmatpush1.msra.mxu0 %v1070
    %3262 = vmatprep.subr.mxu0 %v1075
    %3263 = vmatpush1.msra.mxu0 %v1074
    %3264 = vmatprep.subr.mxu0 %v1079
    %3265 = vmatpush1.msra.mxu0 %v1078
    %3266 = vmatprep.subr.mxu0 %v1083
    %3267 = vmatpush1.msra.mxu0 %v1082
    %3268 = vmatprep.subr.mxu0 %v1087
    %3269 = vmatpush1.msra.mxu0 %v1086
    %3270 = vmatprep.subr.mxu0 %v1091
    %3271 = vmatpush1.msra.mxu0 %v1090
    %3272 = vmatprep.subr.mxu0 %v1095
    %3273 = vmatpush1.msra.mxu0 %v1094
    %3274 = vmatprep.subr.mxu0 %v1099
    %3275 = vmatpush1.msra.mxu0 %v1098
    %3276 = vmatprep.subr.mxu0 %v1103
    %3277 = vmatpush1.msra.mxu0 %v1102
    %3278 = vmatprep.subr.mxu0 %v1107
    %3279 = vmatpush1.msra.mxu0 %v1106
    %3280 = vmatprep.subr.mxu0 %v1111
    %3281 = vmatpush1.msra.mxu0 %v1110
    %3282 = vmatprep.subr.mxu0 %v1115
    %3283 = vmatpush1.msra.mxu0 %v1114
    %3284 = vmatprep.subr.mxu0 %v1119
    %3285 = vmatpush1.msra.mxu0 %v1118
    %3286 = vmatprep.subr.mxu0 %v1123
    %3287 = vmatpush1.msra.mxu0 %v1122
    %3288 = vmatprep.subr.mxu0 %v1127
    %3289 = vmatpush1.msra.mxu0 %v1126
    %3290 = vmatprep.subr.mxu0 %v1131
    %3291 = vmatpush1.msra.mxu0 %v1130
    %3292 = vmatprep.subr.mxu0 %v1135
    %3293 = vmatpush1.msra.mxu0 %v1134
    %3294 = vmatprep.subr.mxu0 %v1139
    %3295 = vmatpush1.msra.mxu0 %v1138
    %3296 = vmatprep.subr.mxu0 %v1143
    %3297 = vmatpush1.msra.mxu0 %v1142
    %3298 = vmatprep.subr.mxu0 %v1147
    %3299 = vmatpush1.msra.mxu0 %v1146
    %3300 = vmatprep.subr.mxu0 %v1151
    %3301 = vmatpush1.msra.mxu0 %v1150
    %3302 = vmatprep.subr.mxu0 %v1155
    %3303 = vmatpush1.msra.mxu0 %v1154
    %3304 = vmatprep.subr.mxu0 %v1159
    %3305 = vmatpush1.msra.mxu0 %v1158
    %3306 = vmatprep.subr.mxu0 %v1163
    %3307 = vmatpush1.msra.mxu0 %v1162
    %3308 = vmatprep.subr.mxu0 %v1167
    %3309 = vmatpush1.msra.mxu0 %v1166
    %3310 = vmatprep.subr.mxu0 %v1171
    %3311 = vmatpush1.msra.mxu0 %v1170
    %3312 = vmatprep.subr.mxu0 %v1175
    %3313 = vmatpush1.msra.mxu0 %v1174
    %3314 = vmatprep.subr.mxu0 %v1179
    %3315 = vmatpush1.msra.mxu0 %v1178
    %3316 = vmatprep.mubr.f32.mxu0 %v1708
    %3317 = vmatmul.mubr.f32.gmra.mrb[0].mxu0 %v1700
    %v3318 = vpop.f32.mrb[0].mxu0
    %v3319 = vadd.f32 %v3248, %v3318
    %v3320 = vpop.f32.mrb[0].mxu0
    %v3321 = vadd.f32 %v3250, %v3320
    %3322 = vdwg.mxu0
    %3323 = vmatprep.subr.mxu0 %v1183
    %3324 = vmatpush1.msra.mxu0 %v1182
    %3325 = vmatprep.subr.mxu0 %v1187
    %3326 = vmatpush1.msra.mxu0 %v1186
    %3327 = vmatprep.subr.mxu0 %v1191
    %3328 = vmatpush1.msra.mxu0 %v1190
    %3329 = vmatprep.subr.mxu0 %v1195
    %3330 = vmatpush1.msra.mxu0 %v1194
    %3331 = vmatprep.subr.mxu0 %v1199
    %3332 = vmatpush1.msra.mxu0 %v1198
    %3333 = vmatprep.subr.mxu0 %v1203
    %3334 = vmatpush1.msra.mxu0 %v1202
    %3335 = vmatprep.subr.mxu0 %v1207
    %3336 = vmatpush1.msra.mxu0 %v1206
    %3337 = vmatprep.subr.mxu0 %v1211
    %3338 = vmatpush1.msra.mxu0 %v1210
    %3339 = vmatprep.subr.mxu0 %v1215
    %3340 = vmatpush1.msra.mxu0 %v1214
    %3341 = vmatprep.subr.mxu0 %v1219
    %3342 = vmatpush1.msra.mxu0 %v1218
    %3343 = vmatprep.subr.mxu0 %v1223
    %3344 = vmatpush1.msra.mxu0 %v1222
    %3345 = vmatprep.subr.mxu0 %v1227
    %3346 = vmatpush1.msra.mxu0 %v1226
    %3347 = vmatprep.subr.mxu0 %v1231
    %3348 = vmatpush1.msra.mxu0 %v1230
    %3349 = vmatprep.subr.mxu0 %v1235
    %3350 = vmatpush1.msra.mxu0 %v1234
    %3351 = vmatprep.subr.mxu0 %v1239
    %3352 = vmatpush1.msra.mxu0 %v1238
    %3353 = vmatprep.subr.mxu0 %v1243
    %3354 = vmatpush1.msra.mxu0 %v1242
    %3355 = vmatprep.subr.mxu0 %v1247
    %3356 = vmatpush1.msra.mxu0 %v1246
    %3357 = vmatprep.subr.mxu0 %v1251
    %3358 = vmatpush1.msra.mxu0 %v1250
    %3359 = vmatprep.subr.mxu0 %v1255
    %3360 = vmatpush1.msra.mxu0 %v1254
    %3361 = vmatprep.subr.mxu0 %v1259
    %3362 = vmatpush1.msra.mxu0 %v1258
    %3363 = vmatprep.subr.mxu0 %v1263
    %3364 = vmatpush1.msra.mxu0 %v1262
    %3365 = vmatprep.subr.mxu0 %v1267
    %3366 = vmatpush1.msra.mxu0 %v1266
    %3367 = vmatprep.subr.mxu0 %v1271
    %3368 = vmatpush1.msra.mxu0 %v1270
    %3369 = vmatprep.subr.mxu0 %v1275
    %3370 = vmatpush1.msra.mxu0 %v1274
    %3371 = vmatprep.subr.mxu0 %v1279
    %3372 = vmatpush1.msra.mxu0 %v1278
    %3373 = vmatprep.subr.mxu0 %v1283
    %3374 = vmatpush1.msra.mxu0 %v1282
    %3375 = vmatprep.subr.mxu0 %v1287
    %3376 = vmatpush1.msra.mxu0 %v1286
    %3377 = vmatprep.subr.mxu0 %v1291
    %3378 = vmatpush1.msra.mxu0 %v1290
    %3379 = vmatprep.subr.mxu0 %v1295
    %3380 = vmatpush1.msra.mxu0 %v1294
    %3381 = vmatprep.subr.mxu0 %v1299
    %3382 = vmatpush1.msra.mxu0 %v1298
    %3383 = vmatprep.subr.mxu0 %v1303
    %3384 = vmatpush1.msra.mxu0 %v1302
    %3385 = vmatprep.subr.mxu0 %v1307
    %3386 = vmatpush1.msra.mxu0 %v1306
    %3387 = vmatprep.mubr.f32.mxu0 %v1709
    %3388 = vmatmul.mubr.f32.gmra.mrb[0].mxu0 %v1707
    %v3389 = vpop.f32.mrb[0].mxu0
    %v3390 = vadd.f32 %v3319, %v3389
    %v3391 = vpop.f32.mrb[0].mxu0
    %v3392 = vadd.f32 %v3321, %v3391
    %3393 = vdwg.mxu0
    %3394 = vmatprep.subr.mxu0 %v1311
    %3395 = vmatpush1.msra.mxu0 %v1310
    %3396 = vmatprep.subr.mxu0 %v1315
    %3397 = vmatpush1.msra.mxu0 %v1314
    %3398 = vmatprep.subr.mxu0 %v1319
    %3399 = vmatpush1.msra.mxu0 %v1318
    %3400 = vmatprep.subr.mxu0 %v1323
    %3401 = vmatpush1.msra.mxu0 %v1322
    %3402 = vmatprep.subr.mxu0 %v1327
    %3403 = vmatpush1.msra.mxu0 %v1326
    %3404 = vmatprep.subr.mxu0 %v1331
    %3405 = vmatpush1.msra.mxu0 %v1330
    %3406 = vmatprep.subr.mxu0 %v1335
    %3407 = vmatpush1.msra.mxu0 %v1334
    %3408 = vmatprep.subr.mxu0 %v1339
    %3409 = vmatpush1.msra.mxu0 %v1338
    %3410 = vmatprep.subr.mxu0 %v1343
    %3411 = vmatpush1.msra.mxu0 %v1342
    %3412 = vmatprep.subr.mxu0 %v1347
    %3413 = vmatpush1.msra.mxu0 %v1346
    %3414 = vmatprep.subr.mxu0 %v1351
    %3415 = vmatpush1.msra.mxu0 %v1350
    %3416 = vmatprep.subr.mxu0 %v1355
    %3417 = vmatpush1.msra.mxu0 %v1354
    %3418 = vmatprep.subr.mxu0 %v1359
    %3419 = vmatpush1.msra.mxu0 %v1358
    %3420 = vmatprep.subr.mxu0 %v1363
    %3421 = vmatpush1.msra.mxu0 %v1362
    %3422 = vmatprep.subr.mxu0 %v1367
    %3423 = vmatpush1.msra.mxu0 %v1366
    %3424 = vmatprep.subr.mxu0 %v1371
    %3425 = vmatpush1.msra.mxu0 %v1370
    %3426 = vmatprep.subr.mxu0 %v1375
    %3427 = vmatpush1.msra.mxu0 %v1374
    %3428 = vmatprep.subr.mxu0 %v1379
    %3429 = vmatpush1.msra.mxu0 %v1378
    %3430 = vmatprep.subr.mxu0 %v1383
    %3431 = vmatpush1.msra.mxu0 %v1382
    %3432 = vmatprep.subr.mxu0 %v1387
    %3433 = vmatpush1.msra.mxu0 %v1386
    %3434 = vmatprep.subr.mxu0 %v1391
    %3435 = vmatpush1.msra.mxu0 %v1390
    %3436 = vmatprep.subr.mxu0 %v1395
    %3437 = vmatpush1.msra.mxu0 %v1394
    %3438 = vmatprep.subr.mxu0 %v1399
    %3439 = vmatpush1.msra.mxu0 %v1398
    %3440 = vmatprep.subr.mxu0 %v1403
    %3441 = vmatpush1.msra.mxu0 %v1402
    %3442 = vmatprep.subr.mxu0 %v1407
    %3443 = vmatpush1.msra.mxu0 %v1406
    %3444 = vmatprep.subr.mxu0 %v1411
    %3445 = vmatpush1.msra.mxu0 %v1410
    %3446 = vmatprep.subr.mxu0 %v1415
    %3447 = vmatpush1.msra.mxu0 %v1414
    %3448 = vmatprep.subr.mxu0 %v1419
    %3449 = vmatpush1.msra.mxu0 %v1418
    %3450 = vmatprep.subr.mxu0 %v1423
    %3451 = vmatpush1.msra.mxu0 %v1422
    %3452 = vmatprep.subr.mxu0 %v1427
    %3453 = vmatpush1.msra.mxu0 %v1426
    %3454 = vmatprep.subr.mxu0 %v1431
    %3455 = vmatpush1.msra.mxu0 %v1430
    %3456 = vmatprep.subr.mxu0 %v1435
    %3457 = vmatpush1.msra.mxu0 %v1434
    %3458 = vmatprep.mubr.f32.mxu0 %v1725
    %3459 = vmatmul.mubr.f32.gmra.mrb[0].mxu0 %v1717
    %v3460 = vpop.f32.mrb[0].mxu0
    %v3461 = vadd.f32 %v3390, %v3460
    %v3462 = vpop.f32.mrb[0].mxu0
    %v3463 = vadd.f32 %v3392, %v3462
    %3464 = vdwg.mxu0
    %3465 = vmatprep.subr.mxu0 %v1439
    %3466 = vmatpush1.msra.mxu0 %v1438
    %3467 = vmatprep.subr.mxu0 %v1443
    %3468 = vmatpush1.msra.mxu0 %v1442
    %3469 = vmatprep.subr.mxu0 %v1447
    %3470 = vmatpush1.msra.mxu0 %v1446
    %3471 = vmatprep.subr.mxu0 %v1451
    %3472 = vmatpush1.msra.mxu0 %v1450
    %3473 = vmatprep.subr.mxu0 %v1455
    %3474 = vmatpush1.msra.mxu0 %v1454
    %3475 = vmatprep.subr.mxu0 %v1459
    %3476 = vmatpush1.msra.mxu0 %v1458
    %3477 = vmatprep.subr.mxu0 %v1463
    %3478 = vmatpush1.msra.mxu0 %v1462
    %3479 = vmatprep.subr.mxu0 %v1467
    %3480 = vmatpush1.msra.mxu0 %v1466
    %3481 = vmatprep.subr.mxu0 %v1471
    %3482 = vmatpush1.msra.mxu0 %v1470
    %3483 = vmatprep.subr.mxu0 %v1475
    %3484 = vmatpush1.msra.mxu0 %v1474
    %3485 = vmatprep.subr.mxu0 %v1479
    %3486 = vmatpush1.msra.mxu0 %v1478
    %3487 = vmatprep.subr.mxu0 %v1483
    %3488 = vmatpush1.msra.mxu0 %v1482
    %3489 = vmatprep.subr.mxu0 %v1487
    %3490 = vmatpush1.msra.mxu0 %v1486
    %3491 = vmatprep.subr.mxu0 %v1491
    %3492 = vmatpush1.msra.mxu0 %v1490
    %3493 = vmatprep.subr.mxu0 %v1495
    %3494 = vmatpush1.msra.mxu0 %v1494
    %3495 = vmatprep.subr.mxu0 %v1499
    %3496 = vmatpush1.msra.mxu0 %v1498
    %3497 = vmatprep.subr.mxu0 %v1503
    %3498 = vmatpush1.msra.mxu0 %v1502
    %3499 = vmatprep.subr.mxu0 %v1507
    %3500 = vmatpush1.msra.mxu0 %v1506
    %3501 = vmatprep.subr.mxu0 %v1511
    %3502 = vmatpush1.msra.mxu0 %v1510
    %3503 = vmatprep.subr.mxu0 %v1515
    %3504 = vmatpush1.msra.mxu0 %v1514
    %3505 = vmatprep.subr.mxu0 %v1519
    %3506 = vmatpush1.msra.mxu0 %v1518
    %3507 = vmatprep.subr.mxu0 %v1523
    %3508 = vmatpush1.msra.mxu0 %v1522
    %3509 = vmatprep.subr.mxu0 %v1527
    %3510 = vmatpush1.msra.mxu0 %v1526
    %3511 = vmatprep.subr.mxu0 %v1531
    %3512 = vmatpush1.msra.mxu0 %v1530
    %3513 = vmatprep.subr.mxu0 %v1535
    %3514 = vmatpush1.msra.mxu0 %v1534
    %3515 = vmatprep.subr.mxu0 %v1539
    %3516 = vmatpush1.msra.mxu0 %v1538
    %3517 = vmatprep.subr.mxu0 %v1543
    %3518 = vmatpush1.msra.mxu0 %v1542
    %3519 = vmatprep.subr.mxu0 %v1547
    %3520 = vmatpush1.msra.mxu0 %v1546
    %3521 = vmatprep.subr.mxu0 %v1551
    %3522 = vmatpush1.msra.mxu0 %v1550
    %3523 = vmatprep.subr.mxu0 %v1555
    %3524 = vmatpush1.msra.mxu0 %v1554
    %3525 = vmatprep.subr.mxu0 %v1559
    %3526 = vmatpush1.msra.mxu0 %v1558
    %3527 = vmatprep.subr.mxu0 %v1563
    %3528 = vmatpush1.msra.mxu0 %v1562
    %3529 = vmatprep.mubr.f32.mxu0 %v1726
    %3530 = vmatmul.mubr.f32.gmra.mrb[0].mxu0 %v1724
    %v3531 = vpop.f32.mrb[0].mxu0
    %v3532 = vadd.f32 %v3461, %v3531
    %v3533 = vpop.f32.mrb[0].mxu0
    %v3534 = vadd.f32 %v3463, %v3533
    %3535 = vdwg.mxu0
    %3536 = vmatprep.subr.mxu0 %v1567
    %3537 = vmatpush1.msra.mxu0 %v1566
    %3538 = vmatprep.subr.mxu0 %v1571
    %3539 = vmatpush1.msra.mxu0 %v1570
    %3540 = vmatprep.subr.mxu0 %v1575
    %3541 = vmatpush1.msra.mxu0 %v1574
    %3542 = vmatprep.subr.mxu0 %v1579
    %3543 = vmatpush1.msra.mxu0 %v1578
    %3544 = vmatprep.subr.mxu0 %v1583
    %3545 = vmatpush1.msra.mxu0 %v1582
    %3546 = vmatprep.subr.mxu0 %v1587
    %3547 = vmatpush1.msra.mxu0 %v1586
    %3548 = vmatprep.subr.mxu0 %v1591
    %3549 = vmatpush1.msra.mxu0 %v1590
    %3550 = vmatprep.subr.mxu0 %v1595
    %3551 = vmatpush1.msra.mxu0 %v1594
    %3552 = vmatprep.subr.mxu0 0.0
    %3553 = vmatpush1.msra.mxu0 0.0
    %3554 = vmatprep.subr.mxu0 0.0
    %3555 = vmatpush1.msra.mxu0 0.0
    %3556 = vmatprep.subr.mxu0 0.0
    %3557 = vmatpush1.msra.mxu0 0.0
    %3558 = vmatprep.subr.mxu0 0.0
    %3559 = vmatpush1.msra.mxu0 0.0
    %3560 = vmatprep.subr.mxu0 0.0
    %3561 = vmatpush1.msra.mxu0 0.0
    %3562 = vmatprep.subr.mxu0 0.0
    %3563 = vmatpush1.msra.mxu0 0.0
    %3564 = vmatprep.subr.mxu0 0.0
    %3565 = vmatpush1.msra.mxu0 0.0
    %3566 = vmatprep.subr.mxu0 0.0
    %3567 = vmatpush1.msra.mxu0 0.0
    %3568 = vmatprep.subr.mxu0 0.0
    %3569 = vmatpush1.msra.mxu0 0.0
    %3570 = vmatprep.subr.mxu0 0.0
    %3571 = vmatpush1.msra.mxu0 0.0
    %3572 = vmatprep.subr.mxu0 0.0
    %3573 = vmatpush1.msra.mxu0 0.0
    %3574 = vmatprep.subr.mxu0 0.0
    %3575 = vmatpush1.msra.mxu0 0.0
    %3576 = vmatprep.subr.mxu0 0.0
    %3577 = vmatpush1.msra.mxu0 0.0
    %3578 = vmatprep.subr.mxu0 0.0
    %3579 = vmatpush1.msra.mxu0 0.0
    %3580 = vmatprep.subr.mxu0 0.0
    %3581 = vmatpush1.msra.mxu0 0.0
    %3582 = vmatprep.subr.mxu0 0.0
    %3583 = vmatpush1.msra.mxu0 0.0
    %3584 = vmatprep.subr.mxu0 0.0
    %3585 = vmatpush1.msra.mxu0 0.0
    %3586 = vmatprep.subr.mxu0 0.0
    %3587 = vmatpush1.msra.mxu0 0.0
    %3588 = vmatprep.subr.mxu0 0.0
    %3589 = vmatpush1.msra.mxu0 0.0
    %3590 = vmatprep.subr.mxu0 0.0
    %3591 = vmatpush1.msra.mxu0 0.0
    %3592 = vmatprep.subr.mxu0 0.0
    %3593 = vmatpush1.msra.mxu0 0.0
    %3594 = vmatprep.subr.mxu0 0.0
    %3595 = vmatpush1.msra.mxu0 0.0
    %3596 = vmatprep.subr.mxu0 0.0
    %3597 = vmatpush1.msra.mxu0 0.0
    %3598 = vmatprep.subr.mxu0 0.0
    %3599 = vmatpush1.msra.mxu0 0.0
    %3600 = vmatprep.mubr.f32.mxu0 0.0
    %3601 = vmatmul.mubr.f32.gmra.mrb[0].mxu0 %v1759
    %v3602 = vpop.f32.mrb[0].mxu0
    %v3603 = vadd.f32 %v3532, %v3602
    %v3604 = vpop.f32.mrb[0].mxu0
    %v3605 = vadd.f32 %v3534, %v3604
    %3606 = vdwg.mxu0
    %vm3607 = vcmp.gt.f32.partialorder %v2680, 0.0
    %vm3608 = vcmp.gt.f32.partialorder %v2682, 0.0
    %vm3609 = vcmp.gt.f32.partialorder %v3603, 0.0
    %vm3610 = vcmp.gt.f32.partialorder %v3605, 0.0
    %v3611 = vmul.f32 %v2680, 0.1
    %v3612 = vmul.f32 %v2682, 0.1
    %v3613 = vmul.f32 %v3603, 0.1
    %v3614 = vmul.f32 %v3605, 0.1
    %v3615 = vsel %vm3607, %v2680, %v3611
    %v3616 = vsel %vm3608, %v2682, %v3612
    %v3617 = vsel %vm3609, %v3603, %v3613
    %v3618 = vsel %vm3610, %v3605, %v3614
    %v3619 = vld [vmem:[%s3] sm:$0xff]
    %v3620 = vld [vmem:[%s3 + $0x8] sm:$0xff]
    %v3621 = vld [vmem:[%s3 + $0x10] sm:$0xff]
    %v3622 = vld [vmem:[%s3 + $0x18] sm:$0xff]
    %v3623 = vld [vmem:[%s3 + $0x20] sm:$0xff]
    %v3624 = vld [vmem:[%s3 + $0x28] sm:$0xff]
    %v3625 = vld [vmem:[%s3 + $0x30] sm:$0xff]
    %v3626 = vld [vmem:[%s3 + $0x38] sm:$0xff]
    %v3627 = vld [vmem:[%s3 + $0x40] sm:$0xff]
    %v3628 = vld [vmem:[%s3 + $0x48] sm:$0xff]
    %v3629 = vld [vmem:[%s3 + $0x50] sm:$0xff]
    %v3630 = vld [vmem:[%s3 + $0x58] sm:$0xff]
    %v3631 = vld [vmem:[%s3 + $0x60] sm:$0xff]
    %v3632 = vld [vmem:[%s3 + $0x68] sm:$0xff]
    %v3633 = vld [vmem:[%s3 + $0x70] sm:$0xff]
    %v3634 = vld [vmem:[%s3 + $0x78] sm:$0xff]
    %v3635 = vld [vmem:[%s3 + $0x80] sm:$0xff]
    %v3636 = vld [vmem:[%s3 + $0x88] sm:$0xff]
    %v3637 = vld [vmem:[%s3 + $0x90] sm:$0xff]
    %v3638 = vld [vmem:[%s3 + $0x98] sm:$0xff]
    %v3639 = vld [vmem:[%s3 + $0xa0] sm:$0xff]
    %v3640 = vld [vmem:[%s3 + $0xa8] sm:$0xff]
    %v3641 = vld [vmem:[%s3 + $0xb0] sm:$0xff]
    %v3642 = vld [vmem:[%s3 + $0xb8] sm:$0xff]
    %v3643 = vld [vmem:[%s3 + $0xc0] sm:$0xff]
    %v3644 = vld [vmem:[%s3 + $0xc8] sm:$0xff]
    %v3645 = vld [vmem:[%s3 + $0xd0] sm:$0xff]
    %v3646 = vld [vmem:[%s3 + $0xd8] sm:$0xff]
    %v3647 = vld [vmem:[%s3 + $0xe0] sm:$0xff]
    %v3648 = vld [vmem:[%s3 + $0xe8] sm:$0xff]
    %v3649 = vld [vmem:[%s3 + $0xf0] sm:$0xff]
    %v3650 = vld [vmem:[%s3 + $0xf8] sm:$0xff]
    %v3651 = vld [vmem:[%s3 + $0x100] sm:$0xff]
    %v3652 = vld [vmem:[%s3 + $0x108] sm:$0xff]
    %v3653 = vld [vmem:[%s3 + $0x110] sm:$0xff]
    %v3654 = vld [vmem:[%s3 + $0x118] sm:$0xff]
    %v3655 = vld [vmem:[%s3 + $0x120] sm:$0xff]
    %v3656 = vld [vmem:[%s3 + $0x128] sm:$0xff]
    %v3657 = vld [vmem:[%s3 + $0x130] sm:$0xff]
    %v3658 = vld [vmem:[%s3 + $0x138] sm:$0xff]
    %v3659 = vld [vmem:[%s3 + $0x140] sm:$0xff]
    %v3660 = vld [vmem:[%s3 + $0x148] sm:$0xff]
    %v3661 = vld [vmem:[%s3 + $0x150] sm:$0xff]
    %v3662 = vld [vmem:[%s3 + $0x158] sm:$0xff]
    %v3663 = vld [vmem:[%s3 + $0x160] sm:$0xff]
    %v3664 = vld [vmem:[%s3 + $0x168] sm:$0xff]
    %v3665 = vld [vmem:[%s3 + $0x170] sm:$0xff]
    %v3666 = vld [vmem:[%s3 + $0x178] sm:$0xff]
    %v3667 = vld [vmem:[%s3 + $0x180] sm:$0xff]
    %v3668 = vld [vmem:[%s3 + $0x188] sm:$0xff]
    %v3669 = vld [vmem:[%s3 + $0x190] sm:$0xff]
    %v3670 = vld [vmem:[%s3 + $0x198] sm:$0xff]
    %v3671 = vld [vmem:[%s3 + $0x1a0] sm:$0xff]
    %v3672 = vld [vmem:[%s3 + $0x1a8] sm:$0xff]
    %v3673 = vld [vmem:[%s3 + $0x1b0] sm:$0xff]
    %v3674 = vld [vmem:[%s3 + $0x1b8] sm:$0xff]
    %v3675 = vld [vmem:[%s3 + $0x1c0] sm:$0xff]
    %v3676 = vld [vmem:[%s3 + $0x1c8] sm:$0xff]
    %v3677 = vld [vmem:[%s3 + $0x1d0] sm:$0xff]
    %v3678 = vld [vmem:[%s3 + $0x1d8] sm:$0xff]
    %v3679 = vld [vmem:[%s3 + $0x1e0] sm:$0xff]
    %v3680 = vld [vmem:[%s3 + $0x1e8] sm:$0xff]
    %v3681 = vld [vmem:[%s3 + $0x1f0] sm:$0xff]
    %v3682 = vld [vmem:[%s3 + $0x1f8] sm:$0xff]
    %v3683 = vld [vmem:[%s3 + $0x200] sm:$0xff]
    %v3684 = vld [vmem:[%s3 + $0x208] sm:$0xff]
    %v3685 = vld [vmem:[%s3 + $0x210] sm:$0xff]
    %v3686 = vld [vmem:[%s3 + $0x218] sm:$0xff]
    %v3687 = vld [vmem:[%s3 + $0x220] sm:$0xff]
    %v3688 = vld [vmem:[%s3 + $0x228] sm:$0xff]
    %v3689 = vld [vmem:[%s3 + $0x230] sm:$0xff]
    %v3690 = vld [vmem:[%s3 + $0x238] sm:$0xff]
    %v3691 = vld [vmem:[%s3 + $0x240] sm:$0xff]
    %v3692 = vld [vmem:[%s3 + $0x248] sm:$0xff]
    %v3693 = vld [vmem:[%s3 + $0x250] sm:$0xff]
    %v3694 = vld [vmem:[%s3 + $0x258] sm:$0xff]
    %v3695 = vld [vmem:[%s3 + $0x260] sm:$0xff]
    %v3696 = vld [vmem:[%s3 + $0x268] sm:$0xff]
    %v3697 = vld [vmem:[%s3 + $0x270] sm:$0xff]
    %v3698 = vld [vmem:[%s3 + $0x278] sm:$0xff]
    %v3699 = vld [vmem:[%s3 + $0x280] sm:$0xff]
    %v3700 = vld [vmem:[%s3 + $0x288] sm:$0xff]
    %v3701 = vld [vmem:[%s3 + $0x290] sm:$0xff]
    %v3702 = vld [vmem:[%s3 + $0x298] sm:$0xff]
    %v3703 = vld [vmem:[%s3 + $0x2a0] sm:$0xff]
    %v3704 = vld [vmem:[%s3 + $0x2a8] sm:$0xff]
    %v3705 = vld [vmem:[%s3 + $0x2b0] sm:$0xff]
    %v3706 = vld [vmem:[%s3 + $0x2b8] sm:$0xff]
    %v3707 = vld [vmem:[%s3 + $0x2c0] sm:$0xff]
    %v3708 = vld [vmem:[%s3 + $0x2c8] sm:$0xff]
    %v3709 = vld [vmem:[%s3 + $0x2d0] sm:$0xff]
    %v3710 = vld [vmem:[%s3 + $0x2d8] sm:$0xff]
    %v3711 = vld [vmem:[%s3 + $0x2e0] sm:$0xff]
    %v3712 = vld [vmem:[%s3 + $0x2e8] sm:$0xff]
    %v3713 = vld [vmem:[%s3 + $0x2f0] sm:$0xff]
    %v3714 = vld [vmem:[%s3 + $0x2f8] sm:$0xff]
    %v3715 = vld [vmem:[%s3 + $0x300] sm:$0xff]
    %v3716 = vld [vmem:[%s3 + $0x308] sm:$0xff]
    %v3717 = vld [vmem:[%s3 + $0x310] sm:$0xff]
    %v3718 = vld [vmem:[%s3 + $0x318] sm:$0xff]
    %v3719 = vld [vmem:[%s3 + $0x320] sm:$0xff]
    %v3720 = vld [vmem:[%s3 + $0x328] sm:$0xff]
    %v3721 = vld [vmem:[%s3 + $0x330] sm:$0xff]
    %v3722 = vld [vmem:[%s3 + $0x338] sm:$0xff]
    %v3723 = vld [vmem:[%s3 + $0x340] sm:$0xff]
    %v3724 = vld [vmem:[%s3 + $0x348] sm:$0xff]
    %v3725 = vld [vmem:[%s3 + $0x350] sm:$0xff]
    %v3726 = vld [vmem:[%s3 + $0x358] sm:$0xff]
    %v3727 = vld [vmem:[%s3 + $0x360] sm:$0xff]
    %v3728 = vld [vmem:[%s3 + $0x368] sm:$0xff]
    %v3729 = vld [vmem:[%s3 + $0x370] sm:$0xff]
    %v3730 = vld [vmem:[%s3 + $0x378] sm:$0xff]
    %v3731 = vld [vmem:[%s3 + $0x380] sm:$0xff]
    %v3732 = vld [vmem:[%s3 + $0x388] sm:$0xff]
    %v3733 = vld [vmem:[%s3 + $0x390] sm:$0xff]
    %v3734 = vld [vmem:[%s3 + $0x398] sm:$0xff]
    %v3735 = vld [vmem:[%s3 + $0x3a0] sm:$0xff]
    %v3736 = vld [vmem:[%s3 + $0x3a8] sm:$0xff]
    %v3737 = vld [vmem:[%s3 + $0x3b0] sm:$0xff]
    %v3738 = vld [vmem:[%s3 + $0x3b8] sm:$0xff]
    %v3739 = vld [vmem:[%s3 + $0x3c0] sm:$0xff]
    %v3740 = vld [vmem:[%s3 + $0x3c8] sm:$0xff]
    %v3741 = vld [vmem:[%s3 + $0x3d0] sm:$0xff]
    %v3742 = vld [vmem:[%s3 + $0x3d8] sm:$0xff]
    %v3743 = vld [vmem:[%s3 + $0x3e0] sm:$0xff]
    %v3744 = vld [vmem:[%s3 + $0x3e8] sm:$0xff]
    %v3745 = vld [vmem:[%s3 + $0x3f0] sm:$0xff]
    %v3746 = vld [vmem:[%s3 + $0x3f8] sm:$0xff]
    %v3747 = vld [vmem:[%s3 + $0x400] sm:$0xff]
    %v3748 = vld [vmem:[%s3 + $0x408] sm:$0xff]
    %v3749 = vld [vmem:[%s3 + $0x410] sm:$0xff]
    %v3750 = vld [vmem:[%s3 + $0x418] sm:$0xff]
    %v3751 = vld [vmem:[%s3 + $0x420] sm:$0xff]
    %v3752 = vld [vmem:[%s3 + $0x428] sm:$0xff]
    %v3753 = vld [vmem:[%s3 + $0x430] sm:$0xff]
    %v3754 = vld [vmem:[%s3 + $0x438] sm:$0xff]
    %v3755 = vld [vmem:[%s3 + $0x440] sm:$0xff]
    %v3756 = vld [vmem:[%s3 + $0x448] sm:$0xff]
    %v3757 = vld [vmem:[%s3 + $0x450] sm:$0xff]
    %v3758 = vld [vmem:[%s3 + $0x458] sm:$0xff]
    %v3759 = vld [vmem:[%s3 + $0x460] sm:$0xff]
    %v3760 = vld [vmem:[%s3 + $0x468] sm:$0xff]
    %v3761 = vld [vmem:[%s3 + $0x470] sm:$0xff]
    %v3762 = vld [vmem:[%s3 + $0x478] sm:$0xff]
    %v3763 = vld [vmem:[%s3 + $0x480] sm:$0xff]
    %v3764 = vld [vmem:[%s3 + $0x488] sm:$0xff]
    %v3765 = vld [vmem:[%s3 + $0x490] sm:$0xff]
    %v3766 = vld [vmem:[%s3 + $0x498] sm:$0xff]
    %v3767 = vld [vmem:[%s3 + $0x4a0] sm:$0xff]
    %v3768 = vld [vmem:[%s3 + $0x4a8] sm:$0xff]
    %v3769 = vld [vmem:[%s3 + $0x4b0] sm:$0xff]
    %v3770 = vld [vmem:[%s3 + $0x4b8] sm:$0xff]
    %v3771 = vld [vmem:[%s3 + $0x4c0] sm:$0xff]
    %v3772 = vld [vmem:[%s3 + $0x4c8] sm:$0xff]
    %v3773 = vld [vmem:[%s3 + $0x4d0] sm:$0xff]
    %v3774 = vld [vmem:[%s3 + $0x4d8] sm:$0xff]
    %v3775 = vld [vmem:[%s3 + $0x4e0] sm:$0xff]
    %v3776 = vld [vmem:[%s3 + $0x4e8] sm:$0xff]
    %v3777 = vld [vmem:[%s3 + $0x4f0] sm:$0xff]
    %v3778 = vld [vmem:[%s3 + $0x4f8] sm:$0xff]
    %v3779 = vld [vmem:[%s3 + $0x500] sm:$0xff]
    %v3780 = vld [vmem:[%s3 + $0x508] sm:$0xff]
    %v3781 = vld [vmem:[%s3 + $0x510] sm:$0xff]
    %v3782 = vld [vmem:[%s3 + $0x518] sm:$0xff]
    %v3783 = vld [vmem:[%s3 + $0x520] sm:$0xff]
    %v3784 = vld [vmem:[%s3 + $0x528] sm:$0xff]
    %v3785 = vld [vmem:[%s3 + $0x530] sm:$0xff]
    %v3786 = vld [vmem:[%s3 + $0x538] sm:$0xff]
    %v3787 = vld [vmem:[%s3 + $0x540] sm:$0xff]
    %v3788 = vld [vmem:[%s3 + $0x548] sm:$0xff]
    %v3789 = vld [vmem:[%s3 + $0x550] sm:$0xff]
    %v3790 = vld [vmem:[%s3 + $0x558] sm:$0xff]
    %v3791 = vld [vmem:[%s3 + $0x560] sm:$0xff]
    %v3792 = vld [vmem:[%s3 + $0x568] sm:$0xff]
    %v3793 = vld [vmem:[%s3 + $0x570] sm:$0xff]
    %v3794 = vld [vmem:[%s3 + $0x578] sm:$0xff]
    %v3795 = vld [vmem:[%s3 + $0x580] sm:$0xff]
    %v3796 = vld [vmem:[%s3 + $0x588] sm:$0xff]
    %v3797 = vld [vmem:[%s3 + $0x590] sm:$0xff]
    %v3798 = vld [vmem:[%s3 + $0x598] sm:$0xff]
    %v3799 = vld [vmem:[%s3 + $0x5a0] sm:$0xff]
    %v3800 = vld [vmem:[%s3 + $0x5a8] sm:$0xff]
    %v3801 = vld [vmem:[%s3 + $0x5b0] sm:$0xff]
    %v3802 = vld [vmem:[%s3 + $0x5b8] sm:$0xff]
    %v3803 = vld [vmem:[%s3 + $0x5c0] sm:$0xff]
    %v3804 = vld [vmem:[%s3 + $0x5c8] sm:$0xff]
    %v3805 = vld [vmem:[%s3 + $0x5d0] sm:$0xff]
    %v3806 = vld [vmem:[%s3 + $0x5d8] sm:$0xff]
    %v3807 = vld [vmem:[%s3 + $0x5e0] sm:$0xff]
    %v3808 = vld [vmem:[%s3 + $0x5e8] sm:$0xff]
    %v3809 = vld [vmem:[%s3 + $0x5f0] sm:$0xff]
    %v3810 = vld [vmem:[%s3 + $0x5f8] sm:$0xff]
    %v3811 = vld [vmem:[%s3 + $0x600] sm:$0xff]
    %v3812 = vld [vmem:[%s3 + $0x608] sm:$0xff]
    %v3813 = vld [vmem:[%s3 + $0x610] sm:$0xff]
    %v3814 = vld [vmem:[%s3 + $0x618] sm:$0xff]
    %v3815 = vld [vmem:[%s3 + $0x620] sm:$0xff]
    %v3816 = vld [vmem:[%s3 + $0x628] sm:$0xff]
    %v3817 = vld [vmem:[%s3 + $0x630] sm:$0xff]
    %v3818 = vld [vmem:[%s3 + $0x638] sm:$0xff]
    %v3819 = vld [vmem:[%s3 + $0x640] sm:$0xff]
    %v3820 = vld [vmem:[%s3 + $0x648] sm:$0xff]
    %v3821 = vld [vmem:[%s3 + $0x650] sm:$0xff]
    %v3822 = vld [vmem:[%s3 + $0x658] sm:$0xff]
    %v3823 = vld [vmem:[%s3 + $0x660] sm:$0xff]
    %v3824 = vld [vmem:[%s3 + $0x668] sm:$0xff]
    %v3825 = vld [vmem:[%s3 + $0x670] sm:$0xff]
    %v3826 = vld [vmem:[%s3 + $0x678] sm:$0xff]
    %v3827 = vld [vmem:[%s3 + $0x680] sm:$0xff]
    %v3828 = vld [vmem:[%s3 + $0x688] sm:$0xff]
    %v3829 = vld [vmem:[%s3 + $0x690] sm:$0xff]
    %v3830 = vld [vmem:[%s3 + $0x698] sm:$0xff]
    %v3831 = vld [vmem:[%s3 + $0x6a0] sm:$0xff]
    %v3832 = vld [vmem:[%s3 + $0x6a8] sm:$0xff]
    %v3833 = vld [vmem:[%s3 + $0x6b0] sm:$0xff]
    %v3834 = vld [vmem:[%s3 + $0x6b8] sm:$0xff]
    %v3835 = vld [vmem:[%s3 + $0x6c0] sm:$0xff]
    %v3836 = vld [vmem:[%s3 + $0x6c8] sm:$0xff]
    %v3837 = vld [vmem:[%s3 + $0x6d0] sm:$0xff]
    %v3838 = vld [vmem:[%s3 + $0x6d8] sm:$0xff]
    %v3839 = vld [vmem:[%s3 + $0x6e0] sm:$0xff]
    %v3840 = vld [vmem:[%s3 + $0x6e8] sm:$0xff]
    %v3841 = vld [vmem:[%s3 + $0x6f0] sm:$0xff]
    %v3842 = vld [vmem:[%s3 + $0x6f8] sm:$0xff]
    %v3843 = vld [vmem:[%s3 + $0x700] sm:$0xff]
    %v3844 = vld [vmem:[%s3 + $0x708] sm:$0xff]
    %v3845 = vld [vmem:[%s3 + $0x710] sm:$0xff]
    %v3846 = vld [vmem:[%s3 + $0x718] sm:$0xff]
    %v3847 = vld [vmem:[%s3 + $0x720] sm:$0xff]
    %v3848 = vld [vmem:[%s3 + $0x728] sm:$0xff]
    %v3849 = vld [vmem:[%s3 + $0x730] sm:$0xff]
    %v3850 = vld [vmem:[%s3 + $0x738] sm:$0xff]
    %v3851 = vld [vmem:[%s3 + $0x740] sm:$0xff]
    %v3852 = vld [vmem:[%s3 + $0x748] sm:$0xff]
    %v3853 = vld [vmem:[%s3 + $0x750] sm:$0xff]
    %v3854 = vld [vmem:[%s3 + $0x758] sm:$0xff]
    %v3855 = vld [vmem:[%s3 + $0x760] sm:$0xff]
    %v3856 = vld [vmem:[%s3 + $0x768] sm:$0xff]
    %v3857 = vld [vmem:[%s3 + $0x770] sm:$0xff]
    %v3858 = vld [vmem:[%s3 + $0x778] sm:$0xff]
    %v3859 = vld [vmem:[%s3 + $0x780] sm:$0xff]
    %v3860 = vld [vmem:[%s3 + $0x788] sm:$0xff]
    %v3861 = vld [vmem:[%s3 + $0x790] sm:$0xff]
    %v3862 = vld [vmem:[%s3 + $0x798] sm:$0xff]
    %v3863 = vld [vmem:[%s3 + $0x7a0] sm:$0xff]
    %v3864 = vld [vmem:[%s3 + $0x7a8] sm:$0xff]
    %v3865 = vld [vmem:[%s3 + $0x7b0] sm:$0xff]
    %v3866 = vld [vmem:[%s3 + $0x7b8] sm:$0xff]
    %v3867 = vld [vmem:[%s3 + $0x7c0] sm:$0xff]
    %v3868 = vld [vmem:[%s3 + $0x7c8] sm:$0xff]
    %v3869 = vld [vmem:[%s3 + $0x7d0] sm:$0xff]
    %v3870 = vld [vmem:[%s3 + $0x7d8] sm:$0xff]
    %v3871 = vld [vmem:[%s3 + $0x7e0] sm:$0xff]
    %v3872 = vld [vmem:[%s3 + $0x7e8] sm:$0xff]
    %v3873 = vld [vmem:[%s3 + $0x7f0] sm:$0xff]
    %v3874 = vld [vmem:[%s3 + $0x7f8] sm:$0xff]
    %v3875 = vld [vmem:[%s4] sm:$0xf]
    %v3877 = vlaneseq
    %v3878 = vshrl.u32 %v3877, 7
    %v3879 = vsub.s32 0, %v3878
    %v3880 = vrot.slane %v3875, %v3879
    %v3881 = vlaneseq
    %v3882 = vshrl.u32 %v3881, 7
    %v3883 = vsub.s32 1, %v3882
    %v3884 = vrot.slane %v3875, %v3883
    %v3885 = vlaneseq
    %v3886 = vshrl.u32 %v3885, 7
    %v3887 = vsub.s32 2, %v3886
    %v3888 = vrot.slane %v3875, %v3887
    %v3889 = vlaneseq
    %v3890 = vshrl.u32 %v3889, 7
    %v3891 = vsub.s32 3, %v3890
    %v3892 = vrot.slane %v3875, %v3891
    %3897 = vmatprep.subr.mxu0 %v3620
    %3898 = vmatpush1.msra.mxu0 %v3619
    %3899 = vmatprep.subr.mxu0 %v3624
    %3900 = vmatpush1.msra.mxu0 %v3623
    %3901 = vmatprep.subr.mxu0 %v3628
    %3902 = vmatpush1.msra.mxu0 %v3627
    %3903 = vmatprep.subr.mxu0 %v3632
    %3904 = vmatpush1.msra.mxu0 %v3631
    %3905 = vmatprep.subr.mxu0 %v3636
    %3906 = vmatpush1.msra.mxu0 %v3635
    %3907 = vmatprep.subr.mxu0 %v3640
    %3908 = vmatpush1.msra.mxu0 %v3639
    %3909 = vmatprep.subr.mxu0 %v3644
    %3910 = vmatpush1.msra.mxu0 %v3643
    %3911 = vmatprep.subr.mxu0 %v3648
    %3912 = vmatpush1.msra.mxu0 %v3647
    %3913 = vmatprep.subr.mxu0 %v3652
    %3914 = vmatpush1.msra.mxu0 %v3651
    %3915 = vmatprep.subr.mxu0 %v3656
    %3916 = vmatpush1.msra.mxu0 %v3655
    %3917 = vmatprep.subr.mxu0 %v3660
    %3918 = vmatpush1.msra.mxu0 %v3659
    %3919 = vmatprep.subr.mxu0 %v3664
    %3920 = vmatpush1.msra.mxu0 %v3663
    %3921 = vmatprep.subr.mxu0 %v3668
    %3922 = vmatpush1.msra.mxu0 %v3667
    %3923 = vmatprep.subr.mxu0 %v3672
    %3924 = vmatpush1.msra.mxu0 %v3671
    %3925 = vmatprep.subr.mxu0 %v3676
    %3926 = vmatpush1.msra.mxu0 %v3675
    %3927 = vmatprep.subr.mxu0 %v3680
    %3928 = vmatpush1.msra.mxu0 %v3679
    %3929 = vmatprep.subr.mxu0 %v3684
    %3930 = vmatpush1.msra.mxu0 %v3683
    %3931 = vmatprep.subr.mxu0 %v3688
    %3932 = vmatpush1.msra.mxu0 %v3687
    %3933 = vmatprep.subr.mxu0 %v3692
    %3934 = vmatpush1.msra.mxu0 %v3691
    %3935 = vmatprep.subr.mxu0 %v3696
    %3936 = vmatpush1.msra.mxu0 %v3695
    %3937 = vmatprep.subr.mxu0 %v3700
    %3938 = vmatpush1.msra.mxu0 %v3699
    %3939 = vmatprep.subr.mxu0 %v3704
    %3940 = vmatpush1.msra.mxu0 %v3703
    %3941 = vmatprep.subr.mxu0 %v3708
    %3942 = vmatpush1.msra.mxu0 %v3707
    %3943 = vmatprep.subr.mxu0 %v3712
    %3944 = vmatpush1.msra.mxu0 %v3711
    %3945 = vmatprep.subr.mxu0 %v3716
    %3946 = vmatpush1.msra.mxu0 %v3715
    %3947 = vmatprep.subr.mxu0 %v3720
    %3948 = vmatpush1.msra.mxu0 %v3719
    %3949 = vmatprep.subr.mxu0 %v3724
    %3950 = vmatpush1.msra.mxu0 %v3723
    %3951 = vmatprep.subr.mxu0 %v3728
    %3952 = vmatpush1.msra.mxu0 %v3727
    %3953 = vmatprep.subr.mxu0 %v3732
    %3954 = vmatpush1.msra.mxu0 %v3731
    %3955 = vmatprep.subr.mxu0 %v3736
    %3956 = vmatpush1.msra.mxu0 %v3735
    %3957 = vmatprep.subr.mxu0 %v3740
    %3958 = vmatpush1.msra.mxu0 %v3739
    %3959 = vmatprep.subr.mxu0 %v3744
    %3960 = vmatpush1.msra.mxu0 %v3743
    %3961 = vmatprep.mubr.f32.mxu0 %v3616
    %3962 = vmatmul.mubr.f32.gmra.mrb[0].mxu0 %v3615
    %v3963 = vpop.f32.mrb[0].mxu0
    %v3964 = vadd.f32 %v3880, %v3963
    %v3965 = vpop.f32.mrb[0].mxu0
    %v3966 = vadd.f32 %v3884, %v3965
    %3967 = vdwg.mxu0
    %3968 = vmatprep.subr.mxu0 %v3748
    %3969 = vmatpush1.msra.mxu0 %v3747
    %3970 = vmatprep.subr.mxu0 %v3752
    %3971 = vmatpush1.msra.mxu0 %v3751
    %3972 = vmatprep.subr.mxu0 %v3756
    %3973 = vmatpush1.msra.mxu0 %v3755
    %3974 = vmatprep.subr.mxu0 %v3760
    %3975 = vmatpush1.msra.mxu0 %v3759
    %3976 = vmatprep.subr.mxu0 %v3764
    %3977 = vmatpush1.msra.mxu0 %v3763
    %3978 = vmatprep.subr.mxu0 %v3768
    %3979 = vmatpush1.msra.mxu0 %v3767
    %3980 = vmatprep.subr.mxu0 %v3772
    %3981 = vmatpush1.msra.mxu0 %v3771
    %3982 = vmatprep.subr.mxu0 %v3776
    %3983 = vmatpush1.msra.mxu0 %v3775
    %3984 = vmatprep.subr.mxu0 %v3780
    %3985 = vmatpush1.msra.mxu0 %v3779
    %3986 = vmatprep.subr.mxu0 %v3784
    %3987 = vmatpush1.msra.mxu0 %v3783
    %3988 = vmatprep.subr.mxu0 %v3788
    %3989 = vmatpush1.msra.mxu0 %v3787
    %3990 = vmatprep.subr.mxu0 %v3792
    %3991 = vmatpush1.msra.mxu0 %v3791
    %3992 = vmatprep.subr.mxu0 %v3796
    %3993 = vmatpush1.msra.mxu0 %v3795
    %3994 = vmatprep.subr.mxu0 %v3800
    %3995 = vmatpush1.msra.mxu0 %v3799
    %3996 = vmatprep.subr.mxu0 %v3804
    %3997 = vmatpush1.msra.mxu0 %v3803
    %3998 = vmatprep.subr.mxu0 %v3808
    %3999 = vmatpush1.msra.mxu0 %v3807
    %4000 = vmatprep.subr.mxu0 %v3812
    %4001 = vmatpush1.msra.mxu0 %v3811
    %4002 = vmatprep.subr.mxu0 %v3816
    %4003 = vmatpush1.msra.mxu0 %v3815
    %4004 = vmatprep.subr.mxu0 %v3820
    %4005 = vmatpush1.msra.mxu0 %v3819
    %4006 = vmatprep.subr.mxu0 %v3824
    %4007 = vmatpush1.msra.mxu0 %v3823
    %4008 = vmatprep.subr.mxu0 %v3828
    %4009 = vmatpush1.msra.mxu0 %v3827
    %4010 = vmatprep.subr.mxu0 %v3832
    %4011 = vmatpush1.msra.mxu0 %v3831
    %4012 = vmatprep.subr.mxu0 %v3836
    %4013 = vmatpush1.msra.mxu0 %v3835
    %4014 = vmatprep.subr.mxu0 %v3840
    %4015 = vmatpush1.msra.mxu0 %v3839
    %4016 = vmatprep.subr.mxu0 %v3844
    %4017 = vmatpush1.msra.mxu0 %v3843
    %4018 = vmatprep.subr.mxu0 %v3848
    %4019 = vmatpush1.msra.mxu0 %v3847
    %4020 = vmatprep.subr.mxu0 %v3852
    %4021 = vmatpush1.msra.mxu0 %v3851
    %4022 = vmatprep.subr.mxu0 %v3856
    %4023 = vmatpush1.msra.mxu0 %v3855
    %4024 = vmatprep.subr.mxu0 %v3860
    %4025 = vmatpush1.msra.mxu0 %v3859
    %4026 = vmatprep.subr.mxu0 %v3864
    %4027 = vmatpush1.msra.mxu0 %v3863
    %4028 = vmatprep.subr.mxu0 %v3868
    %4029 = vmatpush1.msra.mxu0 %v3867
    %4030 = vmatprep.subr.mxu0 %v3872
    %4031 = vmatpush1.msra.mxu0 %v3871
    %4032 = vmatprep.mubr.f32.mxu0 %v3618
    %4033 = vmatmul.mubr.f32.gmra.mrb[0].mxu0 %v3617
    %v4034 = vpop.f32.mrb[0].mxu0
    %v4035 = vadd.f32 %v3964, %v4034
    %v4036 = vpop.f32.mrb[0].mxu0
    %v4037 = vadd.f32 %v3966, %v4036
    %4038 = vdwg.mxu0
    %4039 = vmatprep.subr.mxu0 %v3622
    %4040 = vmatpush1.msra.mxu0 %v3621
    %4041 = vmatprep.subr.mxu0 %v3626
    %4042 = vmatpush1.msra.mxu0 %v3625
    %4043 = vmatprep.subr.mxu0 %v3630
    %4044 = vmatpush1.msra.mxu0 %v3629
    %4045 = vmatprep.subr.mxu0 %v3634
    %4046 = vmatpush1.msra.mxu0 %v3633
    %4047 = vmatprep.subr.mxu0 %v3638
    %4048 = vmatpush1.msra.mxu0 %v3637
    %4049 = vmatprep.subr.mxu0 %v3642
    %4050 = vmatpush1.msra.mxu0 %v3641
    %4051 = vmatprep.subr.mxu0 %v3646
    %4052 = vmatpush1.msra.mxu0 %v3645
    %4053 = vmatprep.subr.mxu0 %v3650
    %4054 = vmatpush1.msra.mxu0 %v3649
    %4055 = vmatprep.subr.mxu0 %v3654
    %4056 = vmatpush1.msra.mxu0 %v3653
    %4057 = vmatprep.subr.mxu0 %v3658
    %4058 = vmatpush1.msra.mxu0 %v3657
    %4059 = vmatprep.subr.mxu0 %v3662
    %4060 = vmatpush1.msra.mxu0 %v3661
    %4061 = vmatprep.subr.mxu0 %v3666
    %4062 = vmatpush1.msra.mxu0 %v3665
    %4063 = vmatprep.subr.mxu0 %v3670
    %4064 = vmatpush1.msra.mxu0 %v3669
    %4065 = vmatprep.subr.mxu0 %v3674
    %4066 = vmatpush1.msra.mxu0 %v3673
    %4067 = vmatprep.subr.mxu0 %v3678
    %4068 = vmatpush1.msra.mxu0 %v3677
    %4069 = vmatprep.subr.mxu0 %v3682
    %4070 = vmatpush1.msra.mxu0 %v3681
    %4071 = vmatprep.subr.mxu0 %v3686
    %4072 = vmatpush1.msra.mxu0 %v3685
    %4073 = vmatprep.subr.mxu0 %v3690
    %4074 = vmatpush1.msra.mxu0 %v3689
    %4075 = vmatprep.subr.mxu0 %v3694
    %4076 = vmatpush1.msra.mxu0 %v3693
    %4077 = vmatprep.subr.mxu0 %v3698
    %4078 = vmatpush1.msra.mxu0 %v3697
    %4079 = vmatprep.subr.mxu0 %v3702
    %4080 = vmatpush1.msra.mxu0 %v3701
    %4081 = vmatprep.subr.mxu0 %v3706
    %4082 = vmatpush1.msra.mxu0 %v3705
    %4083 = vmatprep.subr.mxu0 %v3710
    %4084 = vmatpush1.msra.mxu0 %v3709
    %4085 = vmatprep.subr.mxu0 %v3714
    %4086 = vmatpush1.msra.mxu0 %v3713
    %4087 = vmatprep.subr.mxu0 %v3718
    %4088 = vmatpush1.msra.mxu0 %v3717
    %4089 = vmatprep.subr.mxu0 %v3722
    %4090 = vmatpush1.msra.mxu0 %v3721
    %4091 = vmatprep.subr.mxu0 %v3726
    %4092 = vmatpush1.msra.mxu0 %v3725
    %4093 = vmatprep.subr.mxu0 %v3730
    %4094 = vmatpush1.msra.mxu0 %v3729
    %4095 = vmatprep.subr.mxu0 %v3734
    %4096 = vmatpush1.msra.mxu0 %v3733
    %4097 = vmatprep.subr.mxu0 %v3738
    %4098 = vmatpush1.msra.mxu0 %v3737
    %4099 = vmatprep.subr.mxu0 %v3742
    %4100 = vmatpush1.msra.mxu0 %v3741
    %4101 = vmatprep.subr.mxu0 %v3746
    %4102 = vmatpush1.msra.mxu0 %v3745
    %4103 = vmatprep.mubr.f32.mxu0 %v3616
    %4104 = vmatmul.mubr.f32.gmra.mrb[0].mxu0 %v3615
    %v4105 = vpop.f32.mrb[0].mxu0
    %v4106 = vadd.f32 %v3888, %v4105
    %v4107 = vpop.f32.mrb[0].mxu0
    %v4108 = vadd.f32 %v3892, %v4107
    %4109 = vdwg.mxu0
    %4110 = vmatprep.subr.mxu0 %v3750
    %4111 = vmatpush1.msra.mxu0 %v3749
    %4112 = vmatprep.subr.mxu0 %v3754
    %4113 = vmatpush1.msra.mxu0 %v3753
    %4114 = vmatprep.subr.mxu0 %v3758
    %4115 = vmatpush1.msra.mxu0 %v3757
    %4116 = vmatprep.subr.mxu0 %v3762
    %4117 = vmatpush1.msra.mxu0 %v3761
    %4118 = vmatprep.subr.mxu0 %v3766
    %4119 = vmatpush1.msra.mxu0 %v3765
    %4120 = vmatprep.subr.mxu0 %v3770
    %4121 = vmatpush1.msra.mxu0 %v3769
    %4122 = vmatprep.subr.mxu0 %v3774
    %4123 = vmatpush1.msra.mxu0 %v3773
    %4124 = vmatprep.subr.mxu0 %v3778
    %4125 = vmatpush1.msra.mxu0 %v3777
    %4126 = vmatprep.subr.mxu0 %v3782
    %4127 = vmatpush1.msra.mxu0 %v3781
    %4128 = vmatprep.subr.mxu0 %v3786
    %4129 = vmatpush1.msra.mxu0 %v3785
    %4130 = vmatprep.subr.mxu0 %v3790
    %4131 = vmatpush1.msra.mxu0 %v3789
    %4132 = vmatprep.subr.mxu0 %v3794
    %4133 = vmatpush1.msra.mxu0 %v3793
    %4134 = vmatprep.subr.mxu0 %v3798
    %4135 = vmatpush1.msra.mxu0 %v3797
    %4136 = vmatprep.subr.mxu0 %v3802
    %4137 = vmatpush1.msra.mxu0 %v3801
    %4138 = vmatprep.subr.mxu0 %v3806
    %4139 = vmatpush1.msra.mxu0 %v3805
    %4140 = vmatprep.subr.mxu0 %v3810
    %4141 = vmatpush1.msra.mxu0 %v3809
    %4142 = vmatprep.subr.mxu0 %v3814
    %4143 = vmatpush1.msra.mxu0 %v3813
    %4144 = vmatprep.subr.mxu0 %v3818
    %4145 = vmatpush1.msra.mxu0 %v3817
    %4146 = vmatprep.subr.mxu0 %v3822
    %4147 = vmatpush1.msra.mxu0 %v3821
    %4148 = vmatprep.subr.mxu0 %v3826
    %4149 = vmatpush1.msra.mxu0 %v3825
    %4150 = vmatprep.subr.mxu0 %v3830
    %4151 = vmatpush1.msra.mxu0 %v3829
    %4152 = vmatprep.subr.mxu0 %v3834
    %4153 = vmatpush1.msra.mxu0 %v3833
    %4154 = vmatprep.subr.mxu0 %v3838
    %4155 = vmatpush1.msra.mxu0 %v3837
    %4156 = vmatprep.subr.mxu0 %v3842
    %4157 = vmatpush1.msra.mxu0 %v3841
    %4158 = vmatprep.subr.mxu0 %v3846
    %4159 = vmatpush1.msra.mxu0 %v3845
    %4160 = vmatprep.subr.mxu0 %v3850
    %4161 = vmatpush1.msra.mxu0 %v3849
    %4162 = vmatprep.subr.mxu0 %v3854
    %4163 = vmatpush1.msra.mxu0 %v3853
    %4164 = vmatprep.subr.mxu0 %v3858
    %4165 = vmatpush1.msra.mxu0 %v3857
    %4166 = vmatprep.subr.mxu0 %v3862
    %4167 = vmatpush1.msra.mxu0 %v3861
    %4168 = vmatprep.subr.mxu0 %v3866
    %4169 = vmatpush1.msra.mxu0 %v3865
    %4170 = vmatprep.subr.mxu0 %v3870
    %4171 = vmatpush1.msra.mxu0 %v3869
    %4172 = vmatprep.subr.mxu0 %v3874
    %4173 = vmatpush1.msra.mxu0 %v3873
    %4174 = vmatprep.mubr.f32.mxu0 %v3618
    %4175 = vmatmul.mubr.f32.gmra.mrb[0].mxu0 %v3617
    %v4176 = vpop.f32.mrb[0].mxu0
    %v4177 = vadd.f32 %v4106, %v4176
    %v4178 = vpop.f32.mrb[0].mxu0
    %v4179 = vadd.f32 %v4108, %v4178
    %4180 = vdwg.mxu0
    %v4185 = vcombine.low %v4035, %v4037
    %v4186 = vcombine.low %v4177, %v4179
    %v4188 = vunpack.c.l.s4 1983009808
    %v4189 = vunpack.c.0.s8 %v4188
    %v4190 = vlaneseq
    %v4191 = vshrl.u32 %v4190, 7
    %v4192 = vsub.s32 %v4189, %v4191
    %v4193 = vrot.slane %v4185, %v4192
    %v4195 = vunpack.c.l.s4 1983009808
    %v4196 = vunpack.c.0.s8 %v4195
    %v4197 = vlaneseq
    %v4198 = vshrl.u32 %v4197, 7
    %v4199 = vsub.s32 %v4196, %v4198
    %v4200 = vrot.slane %v4186, %v4199
    %v4201 = vcombine.low %v4193, %v4200
    %4203 = vst [vmem:[#allocation2] sm:$0xff] %v4201
    // Predicated region
    $region22: #{forward_prepared.5} parent=1 // pred_check
      _
    $region23: #{forward_prepared.5} parent=1 // pred_check_branch
      %4205 = sbr.rel (0) target = $region25
    $region24: #{forward_prepared.5} parent=1 // pred_region
      %s4207 = ssub.s32 128, 128
      %4208 = vsyncadd [#allocation3], %s4207
      %s4210 = sshll.u32 [#allocation2], 4
      %s4211 = int_to_ptr.vmem [resolvable:$true] %s4210
      %4213 = dma.vmem_to_hbm [thread:$0]  %s4211, 128, %s5, [#allocation3]
    $region25: #{forward_prepared.5} parent=1 // pred_fallthru
      _
    // Predicated region
    $region26: #{forward_prepared.5} parent=1 // pred_check
      _
    $region27: #{forward_prepared.5} parent=1 // pred_check_branch
      %4215 = sbr.rel (0) target = $region29
    $region28: #{forward_prepared.5} parent=1 // pred_region
      %4216 = dma.done [#allocation3], 128
    $region29: #{forward_prepared.5} parent=1 // pred_fallthru
      _
    %4217 = vsyncpa [#allocation3], 1

</llo_original>
